<compile_context>
chip_gen: v6e
topology: v6e:2x2x1
jax: 0.10.0
libtpu: 0.0.40
codegen_flags: <defaults>
</compile_context>

<pallas_src>
import functools

import jax
import jax.numpy as jnp
from jax.experimental import pallas as pl
from jax.experimental.pallas import tpu as pltpu

BN_EPS = 1e-5


# ---------------------------------------------------------------------------
# Fused TCNBlock kernel
# ---------------------------------------------------------------------------
def _tcn_block_kernel(x_ref, w_ref, wres_ref, gamma_ref, beta_ref, alpha_ref,
                      out_ref, *, dilation, pad, causal):
    # x_ref:     (B, in_ch, T + 2*pad)
    # w_ref:     (K, out_ch, in_ch)        per-tap conv1 matrices
    # wres_ref:  (out_ch, in_ch)           dense-folded grouped 1x1 conv
    # gamma/beta/alpha: (out_ch, 1)
    # out_ref:   (B, out_ch, T_out)
    B = x_ref.shape[0]
    K = w_ref.shape[0]
    out_ch = out_ref.shape[1]
    t_out = out_ref.shape[2]
    t_pad = x_ref.shape[2]
    t_orig = t_pad - 2 * pad

    # residual crop start, expressed in the (possibly zero-padded) input frame
    if causal:
        res_start = pad + (t_orig - 1 - t_out)     # causal_crop
    else:
        res_start = pad + (t_orig - t_out) // 2    # center_crop

    inv_n = 1.0 / float(B * t_out)
    hi = jax.lax.Precision.HIGHEST

    # ---- dilated Conv1d as K accumulated MXU matmuls, per batch -----------
    convs = []
    for b in range(B):
        xb = x_ref[b]                                         # (in_ch, t_pad)
        acc = jnp.zeros((out_ch, t_out), jnp.float32)
        for k in range(K):
            off = k * dilation
            acc = acc + jnp.dot(w_ref[k], xb[:, off:off + t_out],
                                preferred_element_type=jnp.float32,
                                precision=hi)
        convs.append(acc)

    # ---- BatchNorm1d (training-mode batch statistics over (B, T_out)) -----
    tot = convs[0]
    for b in range(1, B):
        tot = tot + convs[b]
    mean = jnp.sum(tot, axis=1, keepdims=True) * inv_n        # (out_ch, 1)
    sq = jnp.zeros_like(mean)
    for b in range(B):
        d = convs[b] - mean
        sq = sq + jnp.sum(d * d, axis=1, keepdims=True)
    var = sq * inv_n                                          # biased, as torch
    inv_std = jax.lax.rsqrt(var + BN_EPS)                     # (out_ch, 1)

    gamma = gamma_ref[...]
    beta = beta_ref[...]
    alpha = alpha_ref[...]

    # ---- affine + PReLU + grouped-1x1 residual + crop + add ---------------
    for b in range(B):
        y = (convs[b] - mean) * inv_std * gamma + beta        # BN affine
        y = jnp.where(y > 0, y, alpha * y)                    # PReLU / channel
        xb_crop = x_ref[b][:, res_start:res_start + t_out]    # (in_ch, t_out)
        y = y + jnp.dot(wres_ref[...], xb_crop,
                        preferred_element_type=jnp.float32, precision=hi)
        out_ref[b] = y.astype(out_ref.dtype)


# ---------------------------------------------------------------------------
# Host-side wrapper
# ---------------------------------------------------------------------------
def tcn_block_forward(x, conv_w, res_w, gamma, beta, alpha, *,
                      kernel_size, dilation=1, padding=0, causal=True):
    """Forward of TCNBlock.

    x:       (B, in_ch, T)          float32
    conv_w:  (out_ch, in_ch, K)     Conv1d weight (bias=False)
    res_w:   (out_ch,)              grouped (groups=in_ch) 1x1 conv weight
    gamma, beta: (out_ch,)          BatchNorm1d affine parameters
    alpha:   (out_ch,)              PReLU per-channel slope
    """
    B, in_ch, T = x.shape
    out_ch, _, K = conv_w.shape
    assert K == kernel_size
    assert out_ch % in_ch == 0, "groups=in_ch requires out_ch % in_ch == 0"
    t_out = T + 2 * padding - dilation * (K - 1)

    x_in = x
    if padding > 0:
        x_in = jnp.pad(x, ((0, 0), (0, 0), (padding, padding)))

    # Conv1d weight -> (K, out_ch, in_ch): w[k] is the per-tap matmul matrix.
    w_taps = jnp.transpose(conv_w, (2, 0, 1)).astype(jnp.float32)

    # Fold the grouped 1x1 conv into a dense (out_ch, in_ch) matrix:
    # output channel oc reads input channel oc // (out_ch // in_ch).
    group_size = out_ch // in_ch
    rows = jnp.arange(out_ch)
    wres_dense = jnp.zeros((out_ch, in_ch), jnp.float32)
    wres_dense = wres_dense.at[rows, rows // group_size].set(
        res_w.astype(jnp.float32))

    kernel = functools.partial(_tcn_block_kernel, dilation=dilation,
                               pad=padding, causal=causal)
    return pl.pallas_call(
        kernel,
        out_shape=jax.ShapeDtypeStruct((B, out_ch, t_out), jnp.float32),
        in_specs=[pl.BlockSpec(memory_space=pltpu.MemorySpace.VMEM)] * 6,
        out_specs=pl.BlockSpec(memory_space=pltpu.MemorySpace.VMEM),
    )(x_in.astype(jnp.float32), w_taps, wres_dense,
      gamma.reshape(out_ch, 1).astype(jnp.float32),
      beta.reshape(out_ch, 1).astype(jnp.float32),
      alpha.reshape(out_ch, 1).astype(jnp.float32))


# ---------------------------------------------------------------------------
# Pure-JAX reference (for validation)
# ---------------------------------------------------------------------------
def _ref_forward(x, conv_w, res_w, gamma, beta, alpha, *,
                 kernel_size, dilation, padding, causal):
    out_ch, in_ch, K = conv_w.shape
    conv = jax.lax.conv_general_dilated(
        x, conv_w, window_strides=(1,), padding=[(padding, padding)],
        rhs_dilation=(dilation,), dimension_numbers=("NCH", "OIH", "NCH"),
        precision=jax.lax.Precision.HIGHEST)
    mean = conv.mean(axis=(0, 2), keepdims=True)
    var = ((conv - mean) ** 2).mean(axis=(0, 2), keepdims=True)
    y = (conv - mean) / jnp.sqrt(var + BN_EPS)
    y = y * gamma[None, :, None] + beta[None, :, None]
    y = jnp.where(y > 0, y, alpha[None, :, None] * y)
    group_size = out_ch // in_ch
    res_dense = jnp.zeros((out_ch, in_ch), jnp.float32).at[
        jnp.arange(out_ch), jnp.arange(out_ch) // group_size].set(res_w)
    x_res = jnp.einsum("oi,bit->bot", res_dense, x)
    L = y.shape[-1]
    if causal:
        start = x_res.shape[-1] - 1 - L     # causal_crop
    else:
        start = (x_res.shape[-1] - L) // 2  # center_crop
    return y + x_res[..., start:start + L]


if __name__ == "__main__":
    key = jax.random.PRNGKey(0)
    ks = jax.random.split(key, 6)

    B, in_ch, out_ch, T = 2, 4, 8, 256
    kernel_size, dilation, padding, causal = 3, 2, 0, True

    x = jax.random.normal(ks[0], (B, in_ch, T), dtype=jnp.float32)
    conv_w = 0.3 * jax.random.normal(ks[1], (out_ch, in_ch, kernel_size),
                                     dtype=jnp.float32)
    res_w = 0.3 * jax.random.normal(ks[2], (out_ch,), dtype=jnp.float32)
    gamma = 1.0 + 0.1 * jax.random.normal(ks[3], (out_ch,), dtype=jnp.float32)
    beta = 0.1 * jax.random.normal(ks[4], (out_ch,), dtype=jnp.float32)
    alpha = 0.25 + 0.1 * jax.random.normal(ks[5], (out_ch,), dtype=jnp.float32)

    fwd = jax.jit(functools.partial(
        tcn_block_forward, kernel_size=kernel_size, dilation=dilation,
        padding=padding, causal=causal))
    out = fwd(x, conv_w, res_w, gamma, beta, alpha)
    jax.block_until_ready(out)

    ref = _ref_forward(x, conv_w, res_w, gamma, beta, alpha,
                       kernel_size=kernel_size, dilation=dilation,
                       padding=padding, causal=causal)
    assert out.shape == ref.shape, (out.shape, ref.shape)
    max_err = float(jnp.max(jnp.abs(out - ref)))
    if max_err > 1e-2:
        raise AssertionError(f"mismatch vs reference: max_err={max_err}")
    print("KERNEL_OK")
</pallas_src>

<mosaic_0001>
module attributes {stable_mosaic.version = 11 : i64} {
  func.func @_tcn_block_kernel(%arg0: memref<2x4x256xf32, #tpu.memory_space<vmem>>, %arg1: memref<3x8x4xf32, #tpu.memory_space<vmem>>, %arg2: memref<8x4xf32, #tpu.memory_space<vmem>>, %arg3: memref<8x1xf32, #tpu.memory_space<vmem>>, %arg4: memref<8x1xf32, #tpu.memory_space<vmem>>, %arg5: memref<8x1xf32, #tpu.memory_space<vmem>>, %arg6: memref<2x8x252xf32, #tpu.memory_space<vmem>>) attributes {dimension_semantics = [], scalar_prefetch = 0 : i64, scratch_operands = 0 : i64, tpu.core_type = #tpu.core_type<tc>} {
    %c0 = arith.constant 0 : index
    %c0_0 = arith.constant 0 : index
    %c0_1 = arith.constant 0 : index
    %0 = vector.load %arg0[%c0, %c0_0, %c0_1] : memref<2x4x256xf32, #tpu.memory_space<vmem>>, vector<1x4x256xf32>
    %1 = vector.shape_cast %0 : vector<1x4x256xf32> to vector<4x256xf32>
    %cst = arith.constant 0.000000e+00 : f32
    %2 = vector.broadcast %cst : f32 to vector<8x252xf32>
    %c0_2 = arith.constant 0 : index
    %c0_3 = arith.constant 0 : index
    %c0_4 = arith.constant 0 : index
    %3 = vector.load %arg1[%c0_2, %c0_3, %c0_4] : memref<3x8x4xf32, #tpu.memory_space<vmem>>, vector<1x8x4xf32>
    %4 = vector.shape_cast %3 : vector<1x8x4xf32> to vector<8x4xf32>
    %5 = vector.extract_strided_slice %1 {offsets = [0, 0], sizes = [4, 252], strides = [1, 1]} : vector<4x256xf32> to vector<4x252xf32>
    %cst_5 = arith.constant dense<0.000000e+00> : vector<8x252xf32>
    %6 = tpu.matmul %4, %5, %cst_5 {dimension_numbers = #tpu.dot_dimension_numbers<[1], [0], [0], [1], [0, 0, 1, 1], [], []>, precision = #tpu.contract_precision<fp32>} : vector<8x4xf32>, vector<4x252xf32>, vector<8x252xf32> -> vector<8x252xf32>
    %7 = arith.addf %2, %6 : vector<8x252xf32>
    %c1 = arith.constant 1 : index
    %c0_6 = arith.constant 0 : index
    %c0_7 = arith.constant 0 : index
    %8 = vector.load %arg1[%c1, %c0_6, %c0_7] : memref<3x8x4xf32, #tpu.memory_space<vmem>>, vector<1x8x4xf32>
    %9 = vector.shape_cast %8 : vector<1x8x4xf32> to vector<8x4xf32>
    %10 = vector.extract_strided_slice %1 {offsets = [0, 2], sizes = [4, 252], strides = [1, 1]} : vector<4x256xf32> to vector<4x252xf32>
    %cst_8 = arith.constant dense<0.000000e+00> : vector<8x252xf32>
    %11 = tpu.matmul %9, %10, %cst_8 {dimension_numbers = #tpu.dot_dimension_numbers<[1], [0], [0], [1], [0, 0, 1, 1], [], []>, precision = #tpu.contract_precision<fp32>} : vector<8x4xf32>, vector<4x252xf32>, vector<8x252xf32> -> vector<8x252xf32>
    %12 = arith.addf %7, %11 : vector<8x252xf32>
    %c2 = arith.constant 2 : index
    %c0_9 = arith.constant 0 : index
    %c0_10 = arith.constant 0 : index
    %13 = vector.load %arg1[%c2, %c0_9, %c0_10] : memref<3x8x4xf32, #tpu.memory_space<vmem>>, vector<1x8x4xf32>
    %14 = vector.shape_cast %13 : vector<1x8x4xf32> to vector<8x4xf32>
    %15 = vector.extract_strided_slice %1 {offsets = [0, 4], sizes = [4, 252], strides = [1, 1]} : vector<4x256xf32> to vector<4x252xf32>
    %cst_11 = arith.constant dense<0.000000e+00> : vector<8x252xf32>
    %16 = tpu.matmul %14, %15, %cst_11 {dimension_numbers = #tpu.dot_dimension_numbers<[1], [0], [0], [1], [0, 0, 1, 1], [], []>, precision = #tpu.contract_precision<fp32>} : vector<8x4xf32>, vector<4x252xf32>, vector<8x252xf32> -> vector<8x252xf32>
    %17 = arith.addf %12, %16 : vector<8x252xf32>
    %c1_12 = arith.constant 1 : index
    %c0_13 = arith.constant 0 : index
    %c0_14 = arith.constant 0 : index
    %18 = vector.load %arg0[%c1_12, %c0_13, %c0_14] : memref<2x4x256xf32, #tpu.memory_space<vmem>>, vector<1x4x256xf32>
    %19 = vector.shape_cast %18 : vector<1x4x256xf32> to vector<4x256xf32>
    %cst_15 = arith.constant 0.000000e+00 : f32
    %20 = vector.broadcast %cst_15 : f32 to vector<8x252xf32>
    %c0_16 = arith.constant 0 : index
    %c0_17 = arith.constant 0 : index
    %c0_18 = arith.constant 0 : index
    %21 = vector.load %arg1[%c0_16, %c0_17, %c0_18] : memref<3x8x4xf32, #tpu.memory_space<vmem>>, vector<1x8x4xf32>
    %22 = vector.shape_cast %21 : vector<1x8x4xf32> to vector<8x4xf32>
    %23 = vector.extract_strided_slice %19 {offsets = [0, 0], sizes = [4, 252], strides = [1, 1]} : vector<4x256xf32> to vector<4x252xf32>
    %cst_19 = arith.constant dense<0.000000e+00> : vector<8x252xf32>
    %24 = tpu.matmul %22, %23, %cst_19 {dimension_numbers = #tpu.dot_dimension_numbers<[1], [0], [0], [1], [0, 0, 1, 1], [], []>, precision = #tpu.contract_precision<fp32>} : vector<8x4xf32>, vector<4x252xf32>, vector<8x252xf32> -> vector<8x252xf32>
    %25 = arith.addf %20, %24 : vector<8x252xf32>
    %c1_20 = arith.constant 1 : index
    %c0_21 = arith.constant 0 : index
    %c0_22 = arith.constant 0 : index
    %26 = vector.load %arg1[%c1_20, %c0_21, %c0_22] : memref<3x8x4xf32, #tpu.memory_space<vmem>>, vector<1x8x4xf32>
    %27 = vector.shape_cast %26 : vector<1x8x4xf32> to vector<8x4xf32>
    %28 = vector.extract_strided_slice %19 {offsets = [0, 2], sizes = [4, 252], strides = [1, 1]} : vector<4x256xf32> to vector<4x252xf32>
    %cst_23 = arith.constant dense<0.000000e+00> : vector<8x252xf32>
    %29 = tpu.matmul %27, %28, %cst_23 {dimension_numbers = #tpu.dot_dimension_numbers<[1], [0], [0], [1], [0, 0, 1, 1], [], []>, precision = #tpu.contract_precision<fp32>} : vector<8x4xf32>, vector<4x252xf32>, vector<8x252xf32> -> vector<8x252xf32>
    %30 = arith.addf %25, %29 : vector<8x252xf32>
    %c2_24 = arith.constant 2 : index
    %c0_25 = arith.constant 0 : index
    %c0_26 = arith.constant 0 : index
    %31 = vector.load %arg1[%c2_24, %c0_25, %c0_26] : memref<3x8x4xf32, #tpu.memory_space<vmem>>, vector<1x8x4xf32>
    %32 = vector.shape_cast %31 : vector<1x8x4xf32> to vector<8x4xf32>
    %33 = vector.extract_strided_slice %19 {offsets = [0, 4], sizes = [4, 252], strides = [1, 1]} : vector<4x256xf32> to vector<4x252xf32>
    %cst_27 = arith.constant dense<0.000000e+00> : vector<8x252xf32>
    %34 = tpu.matmul %32, %33, %cst_27 {dimension_numbers = #tpu.dot_dimension_numbers<[1], [0], [0], [1], [0, 0, 1, 1], [], []>, precision = #tpu.contract_precision<fp32>} : vector<8x4xf32>, vector<4x252xf32>, vector<8x252xf32> -> vector<8x252xf32>
    %35 = arith.addf %30, %34 : vector<8x252xf32>
    %36 = arith.addf %17, %35 : vector<8x252xf32>
    %cst_28 = arith.constant dense<0.000000e+00> : vector<8xf32>
    %37 = vector.multi_reduction <add>, %36, %cst_28 [1] : vector<8x252xf32> to vector<8xf32>
    %38 = vector.shape_cast %37 : vector<8xf32> to vector<8x1xf32>
    %cst_29 = arith.constant 0.0019841271 : f32
    %39 = vector.broadcast %cst_29 : f32 to vector<8x1xf32>
    %40 = arith.mulf %38, %39 : vector<8x1xf32>
    %cst_30 = arith.constant 0.000000e+00 : f32
    %41 = vector.broadcast %cst_30 : f32 to vector<8x1xf32>
    %42 = vector.broadcast %40 : vector<8x1xf32> to vector<8x252xf32>
    %43 = arith.subf %17, %42 : vector<8x252xf32>
    %44 = arith.mulf %43, %43 : vector<8x252xf32>
    %cst_31 = arith.constant dense<0.000000e+00> : vector<8xf32>
    %45 = vector.multi_reduction <add>, %44, %cst_31 [1] : vector<8x252xf32> to vector<8xf32>
    %46 = vector.shape_cast %45 : vector<8xf32> to vector<8x1xf32>
    %47 = arith.addf %41, %46 : vector<8x1xf32>
    %48 = vector.broadcast %40 : vector<8x1xf32> to vector<8x252xf32>
    %49 = arith.subf %35, %48 : vector<8x252xf32>
    %50 = arith.mulf %49, %49 : vector<8x252xf32>
    %cst_32 = arith.constant dense<0.000000e+00> : vector<8xf32>
    %51 = vector.multi_reduction <add>, %50, %cst_32 [1] : vector<8x252xf32> to vector<8xf32>
    %52 = vector.shape_cast %51 : vector<8xf32> to vector<8x1xf32>
    %53 = arith.addf %47, %52 : vector<8x1xf32>
    %cst_33 = arith.constant 0.0019841271 : f32
    %54 = vector.broadcast %cst_33 : f32 to vector<8x1xf32>
    %55 = arith.mulf %53, %54 : vector<8x1xf32>
    %cst_34 = arith.constant 9.99999974E-6 : f32
    %56 = vector.broadcast %cst_34 : f32 to vector<8x1xf32>
    %57 = arith.addf %55, %56 : vector<8x1xf32>
    %58 = math.rsqrt %57 : vector<8x1xf32>
    %c0_35 = arith.constant 0 : index
    %c0_36 = arith.constant 0 : index
    %59 = vector.load %arg3[%c0_35, %c0_36] : memref<8x1xf32, #tpu.memory_space<vmem>>, vector<8x1xf32>
    %c0_37 = arith.constant 0 : index
    %c0_38 = arith.constant 0 : index
    %60 = vector.load %arg4[%c0_37, %c0_38] : memref<8x1xf32, #tpu.memory_space<vmem>>, vector<8x1xf32>
    %c0_39 = arith.constant 0 : index
    %c0_40 = arith.constant 0 : index
    %61 = vector.load %arg5[%c0_39, %c0_40] : memref<8x1xf32, #tpu.memory_space<vmem>>, vector<8x1xf32>
    %62 = vector.broadcast %40 : vector<8x1xf32> to vector<8x252xf32>
    %63 = arith.subf %17, %62 : vector<8x252xf32>
    %64 = vector.broadcast %58 : vector<8x1xf32> to vector<8x252xf32>
    %65 = arith.mulf %63, %64 : vector<8x252xf32>
    %66 = vector.broadcast %59 : vector<8x1xf32> to vector<8x252xf32>
    %67 = arith.mulf %65, %66 : vector<8x252xf32>
    %68 = vector.broadcast %60 : vector<8x1xf32> to vector<8x252xf32>
    %69 = arith.addf %67, %68 : vector<8x252xf32>
    %cst_41 = arith.constant 0.000000e+00 : f32
    %70 = vector.broadcast %cst_41 : f32 to vector<8x252xf32>
    %71 = arith.cmpf ogt, %69, %70 : vector<8x252xf32>
    %72 = vector.broadcast %61 : vector<8x1xf32> to vector<8x252xf32>
    %73 = arith.mulf %72, %69 : vector<8x252xf32>
    %74 = arith.select %71, %69, %73 : vector<8x252xi1>, vector<8x252xf32>
    %c0_42 = arith.constant 0 : index
    %c0_43 = arith.constant 0 : index
    %c0_44 = arith.constant 0 : index
    %75 = vector.load %arg0[%c0_42, %c0_43, %c0_44] : memref<2x4x256xf32, #tpu.memory_space<vmem>>, vector<1x4x256xf32>
    %76 = vector.shape_cast %75 : vector<1x4x256xf32> to vector<4x256xf32>
    %77 = vector.extract_strided_slice %76 {offsets = [0, 3], sizes = [4, 252], strides = [1, 1]} : vector<4x256xf32> to vector<4x252xf32>
    %c0_45 = arith.constant 0 : index
    %c0_46 = arith.constant 0 : index
    %78 = vector.load %arg2[%c0_45, %c0_46] : memref<8x4xf32, #tpu.memory_space<vmem>>, vector<8x4xf32>
    %cst_47 = arith.constant dense<0.000000e+00> : vector<8x252xf32>
    %79 = tpu.matmul %78, %77, %cst_47 {dimension_numbers = #tpu.dot_dimension_numbers<[1], [0], [0], [1], [0, 0, 1, 1], [], []>, precision = #tpu.contract_precision<fp32>} : vector<8x4xf32>, vector<4x252xf32>, vector<8x252xf32> -> vector<8x252xf32>
    %80 = arith.addf %74, %79 : vector<8x252xf32>
    %c0_48 = arith.constant 0 : index
    %c0_49 = arith.constant 0 : index
    %c0_50 = arith.constant 0 : index
    %81 = vector.load %arg6[%c0_48, %c0_49, %c0_50] : memref<2x8x252xf32, #tpu.memory_space<vmem>>, vector<1x8x252xf32>
    %82 = vector.shape_cast %81 : vector<1x8x252xf32> to vector<8x252xf32>
    %83 = vector.shape_cast %80 : vector<8x252xf32> to vector<1x8x252xf32>
    tpu.vector_store %arg6[%c0_48, %c0_49, %c0_50], %83 {strides = array<i32>} : memref<2x8x252xf32, #tpu.memory_space<vmem>>, vector<1x8x252xf32>,
    %84 = vector.broadcast %40 : vector<8x1xf32> to vector<8x252xf32>
    %85 = arith.subf %35, %84 : vector<8x252xf32>
    %86 = vector.broadcast %58 : vector<8x1xf32> to vector<8x252xf32>
    %87 = arith.mulf %85, %86 : vector<8x252xf32>
    %88 = vector.broadcast %59 : vector<8x1xf32> to vector<8x252xf32>
    %89 = arith.mulf %87, %88 : vector<8x252xf32>
    %90 = vector.broadcast %60 : vector<8x1xf32> to vector<8x252xf32>
    %91 = arith.addf %89, %90 : vector<8x252xf32>
    %cst_51 = arith.constant 0.000000e+00 : f32
    %92 = vector.broadcast %cst_51 : f32 to vector<8x252xf32>
    %93 = arith.cmpf ogt, %91, %92 : vector<8x252xf32>
    %94 = vector.broadcast %61 : vector<8x1xf32> to vector<8x252xf32>
    %95 = arith.mulf %94, %91 : vector<8x252xf32>
    %96 = arith.select %93, %91, %95 : vector<8x252xi1>, vector<8x252xf32>
    %c1_52 = arith.constant 1 : index
    %c0_53 = arith.constant 0 : index
    %c0_54 = arith.constant 0 : index
    %97 = vector.load %arg0[%c1_52, %c0_53, %c0_54] : memref<2x4x256xf32, #tpu.memory_space<vmem>>, vector<1x4x256xf32>
    %98 = vector.shape_cast %97 : vector<1x4x256xf32> to vector<4x256xf32>
    %99 = vector.extract_strided_slice %98 {offsets = [0, 3], sizes = [4, 252], strides = [1, 1]} : vector<4x256xf32> to vector<4x252xf32>
    %c0_55 = arith.constant 0 : index
    %c0_56 = arith.constant 0 : index
    %100 = vector.load %arg2[%c0_55, %c0_56] : memref<8x4xf32, #tpu.memory_space<vmem>>, vector<8x4xf32>
    %cst_57 = arith.constant dense<0.000000e+00> : vector<8x252xf32>
    %101 = tpu.matmul %100, %99, %cst_57 {dimension_numbers = #tpu.dot_dimension_numbers<[1], [0], [0], [1], [0, 0, 1, 1], [], []>, precision = #tpu.contract_precision<fp32>} : vector<8x4xf32>, vector<4x252xf32>, vector<8x252xf32> -> vector<8x252xf32>
    %102 = arith.addf %96, %101 : vector<8x252xf32>
    %c1_58 = arith.constant 1 : index
    %c0_59 = arith.constant 0 : index
    %c0_60 = arith.constant 0 : index
    %103 = vector.load %arg6[%c1_58, %c0_59, %c0_60] : memref<2x8x252xf32, #tpu.memory_space<vmem>>, vector<1x8x252xf32>
    %104 = vector.shape_cast %103 : vector<1x8x252xf32> to vector<8x252xf32>
    %105 = vector.shape_cast %102 : vector<8x252xf32> to vector<1x8x252xf32>
    tpu.vector_store %arg6[%c1_58, %c0_59, %c0_60], %105 {strides = array<i32>} : memref<2x8x252xf32, #tpu.memory_space<vmem>>, vector<1x8x252xf32>,
    return
  }
}

</mosaic_0001>

<llo_original>
// kernel: tcn_block_forward.1
$region0: #{tcn_block_forward.1}
  #allocation0 [shape = 'u32[]', space=smem, size = 0x4, offset = 0x4, fixed_abs, tag = 'smem constant byte address 0x4 - core index']
  #allocation1 [shape = 'u32[144,128]{1,0:T(1,128)}', space=vmem, size = 0x12000, scoped, tag = 'internal scratch']
  %s0 = inlined_call_operand.vmem [shape: f32[2,4,256], index: 0, kind: input, shape index: {}]
  %s1 = inlined_call_operand.vmem [shape: f32[3,8,4], index: 1, kind: input, shape index: {}]
  %s2 = inlined_call_operand.vmem [shape: f32[8,4], index: 2, kind: input, shape index: {}]
  %s3 = inlined_call_operand.vmem [shape: f32[8,1], index: 3, kind: input, shape index: {}]
  %s4 = inlined_call_operand.vmem [shape: f32[8,1], index: 4, kind: input, shape index: {}]
  %s5 = inlined_call_operand.vmem [shape: f32[8,1], index: 5, kind: input, shape index: {}]
  %s6 = inlined_call_operand.hbm [shape: f32[2,8,252], index: 6, kind: output, shape index: {}]
  %s7 = sld [smem:[#allocation0]]
  $region34: #{tcn_block_forward.1} parent=0
    _
  %s9 = ssub.s32 1, %s7
  %s10 = scalar_select 0, %s9, %s7
  $region1: #{tcn_block_forward.1} parent=0
    #allocation2 [shape = 'u8[16384]{0}', space=vmem, size = 0x4000, scoped, tag = 'output window, operand 0, single buffered']
    #allocation3 [shape = 's32[1]{0}', space=sflag, size = 0x4, scoped, tag = 'scoped memory for tcn_block_forward.1']
    %11 = vsyncpa [#allocation3], 0
    // Predicated region
    $region2: #{tcn_block_forward.1} parent=1 // pred_check
      _
    $region3: #{tcn_block_forward.1} parent=1 // pred_check_branch
      %13 = sbr.rel (0) target = $region5
    $region4: #{tcn_block_forward.1} parent=1 // pred_region
      _
    $region5: #{tcn_block_forward.1} parent=1 // pred_fallthru
      _
    // Predicated region
    $region6: #{tcn_block_forward.1} parent=1 // pred_check
      _
    $region7: #{tcn_block_forward.1} parent=1 // pred_check_branch
      %15 = sbr.rel (0) target = $region9
    $region8: #{tcn_block_forward.1} parent=1 // pred_region
      _
    $region9: #{tcn_block_forward.1} parent=1 // pred_fallthru
      _
    // Predicated region
    $region10: #{tcn_block_forward.1} parent=1 // pred_check
      _
    $region11: #{tcn_block_forward.1} parent=1 // pred_check_branch
      %17 = sbr.rel (0) target = $region13
    $region12: #{tcn_block_forward.1} parent=1 // pred_region
      _
    $region13: #{tcn_block_forward.1} parent=1 // pred_fallthru
      _
    // Predicated region
    $region14: #{tcn_block_forward.1} parent=1 // pred_check
      _
    $region15: #{tcn_block_forward.1} parent=1 // pred_check_branch
      %19 = sbr.rel (0) target = $region17
    $region16: #{tcn_block_forward.1} parent=1 // pred_region
      _
    $region17: #{tcn_block_forward.1} parent=1 // pred_fallthru
      _
    // Predicated region
    $region18: #{tcn_block_forward.1} parent=1 // pred_check
      _
    $region19: #{tcn_block_forward.1} parent=1 // pred_check_branch
      %21 = sbr.rel (0) target = $region21
    $region20: #{tcn_block_forward.1} parent=1 // pred_region
      _
    $region21: #{tcn_block_forward.1} parent=1 // pred_fallthru
      _
    // Predicated region
    $region22: #{tcn_block_forward.1} parent=1 // pred_check
      _
    $region23: #{tcn_block_forward.1} parent=1 // pred_check_branch
      %23 = sbr.rel (0) target = $region25
    $region24: #{tcn_block_forward.1} parent=1 // pred_region
      _
    $region25: #{tcn_block_forward.1} parent=1 // pred_fallthru
      _
    %v24 = vld [vmem:[%s0] sm:$0xff]
    %v25 = vld [vmem:[%s1] sm:$0xff]
    %s26 = scalar_lea.vmem %s1, 8
    %v27 = vld [vmem:[%s26] sm:$0xff]
    %v29 = vcombine.high %v24, %v24
    %30 = vrot.lane.b32.xlu0 %v24, 126
    %v31 = vpop.permute.xlu0 %30
    %32 = vrot.lane.b32.xlu0 %v29, 126
    %v33 = vpop.permute.xlu0 %32
    %vm34 = vcmask 1031168
    %v35 = vsel %vm34, %v31, %v33
    %vm36 = vcmask 31744
    %v38 = vsel %vm36, %v27, 0
    %vm40 = vcmask 1043456
    %v41 = vsel %vm40, %v35, 0
    %v43 = vsel %vm40, %v33, 0
    %45 = vmatprep.subr.mxu0 0.0
    %46 = vmatpush1.msra.mxu0 0.0
    %47 = vmatprep.subr.mxu0 0.0
    %48 = vmatpush1.msra.mxu0 0.0
    %49 = vmatprep.subr.mxu0 0.0
    %50 = vmatpush1.msra.mxu0 0.0
    %51 = vmatprep.subr.mxu0 0.0
    %52 = vmatpush1.msra.mxu0 0.0
    %53 = vmatprep.subr.mxu0 0.0
    %54 = vmatpush1.msra.mxu0 0.0
    %55 = vmatprep.subr.mxu0 0.0
    %56 = vmatpush1.msra.mxu0 0.0
    %57 = vmatprep.subr.mxu0 0.0
    %58 = vmatpush1.msra.mxu0 0.0
    %59 = vmatprep.subr.mxu0 0.0
    %60 = vmatpush1.msra.mxu0 0.0
    %61 = vmatprep.subr.mxu0 0.0
    %62 = vmatpush1.msra.mxu0 0.0
    %63 = vmatprep.subr.mxu0 0.0
    %64 = vmatpush1.msra.mxu0 0.0
    %65 = vmatprep.subr.mxu0 0.0
    %66 = vmatpush1.msra.mxu0 0.0
    %67 = vmatprep.subr.mxu0 0.0
    %68 = vmatpush1.msra.mxu0 0.0
    %69 = vmatprep.subr.mxu0 0.0
    %70 = vmatpush1.msra.mxu0 0.0
    %71 = vmatprep.subr.mxu0 0.0
    %72 = vmatpush1.msra.mxu0 0.0
    %73 = vmatprep.subr.mxu0 0.0
    %74 = vmatpush1.msra.mxu0 0.0
    %v75 = vand.u32 %v43, 4294901760
    %76 = vmatprep.subr.mxu0 %v75
    %v77 = vand.u32 %v41, 4294901760
    %78 = vmatpush1.msra.mxu0 %v77
    %79 = vmatprep.subr.mxu0 0.0
    %80 = vmatpush2.msra.mxu0 0.0
    %81 = vmatprep.subr.mxu0 0.0
    %82 = vmatpush2.msra.mxu0 0.0
    %83 = vmatprep.subr.mxu0 0.0
    %84 = vmatpush2.msra.mxu0 0.0
    %85 = vmatprep.subr.mxu0 0.0
    %86 = vmatpush2.msra.mxu0 0.0
    %87 = vmatprep.subr.mxu0 0.0
    %88 = vmatpush2.msra.mxu0 0.0
    %89 = vmatprep.subr.mxu0 0.0
    %90 = vmatpush2.msra.mxu0 0.0
    %91 = vmatprep.subr.mxu0 0.0
    %92 = vmatpush2.msra.mxu0 0.0
    %93 = vmatprep.subr.mxu0 0.0
    %94 = vmatpush2.msra.mxu0 0.0
    %95 = vmatprep.subr.mxu0 0.0
    %96 = vmatpush2.msra.mxu0 0.0
    %97 = vmatprep.subr.mxu0 0.0
    %98 = vmatpush2.msra.mxu0 0.0
    %99 = vmatprep.subr.mxu0 0.0
    %100 = vmatpush2.msra.mxu0 0.0
    %101 = vmatprep.subr.mxu0 0.0
    %102 = vmatpush2.msra.mxu0 0.0
    %103 = vmatprep.subr.mxu0 0.0
    %104 = vmatpush2.msra.mxu0 0.0
    %105 = vmatprep.subr.mxu0 0.0
    %106 = vmatpush2.msra.mxu0 0.0
    %107 = vmatprep.subr.mxu0 0.0
    %108 = vmatpush2.msra.mxu0 0.0
    %109 = vmatprep.subr.mxu0 0.0
    %110 = vmatpush2.msra.mxu0 0.0
    %111 = vmatprep.mubr.f32.mxu0 0.0
    %v112 = vand.u32 %v38, 4294901760
    %v113 = vsub.f32 %v38, %v112
    %v114 = vand.u32 %v113, 4294901760
    %v115 = vsub.f32 %v113, %v114
    %v116 = vand.u32 %v115, 4294901760
    %117 = vmatmul.mubr.f32.gmra.mxu0 %v116
    %v118 = vpop.f32.mrf.mxu0
    %v119 = vadd.f32 0.0, %v118
    %v120 = vpop.f32.mrf.mxu0
    %v121 = vadd.f32 0.0, %v120
    %122 = vdwg.mxu0
    %123 = vmatprep.subr.mxu0 0.0
    %124 = vmatpush1.msra.mxu0 0.0
    %125 = vmatprep.subr.mxu0 0.0
    %126 = vmatpush1.msra.mxu0 0.0
    %127 = vmatprep.subr.mxu0 0.0
    %128 = vmatpush1.msra.mxu0 0.0
    %129 = vmatprep.subr.mxu0 0.0
    %130 = vmatpush1.msra.mxu0 0.0
    %131 = vmatprep.subr.mxu0 0.0
    %132 = vmatpush1.msra.mxu0 0.0
    %133 = vmatprep.subr.mxu0 0.0
    %134 = vmatpush1.msra.mxu0 0.0
    %135 = vmatprep.subr.mxu0 0.0
    %136 = vmatpush1.msra.mxu0 0.0
    %137 = vmatprep.subr.mxu0 0.0
    %138 = vmatpush1.msra.mxu0 0.0
    %139 = vmatprep.subr.mxu0 0.0
    %140 = vmatpush1.msra.mxu0 0.0
    %141 = vmatprep.subr.mxu0 0.0
    %142 = vmatpush1.msra.mxu0 0.0
    %143 = vmatprep.subr.mxu0 0.0
    %144 = vmatpush1.msra.mxu0 0.0
    %145 = vmatprep.subr.mxu0 0.0
    %146 = vmatpush1.msra.mxu0 0.0
    %147 = vmatprep.subr.mxu0 0.0
    %148 = vmatpush1.msra.mxu0 0.0
    %149 = vmatprep.subr.mxu0 0.0
    %150 = vmatpush1.msra.mxu0 0.0
    %151 = vmatprep.subr.mxu0 0.0
    %152 = vmatpush1.msra.mxu0 0.0
    %v153 = vand.u32 %v43, 4294901760
    %v154 = vsub.f32 %v43, %v153
    %v155 = vand.u32 %v154, 4294901760
    %v156 = vsub.f32 %v154, %v155
    %v157 = vand.u32 %v156, 4294901760
    %158 = vmatprep.subr.mxu0 %v157
    %v159 = vand.u32 %v41, 4294901760
    %v160 = vsub.f32 %v41, %v159
    %v161 = vand.u32 %v160, 4294901760
    %v162 = vsub.f32 %v160, %v161
    %v163 = vand.u32 %v162, 4294901760
    %164 = vmatpush1.msra.mxu0 %v163
    %165 = vmatprep.subr.mxu0 0.0
    %166 = vmatpush2.msra.mxu0 0.0
    %167 = vmatprep.subr.mxu0 0.0
    %168 = vmatpush2.msra.mxu0 0.0
    %169 = vmatprep.subr.mxu0 0.0
    %170 = vmatpush2.msra.mxu0 0.0
    %171 = vmatprep.subr.mxu0 0.0
    %172 = vmatpush2.msra.mxu0 0.0
    %173 = vmatprep.subr.mxu0 0.0
    %174 = vmatpush2.msra.mxu0 0.0
    %175 = vmatprep.subr.mxu0 0.0
    %176 = vmatpush2.msra.mxu0 0.0
    %177 = vmatprep.subr.mxu0 0.0
    %178 = vmatpush2.msra.mxu0 0.0
    %179 = vmatprep.subr.mxu0 0.0
    %180 = vmatpush2.msra.mxu0 0.0
    %181 = vmatprep.subr.mxu0 0.0
    %182 = vmatpush2.msra.mxu0 0.0
    %183 = vmatprep.subr.mxu0 0.0
    %184 = vmatpush2.msra.mxu0 0.0
    %185 = vmatprep.subr.mxu0 0.0
    %186 = vmatpush2.msra.mxu0 0.0
    %187 = vmatprep.subr.mxu0 0.0
    %188 = vmatpush2.msra.mxu0 0.0
    %189 = vmatprep.subr.mxu0 0.0
    %190 = vmatpush2.msra.mxu0 0.0
    %191 = vmatprep.subr.mxu0 0.0
    %192 = vmatpush2.msra.mxu0 0.0
    %193 = vmatprep.subr.mxu0 0.0
    %194 = vmatpush2.msra.mxu0 0.0
    %195 = vmatprep.subr.mxu0 0.0
    %196 = vmatpush2.msra.mxu0 0.0
    %197 = vmatprep.mubr.f32.mxu0 0.0
    %v198 = vand.u32 %v38, 4294901760
    %199 = vmatmul.mubr.f32.gmra.mxu0 %v198
    %v200 = vpop.f32.mrf.mxu0
    %v201 = vadd.f32 %v119, %v200
    %v202 = vpop.f32.mrf.mxu0
    %v203 = vadd.f32 %v121, %v202
    %204 = vdwg.mxu0
    %205 = vmatprep.subr.mxu0 0.0
    %206 = vmatpush1.msra.mxu0 0.0
    %207 = vmatprep.subr.mxu0 0.0
    %208 = vmatpush1.msra.mxu0 0.0
    %209 = vmatprep.subr.mxu0 0.0
    %210 = vmatpush1.msra.mxu0 0.0
    %211 = vmatprep.subr.mxu0 0.0
    %212 = vmatpush1.msra.mxu0 0.0
    %213 = vmatprep.subr.mxu0 0.0
    %214 = vmatpush1.msra.mxu0 0.0
    %215 = vmatprep.subr.mxu0 0.0
    %216 = vmatpush1.msra.mxu0 0.0
    %217 = vmatprep.subr.mxu0 0.0
    %218 = vmatpush1.msra.mxu0 0.0
    %219 = vmatprep.subr.mxu0 0.0
    %220 = vmatpush1.msra.mxu0 0.0
    %221 = vmatprep.subr.mxu0 0.0
    %222 = vmatpush1.msra.mxu0 0.0
    %223 = vmatprep.subr.mxu0 0.0
    %224 = vmatpush1.msra.mxu0 0.0
    %225 = vmatprep.subr.mxu0 0.0
    %226 = vmatpush1.msra.mxu0 0.0
    %227 = vmatprep.subr.mxu0 0.0
    %228 = vmatpush1.msra.mxu0 0.0
    %229 = vmatprep.subr.mxu0 0.0
    %230 = vmatpush1.msra.mxu0 0.0
    %231 = vmatprep.subr.mxu0 0.0
    %232 = vmatpush1.msra.mxu0 0.0
    %233 = vmatprep.subr.mxu0 0.0
    %234 = vmatpush1.msra.mxu0 0.0
    %v235 = vand.u32 %v43, 4294901760
    %v236 = vsub.f32 %v43, %v235
    %237 = vmatprep.subr.mxu0 %v236
    %v238 = vand.u32 %v41, 4294901760
    %v239 = vsub.f32 %v41, %v238
    %240 = vmatpush1.msra.mxu0 %v239
    %241 = vmatprep.subr.mxu0 0.0
    %242 = vmatpush2.msra.mxu0 0.0
    %243 = vmatprep.subr.mxu0 0.0
    %244 = vmatpush2.msra.mxu0 0.0
    %245 = vmatprep.subr.mxu0 0.0
    %246 = vmatpush2.msra.mxu0 0.0
    %247 = vmatprep.subr.mxu0 0.0
    %248 = vmatpush2.msra.mxu0 0.0
    %249 = vmatprep.subr.mxu0 0.0
    %250 = vmatpush2.msra.mxu0 0.0
    %251 = vmatprep.subr.mxu0 0.0
    %252 = vmatpush2.msra.mxu0 0.0
    %253 = vmatprep.subr.mxu0 0.0
    %254 = vmatpush2.msra.mxu0 0.0
    %255 = vmatprep.subr.mxu0 0.0
    %256 = vmatpush2.msra.mxu0 0.0
    %257 = vmatprep.subr.mxu0 0.0
    %258 = vmatpush2.msra.mxu0 0.0
    %259 = vmatprep.subr.mxu0 0.0
    %260 = vmatpush2.msra.mxu0 0.0
    %261 = vmatprep.subr.mxu0 0.0
    %262 = vmatpush2.msra.mxu0 0.0
    %263 = vmatprep.subr.mxu0 0.0
    %264 = vmatpush2.msra.mxu0 0.0
    %265 = vmatprep.subr.mxu0 0.0
    %266 = vmatpush2.msra.mxu0 0.0
    %267 = vmatprep.subr.mxu0 0.0
    %268 = vmatpush2.msra.mxu0 0.0
    %269 = vmatprep.subr.mxu0 0.0
    %270 = vmatpush2.msra.mxu0 0.0
    %271 = vmatprep.subr.mxu0 0.0
    %272 = vmatpush2.msra.mxu0 0.0
    %273 = vmatprep.mubr.f32.mxu0 0.0
    %v274 = vand.u32 %v38, 4294901760
    %v275 = vsub.f32 %v38, %v274
    %276 = vmatmul.mubr.f32.gmra.mxu0 %v275
    %v277 = vpop.f32.mrf.mxu0
    %v278 = vadd.f32 %v201, %v277
    %v279 = vpop.f32.mrf.mxu0
    %v280 = vadd.f32 %v203, %v279
    %281 = vdwg.mxu0
    %282 = vmatprep.subr.mxu0 0.0
    %283 = vmatpush1.msra.mxu0 0.0
    %284 = vmatprep.subr.mxu0 0.0
    %285 = vmatpush1.msra.mxu0 0.0
    %286 = vmatprep.subr.mxu0 0.0
    %287 = vmatpush1.msra.mxu0 0.0
    %288 = vmatprep.subr.mxu0 0.0
    %289 = vmatpush1.msra.mxu0 0.0
    %290 = vmatprep.subr.mxu0 0.0
    %291 = vmatpush1.msra.mxu0 0.0
    %292 = vmatprep.subr.mxu0 0.0
    %293 = vmatpush1.msra.mxu0 0.0
    %294 = vmatprep.subr.mxu0 0.0
    %295 = vmatpush1.msra.mxu0 0.0
    %296 = vmatprep.subr.mxu0 0.0
    %297 = vmatpush1.msra.mxu0 0.0
    %298 = vmatprep.subr.mxu0 0.0
    %299 = vmatpush1.msra.mxu0 0.0
    %300 = vmatprep.subr.mxu0 0.0
    %301 = vmatpush1.msra.mxu0 0.0
    %302 = vmatprep.subr.mxu0 0.0
    %303 = vmatpush1.msra.mxu0 0.0
    %304 = vmatprep.subr.mxu0 0.0
    %305 = vmatpush1.msra.mxu0 0.0
    %306 = vmatprep.subr.mxu0 0.0
    %307 = vmatpush1.msra.mxu0 0.0
    %308 = vmatprep.subr.mxu0 0.0
    %309 = vmatpush1.msra.mxu0 0.0
    %310 = vmatprep.subr.mxu0 0.0
    %311 = vmatpush1.msra.mxu0 0.0
    %v312 = vand.u32 %v43, 4294901760
    %313 = vmatprep.subr.mxu0 %v312
    %v314 = vand.u32 %v41, 4294901760
    %315 = vmatpush1.msra.mxu0 %v314
    %316 = vmatprep.subr.mxu0 0.0
    %317 = vmatpush2.msra.mxu0 0.0
    %318 = vmatprep.subr.mxu0 0.0
    %319 = vmatpush2.msra.mxu0 0.0
    %320 = vmatprep.subr.mxu0 0.0
    %321 = vmatpush2.msra.mxu0 0.0
    %322 = vmatprep.subr.mxu0 0.0
    %323 = vmatpush2.msra.mxu0 0.0
    %324 = vmatprep.subr.mxu0 0.0
    %325 = vmatpush2.msra.mxu0 0.0
    %326 = vmatprep.subr.mxu0 0.0
    %327 = vmatpush2.msra.mxu0 0.0
    %328 = vmatprep.subr.mxu0 0.0
    %329 = vmatpush2.msra.mxu0 0.0
    %330 = vmatprep.subr.mxu0 0.0
    %331 = vmatpush2.msra.mxu0 0.0
    %332 = vmatprep.subr.mxu0 0.0
    %333 = vmatpush2.msra.mxu0 0.0
    %334 = vmatprep.subr.mxu0 0.0
    %335 = vmatpush2.msra.mxu0 0.0
    %336 = vmatprep.subr.mxu0 0.0
    %337 = vmatpush2.msra.mxu0 0.0
    %338 = vmatprep.subr.mxu0 0.0
    %339 = vmatpush2.msra.mxu0 0.0
    %340 = vmatprep.subr.mxu0 0.0
    %341 = vmatpush2.msra.mxu0 0.0
    %342 = vmatprep.subr.mxu0 0.0
    %343 = vmatpush2.msra.mxu0 0.0
    %344 = vmatprep.subr.mxu0 0.0
    %345 = vmatpush2.msra.mxu0 0.0
    %346 = vmatprep.subr.mxu0 0.0
    %347 = vmatpush2.msra.mxu0 0.0
    %348 = vmatprep.mubr.f32.mxu0 0.0
    %v349 = vand.u32 %v38, 4294901760
    %v350 = vsub.f32 %v38, %v349
    %v351 = vand.u32 %v350, 4294901760
    %352 = vmatmul.mubr.f32.gmra.mxu0 %v351
    %v353 = vpop.f32.mrf.mxu0
    %v354 = vadd.f32 %v278, %v353
    %v355 = vpop.f32.mrf.mxu0
    %v356 = vadd.f32 %v280, %v355
    %357 = vdwg.mxu0
    %358 = vmatprep.subr.mxu0 0.0
    %359 = vmatpush1.msra.mxu0 0.0
    %360 = vmatprep.subr.mxu0 0.0
    %361 = vmatpush1.msra.mxu0 0.0
    %362 = vmatprep.subr.mxu0 0.0
    %363 = vmatpush1.msra.mxu0 0.0
    %364 = vmatprep.subr.mxu0 0.0
    %365 = vmatpush1.msra.mxu0 0.0
    %366 = vmatprep.subr.mxu0 0.0
    %367 = vmatpush1.msra.mxu0 0.0
    %368 = vmatprep.subr.mxu0 0.0
    %369 = vmatpush1.msra.mxu0 0.0
    %370 = vmatprep.subr.mxu0 0.0
    %371 = vmatpush1.msra.mxu0 0.0
    %372 = vmatprep.subr.mxu0 0.0
    %373 = vmatpush1.msra.mxu0 0.0
    %374 = vmatprep.subr.mxu0 0.0
    %375 = vmatpush1.msra.mxu0 0.0
    %376 = vmatprep.subr.mxu0 0.0
    %377 = vmatpush1.msra.mxu0 0.0
    %378 = vmatprep.subr.mxu0 0.0
    %379 = vmatpush1.msra.mxu0 0.0
    %380 = vmatprep.subr.mxu0 0.0
    %381 = vmatpush1.msra.mxu0 0.0
    %382 = vmatprep.subr.mxu0 0.0
    %383 = vmatpush1.msra.mxu0 0.0
    %384 = vmatprep.subr.mxu0 0.0
    %385 = vmatpush1.msra.mxu0 0.0
    %386 = vmatprep.subr.mxu0 0.0
    %387 = vmatpush1.msra.mxu0 0.0
    %v388 = vand.u32 %v43, 4294901760
    %v389 = vsub.f32 %v43, %v388
    %v390 = vand.u32 %v389, 4294901760
    %391 = vmatprep.subr.mxu0 %v390
    %v392 = vand.u32 %v41, 4294901760
    %v393 = vsub.f32 %v41, %v392
    %v394 = vand.u32 %v393, 4294901760
    %395 = vmatpush1.msra.mxu0 %v394
    %396 = vmatprep.subr.mxu0 0.0
    %397 = vmatpush2.msra.mxu0 0.0
    %398 = vmatprep.subr.mxu0 0.0
    %399 = vmatpush2.msra.mxu0 0.0
    %400 = vmatprep.subr.mxu0 0.0
    %401 = vmatpush2.msra.mxu0 0.0
    %402 = vmatprep.subr.mxu0 0.0
    %403 = vmatpush2.msra.mxu0 0.0
    %404 = vmatprep.subr.mxu0 0.0
    %405 = vmatpush2.msra.mxu0 0.0
    %406 = vmatprep.subr.mxu0 0.0
    %407 = vmatpush2.msra.mxu0 0.0
    %408 = vmatprep.subr.mxu0 0.0
    %409 = vmatpush2.msra.mxu0 0.0
    %410 = vmatprep.subr.mxu0 0.0
    %411 = vmatpush2.msra.mxu0 0.0
    %412 = vmatprep.subr.mxu0 0.0
    %413 = vmatpush2.msra.mxu0 0.0
    %414 = vmatprep.subr.mxu0 0.0
    %415 = vmatpush2.msra.mxu0 0.0
    %416 = vmatprep.subr.mxu0 0.0
    %417 = vmatpush2.msra.mxu0 0.0
    %418 = vmatprep.subr.mxu0 0.0
    %419 = vmatpush2.msra.mxu0 0.0
    %420 = vmatprep.subr.mxu0 0.0
    %421 = vmatpush2.msra.mxu0 0.0
    %422 = vmatprep.subr.mxu0 0.0
    %423 = vmatpush2.msra.mxu0 0.0
    %424 = vmatprep.subr.mxu0 0.0
    %425 = vmatpush2.msra.mxu0 0.0
    %426 = vmatprep.subr.mxu0 0.0
    %427 = vmatpush2.msra.mxu0 0.0
    %428 = vmatprep.mubr.f32.mxu0 0.0
    %v429 = vand.u32 %v38, 4294901760
    %430 = vmatmul.mubr.f32.gmra.mxu0 %v429
    %v431 = vpop.f32.mrf.mxu0
    %v432 = vadd.f32 %v354, %v431
    %v433 = vpop.f32.mrf.mxu0
    %v434 = vadd.f32 %v356, %v433
    %435 = vdwg.mxu0
    %436 = vmatprep.subr.mxu0 0.0
    %437 = vmatpush1.msra.mxu0 0.0
    %438 = vmatprep.subr.mxu0 0.0
    %439 = vmatpush1.msra.mxu0 0.0
    %440 = vmatprep.subr.mxu0 0.0
    %441 = vmatpush1.msra.mxu0 0.0
    %442 = vmatprep.subr.mxu0 0.0
    %443 = vmatpush1.msra.mxu0 0.0
    %444 = vmatprep.subr.mxu0 0.0
    %445 = vmatpush1.msra.mxu0 0.0
    %446 = vmatprep.subr.mxu0 0.0
    %447 = vmatpush1.msra.mxu0 0.0
    %448 = vmatprep.subr.mxu0 0.0
    %449 = vmatpush1.msra.mxu0 0.0
    %450 = vmatprep.subr.mxu0 0.0
    %451 = vmatpush1.msra.mxu0 0.0
    %452 = vmatprep.subr.mxu0 0.0
    %453 = vmatpush1.msra.mxu0 0.0
    %454 = vmatprep.subr.mxu0 0.0
    %455 = vmatpush1.msra.mxu0 0.0
    %456 = vmatprep.subr.mxu0 0.0
    %457 = vmatpush1.msra.mxu0 0.0
    %458 = vmatprep.subr.mxu0 0.0
    %459 = vmatpush1.msra.mxu0 0.0
    %460 = vmatprep.subr.mxu0 0.0
    %461 = vmatpush1.msra.mxu0 0.0
    %462 = vmatprep.subr.mxu0 0.0
    %463 = vmatpush1.msra.mxu0 0.0
    %464 = vmatprep.subr.mxu0 0.0
    %465 = vmatpush1.msra.mxu0 0.0
    %v466 = vand.u32 %v43, 4294901760
    %467 = vmatprep.subr.mxu0 %v466
    %v468 = vand.u32 %v41, 4294901760
    %469 = vmatpush1.msra.mxu0 %v468
    %470 = vmatprep.subr.mxu0 0.0
    %471 = vmatpush2.msra.mxu0 0.0
    %472 = vmatprep.subr.mxu0 0.0
    %473 = vmatpush2.msra.mxu0 0.0
    %474 = vmatprep.subr.mxu0 0.0
    %475 = vmatpush2.msra.mxu0 0.0
    %476 = vmatprep.subr.mxu0 0.0
    %477 = vmatpush2.msra.mxu0 0.0
    %478 = vmatprep.subr.mxu0 0.0
    %479 = vmatpush2.msra.mxu0 0.0
    %480 = vmatprep.subr.mxu0 0.0
    %481 = vmatpush2.msra.mxu0 0.0
    %482 = vmatprep.subr.mxu0 0.0
    %483 = vmatpush2.msra.mxu0 0.0
    %484 = vmatprep.subr.mxu0 0.0
    %485 = vmatpush2.msra.mxu0 0.0
    %486 = vmatprep.subr.mxu0 0.0
    %487 = vmatpush2.msra.mxu0 0.0
    %488 = vmatprep.subr.mxu0 0.0
    %489 = vmatpush2.msra.mxu0 0.0
    %490 = vmatprep.subr.mxu0 0.0
    %491 = vmatpush2.msra.mxu0 0.0
    %492 = vmatprep.subr.mxu0 0.0
    %493 = vmatpush2.msra.mxu0 0.0
    %494 = vmatprep.subr.mxu0 0.0
    %495 = vmatpush2.msra.mxu0 0.0
    %496 = vmatprep.subr.mxu0 0.0
    %497 = vmatpush2.msra.mxu0 0.0
    %498 = vmatprep.subr.mxu0 0.0
    %499 = vmatpush2.msra.mxu0 0.0
    %500 = vmatprep.subr.mxu0 0.0
    %501 = vmatpush2.msra.mxu0 0.0
    %502 = vmatprep.mubr.f32.mxu0 0.0
    %v503 = vand.u32 %v38, 4294901760
    %504 = vmatmul.mubr.f32.gmra.mxu0 %v503
    %v505 = vpop.f32.mrf.mxu0
    %v506 = vadd.f32 %v432, %v505
    %v507 = vpop.f32.mrf.mxu0
    %v508 = vadd.f32 %v434, %v507
    %509 = vdwg.mxu0
    %v511 = vsel %vm36, %v25, 0
    %v513 = vsel %vm40, %v24, 0
    %v515 = vsel %vm40, %v29, 0
    %517 = vmatprep.subr.mxu0 0.0
    %518 = vmatpush1.msra.mxu0 0.0
    %519 = vmatprep.subr.mxu0 0.0
    %520 = vmatpush1.msra.mxu0 0.0
    %521 = vmatprep.subr.mxu0 0.0
    %522 = vmatpush1.msra.mxu0 0.0
    %523 = vmatprep.subr.mxu0 0.0
    %524 = vmatpush1.msra.mxu0 0.0
    %525 = vmatprep.subr.mxu0 0.0
    %526 = vmatpush1.msra.mxu0 0.0
    %527 = vmatprep.subr.mxu0 0.0
    %528 = vmatpush1.msra.mxu0 0.0
    %529 = vmatprep.subr.mxu0 0.0
    %530 = vmatpush1.msra.mxu0 0.0
    %531 = vmatprep.subr.mxu0 0.0
    %532 = vmatpush1.msra.mxu0 0.0
    %533 = vmatprep.subr.mxu0 0.0
    %534 = vmatpush1.msra.mxu0 0.0
    %535 = vmatprep.subr.mxu0 0.0
    %536 = vmatpush1.msra.mxu0 0.0
    %537 = vmatprep.subr.mxu0 0.0
    %538 = vmatpush1.msra.mxu0 0.0
    %539 = vmatprep.subr.mxu0 0.0
    %540 = vmatpush1.msra.mxu0 0.0
    %541 = vmatprep.subr.mxu0 0.0
    %542 = vmatpush1.msra.mxu0 0.0
    %543 = vmatprep.subr.mxu0 0.0
    %544 = vmatpush1.msra.mxu0 0.0
    %545 = vmatprep.subr.mxu0 0.0
    %546 = vmatpush1.msra.mxu0 0.0
    %v547 = vand.u32 %v515, 4294901760
    %548 = vmatprep.subr.mxu0 %v547
    %v549 = vand.u32 %v513, 4294901760
    %550 = vmatpush1.msra.mxu0 %v549
    %551 = vmatprep.subr.mxu0 0.0
    %552 = vmatpush2.msra.mxu0 0.0
    %553 = vmatprep.subr.mxu0 0.0
    %554 = vmatpush2.msra.mxu0 0.0
    %555 = vmatprep.subr.mxu0 0.0
    %556 = vmatpush2.msra.mxu0 0.0
    %557 = vmatprep.subr.mxu0 0.0
    %558 = vmatpush2.msra.mxu0 0.0
    %559 = vmatprep.subr.mxu0 0.0
    %560 = vmatpush2.msra.mxu0 0.0
    %561 = vmatprep.subr.mxu0 0.0
    %562 = vmatpush2.msra.mxu0 0.0
    %563 = vmatprep.subr.mxu0 0.0
    %564 = vmatpush2.msra.mxu0 0.0
    %565 = vmatprep.subr.mxu0 0.0
    %566 = vmatpush2.msra.mxu0 0.0
    %567 = vmatprep.subr.mxu0 0.0
    %568 = vmatpush2.msra.mxu0 0.0
    %569 = vmatprep.subr.mxu0 0.0
    %570 = vmatpush2.msra.mxu0 0.0
    %571 = vmatprep.subr.mxu0 0.0
    %572 = vmatpush2.msra.mxu0 0.0
    %573 = vmatprep.subr.mxu0 0.0
    %574 = vmatpush2.msra.mxu0 0.0
    %575 = vmatprep.subr.mxu0 0.0
    %576 = vmatpush2.msra.mxu0 0.0
    %577 = vmatprep.subr.mxu0 0.0
    %578 = vmatpush2.msra.mxu0 0.0
    %579 = vmatprep.subr.mxu0 0.0
    %580 = vmatpush2.msra.mxu0 0.0
    %581 = vmatprep.subr.mxu0 0.0
    %582 = vmatpush2.msra.mxu0 0.0
    %583 = vmatprep.mubr.f32.mxu0 0.0
    %v584 = vand.u32 %v511, 4294901760
    %v585 = vsub.f32 %v511, %v584
    %v586 = vand.u32 %v585, 4294901760
    %v587 = vsub.f32 %v585, %v586
    %v588 = vand.u32 %v587, 4294901760
    %589 = vmatmul.mubr.f32.gmra.mxu0 %v588
    %v590 = vpop.f32.mrf.mxu0
    %v591 = vadd.f32 %v506, %v590
    %v592 = vpop.f32.mrf.mxu0
    %v593 = vadd.f32 %v508, %v592
    %594 = vdwg.mxu0
    %595 = vmatprep.subr.mxu0 0.0
    %596 = vmatpush1.msra.mxu0 0.0
    %597 = vmatprep.subr.mxu0 0.0
    %598 = vmatpush1.msra.mxu0 0.0
    %599 = vmatprep.subr.mxu0 0.0
    %600 = vmatpush1.msra.mxu0 0.0
    %601 = vmatprep.subr.mxu0 0.0
    %602 = vmatpush1.msra.mxu0 0.0
    %603 = vmatprep.subr.mxu0 0.0
    %604 = vmatpush1.msra.mxu0 0.0
    %605 = vmatprep.subr.mxu0 0.0
    %606 = vmatpush1.msra.mxu0 0.0
    %607 = vmatprep.subr.mxu0 0.0
    %608 = vmatpush1.msra.mxu0 0.0
    %609 = vmatprep.subr.mxu0 0.0
    %610 = vmatpush1.msra.mxu0 0.0
    %611 = vmatprep.subr.mxu0 0.0
    %612 = vmatpush1.msra.mxu0 0.0
    %613 = vmatprep.subr.mxu0 0.0
    %614 = vmatpush1.msra.mxu0 0.0
    %615 = vmatprep.subr.mxu0 0.0
    %616 = vmatpush1.msra.mxu0 0.0
    %617 = vmatprep.subr.mxu0 0.0
    %618 = vmatpush1.msra.mxu0 0.0
    %619 = vmatprep.subr.mxu0 0.0
    %620 = vmatpush1.msra.mxu0 0.0
    %621 = vmatprep.subr.mxu0 0.0
    %622 = vmatpush1.msra.mxu0 0.0
    %623 = vmatprep.subr.mxu0 0.0
    %624 = vmatpush1.msra.mxu0 0.0
    %v625 = vand.u32 %v515, 4294901760
    %v626 = vsub.f32 %v515, %v625
    %v627 = vand.u32 %v626, 4294901760
    %v628 = vsub.f32 %v626, %v627
    %v629 = vand.u32 %v628, 4294901760
    %630 = vmatprep.subr.mxu0 %v629
    %v631 = vand.u32 %v513, 4294901760
    %v632 = vsub.f32 %v513, %v631
    %v633 = vand.u32 %v632, 4294901760
    %v634 = vsub.f32 %v632, %v633
    %v635 = vand.u32 %v634, 4294901760
    %636 = vmatpush1.msra.mxu0 %v635
    %637 = vmatprep.subr.mxu0 0.0
    %638 = vmatpush2.msra.mxu0 0.0
    %639 = vmatprep.subr.mxu0 0.0
    %640 = vmatpush2.msra.mxu0 0.0
    %641 = vmatprep.subr.mxu0 0.0
    %642 = vmatpush2.msra.mxu0 0.0
    %643 = vmatprep.subr.mxu0 0.0
    %644 = vmatpush2.msra.mxu0 0.0
    %645 = vmatprep.subr.mxu0 0.0
    %646 = vmatpush2.msra.mxu0 0.0
    %647 = vmatprep.subr.mxu0 0.0
    %648 = vmatpush2.msra.mxu0 0.0
    %649 = vmatprep.subr.mxu0 0.0
    %650 = vmatpush2.msra.mxu0 0.0
    %651 = vmatprep.subr.mxu0 0.0
    %652 = vmatpush2.msra.mxu0 0.0
    %653 = vmatprep.subr.mxu0 0.0
    %654 = vmatpush2.msra.mxu0 0.0
    %655 = vmatprep.subr.mxu0 0.0
    %656 = vmatpush2.msra.mxu0 0.0
    %657 = vmatprep.subr.mxu0 0.0
    %658 = vmatpush2.msra.mxu0 0.0
    %659 = vmatprep.subr.mxu0 0.0
    %660 = vmatpush2.msra.mxu0 0.0
    %661 = vmatprep.subr.mxu0 0.0
    %662 = vmatpush2.msra.mxu0 0.0
    %663 = vmatprep.subr.mxu0 0.0
    %664 = vmatpush2.msra.mxu0 0.0
    %665 = vmatprep.subr.mxu0 0.0
    %666 = vmatpush2.msra.mxu0 0.0
    %667 = vmatprep.subr.mxu0 0.0
    %668 = vmatpush2.msra.mxu0 0.0
    %669 = vmatprep.mubr.f32.mxu0 0.0
    %v670 = vand.u32 %v511, 4294901760
    %671 = vmatmul.mubr.f32.gmra.mxu0 %v670
    %v672 = vpop.f32.mrf.mxu0
    %v673 = vadd.f32 %v591, %v672
    %v674 = vpop.f32.mrf.mxu0
    %v675 = vadd.f32 %v593, %v674
    %676 = vdwg.mxu0
    %677 = vmatprep.subr.mxu0 0.0
    %678 = vmatpush1.msra.mxu0 0.0
    %679 = vmatprep.subr.mxu0 0.0
    %680 = vmatpush1.msra.mxu0 0.0
    %681 = vmatprep.subr.mxu0 0.0
    %682 = vmatpush1.msra.mxu0 0.0
    %683 = vmatprep.subr.mxu0 0.0
    %684 = vmatpush1.msra.mxu0 0.0
    %685 = vmatprep.subr.mxu0 0.0
    %686 = vmatpush1.msra.mxu0 0.0
    %687 = vmatprep.subr.mxu0 0.0
    %688 = vmatpush1.msra.mxu0 0.0
    %689 = vmatprep.subr.mxu0 0.0
    %690 = vmatpush1.msra.mxu0 0.0
    %691 = vmatprep.subr.mxu0 0.0
    %692 = vmatpush1.msra.mxu0 0.0
    %693 = vmatprep.subr.mxu0 0.0
    %694 = vmatpush1.msra.mxu0 0.0
    %695 = vmatprep.subr.mxu0 0.0
    %696 = vmatpush1.msra.mxu0 0.0
    %697 = vmatprep.subr.mxu0 0.0
    %698 = vmatpush1.msra.mxu0 0.0
    %699 = vmatprep.subr.mxu0 0.0
    %700 = vmatpush1.msra.mxu0 0.0
    %701 = vmatprep.subr.mxu0 0.0
    %702 = vmatpush1.msra.mxu0 0.0
    %703 = vmatprep.subr.mxu0 0.0
    %704 = vmatpush1.msra.mxu0 0.0
    %705 = vmatprep.subr.mxu0 0.0
    %706 = vmatpush1.msra.mxu0 0.0
    %v707 = vand.u32 %v515, 4294901760
    %v708 = vsub.f32 %v515, %v707
    %709 = vmatprep.subr.mxu0 %v708
    %v710 = vand.u32 %v513, 4294901760
    %v711 = vsub.f32 %v513, %v710
    %712 = vmatpush1.msra.mxu0 %v711
    %713 = vmatprep.subr.mxu0 0.0
    %714 = vmatpush2.msra.mxu0 0.0
    %715 = vmatprep.subr.mxu0 0.0
    %716 = vmatpush2.msra.mxu0 0.0
    %717 = vmatprep.subr.mxu0 0.0
    %718 = vmatpush2.msra.mxu0 0.0
    %719 = vmatprep.subr.mxu0 0.0
    %720 = vmatpush2.msra.mxu0 0.0
    %721 = vmatprep.subr.mxu0 0.0
    %722 = vmatpush2.msra.mxu0 0.0
    %723 = vmatprep.subr.mxu0 0.0
    %724 = vmatpush2.msra.mxu0 0.0
    %725 = vmatprep.subr.mxu0 0.0
    %726 = vmatpush2.msra.mxu0 0.0
    %727 = vmatprep.subr.mxu0 0.0
    %728 = vmatpush2.msra.mxu0 0.0
    %729 = vmatprep.subr.mxu0 0.0
    %730 = vmatpush2.msra.mxu0 0.0
    %731 = vmatprep.subr.mxu0 0.0
    %732 = vmatpush2.msra.mxu0 0.0
    %733 = vmatprep.subr.mxu0 0.0
    %734 = vmatpush2.msra.mxu0 0.0
    %735 = vmatprep.subr.mxu0 0.0
    %736 = vmatpush2.msra.mxu0 0.0
    %737 = vmatprep.subr.mxu0 0.0
    %738 = vmatpush2.msra.mxu0 0.0
    %739 = vmatprep.subr.mxu0 0.0
    %740 = vmatpush2.msra.mxu0 0.0
    %741 = vmatprep.subr.mxu0 0.0
    %742 = vmatpush2.msra.mxu0 0.0
    %743 = vmatprep.subr.mxu0 0.0
    %744 = vmatpush2.msra.mxu0 0.0
    %745 = vmatprep.mubr.f32.mxu0 0.0
    %v746 = vand.u32 %v511, 4294901760
    %v747 = vsub.f32 %v511, %v746
    %748 = vmatmul.mubr.f32.gmra.mxu0 %v747
    %v749 = vpop.f32.mrf.mxu0
    %v750 = vadd.f32 %v673, %v749
    %v751 = vpop.f32.mrf.mxu0
    %v752 = vadd.f32 %v675, %v751
    %753 = vdwg.mxu0
    %754 = vmatprep.subr.mxu0 0.0
    %755 = vmatpush1.msra.mxu0 0.0
    %756 = vmatprep.subr.mxu0 0.0
    %757 = vmatpush1.msra.mxu0 0.0
    %758 = vmatprep.subr.mxu0 0.0
    %759 = vmatpush1.msra.mxu0 0.0
    %760 = vmatprep.subr.mxu0 0.0
    %761 = vmatpush1.msra.mxu0 0.0
    %762 = vmatprep.subr.mxu0 0.0
    %763 = vmatpush1.msra.mxu0 0.0
    %764 = vmatprep.subr.mxu0 0.0
    %765 = vmatpush1.msra.mxu0 0.0
    %766 = vmatprep.subr.mxu0 0.0
    %767 = vmatpush1.msra.mxu0 0.0
    %768 = vmatprep.subr.mxu0 0.0
    %769 = vmatpush1.msra.mxu0 0.0
    %770 = vmatprep.subr.mxu0 0.0
    %771 = vmatpush1.msra.mxu0 0.0
    %772 = vmatprep.subr.mxu0 0.0
    %773 = vmatpush1.msra.mxu0 0.0
    %774 = vmatprep.subr.mxu0 0.0
    %775 = vmatpush1.msra.mxu0 0.0
    %776 = vmatprep.subr.mxu0 0.0
    %777 = vmatpush1.msra.mxu0 0.0
    %778 = vmatprep.subr.mxu0 0.0
    %779 = vmatpush1.msra.mxu0 0.0
    %780 = vmatprep.subr.mxu0 0.0
    %781 = vmatpush1.msra.mxu0 0.0
    %782 = vmatprep.subr.mxu0 0.0
    %783 = vmatpush1.msra.mxu0 0.0
    %v784 = vand.u32 %v515, 4294901760
    %785 = vmatprep.subr.mxu0 %v784
    %v786 = vand.u32 %v513, 4294901760
    %787 = vmatpush1.msra.mxu0 %v786
    %788 = vmatprep.subr.mxu0 0.0
    %789 = vmatpush2.msra.mxu0 0.0
    %790 = vmatprep.subr.mxu0 0.0
    %791 = vmatpush2.msra.mxu0 0.0
    %792 = vmatprep.subr.mxu0 0.0
    %793 = vmatpush2.msra.mxu0 0.0
    %794 = vmatprep.subr.mxu0 0.0
    %795 = vmatpush2.msra.mxu0 0.0
    %796 = vmatprep.subr.mxu0 0.0
    %797 = vmatpush2.msra.mxu0 0.0
    %798 = vmatprep.subr.mxu0 0.0
    %799 = vmatpush2.msra.mxu0 0.0
    %800 = vmatprep.subr.mxu0 0.0
    %801 = vmatpush2.msra.mxu0 0.0
    %802 = vmatprep.subr.mxu0 0.0
    %803 = vmatpush2.msra.mxu0 0.0
    %804 = vmatprep.subr.mxu0 0.0
    %805 = vmatpush2.msra.mxu0 0.0
    %806 = vmatprep.subr.mxu0 0.0
    %807 = vmatpush2.msra.mxu0 0.0
    %808 = vmatprep.subr.mxu0 0.0
    %809 = vmatpush2.msra.mxu0 0.0
    %810 = vmatprep.subr.mxu0 0.0
    %811 = vmatpush2.msra.mxu0 0.0
    %812 = vmatprep.subr.mxu0 0.0
    %813 = vmatpush2.msra.mxu0 0.0
    %814 = vmatprep.subr.mxu0 0.0
    %815 = vmatpush2.msra.mxu0 0.0
    %816 = vmatprep.subr.mxu0 0.0
    %817 = vmatpush2.msra.mxu0 0.0
    %818 = vmatprep.subr.mxu0 0.0
    %819 = vmatpush2.msra.mxu0 0.0
    %820 = vmatprep.mubr.f32.mxu0 0.0
    %v821 = vand.u32 %v511, 4294901760
    %v822 = vsub.f32 %v511, %v821
    %v823 = vand.u32 %v822, 4294901760
    %824 = vmatmul.mubr.f32.gmra.mxu0 %v823
    %v825 = vpop.f32.mrf.mxu0
    %v826 = vadd.f32 %v750, %v825
    %v827 = vpop.f32.mrf.mxu0
    %v828 = vadd.f32 %v752, %v827
    %829 = vdwg.mxu0
    %830 = vmatprep.subr.mxu0 0.0
    %831 = vmatpush1.msra.mxu0 0.0
    %832 = vmatprep.subr.mxu0 0.0
    %833 = vmatpush1.msra.mxu0 0.0
    %834 = vmatprep.subr.mxu0 0.0
    %835 = vmatpush1.msra.mxu0 0.0
    %836 = vmatprep.subr.mxu0 0.0
    %837 = vmatpush1.msra.mxu0 0.0
    %838 = vmatprep.subr.mxu0 0.0
    %839 = vmatpush1.msra.mxu0 0.0
    %840 = vmatprep.subr.mxu0 0.0
    %841 = vmatpush1.msra.mxu0 0.0
    %842 = vmatprep.subr.mxu0 0.0
    %843 = vmatpush1.msra.mxu0 0.0
    %844 = vmatprep.subr.mxu0 0.0
    %845 = vmatpush1.msra.mxu0 0.0
    %846 = vmatprep.subr.mxu0 0.0
    %847 = vmatpush1.msra.mxu0 0.0
    %848 = vmatprep.subr.mxu0 0.0
    %849 = vmatpush1.msra.mxu0 0.0
    %850 = vmatprep.subr.mxu0 0.0
    %851 = vmatpush1.msra.mxu0 0.0
    %852 = vmatprep.subr.mxu0 0.0
    %853 = vmatpush1.msra.mxu0 0.0
    %854 = vmatprep.subr.mxu0 0.0
    %855 = vmatpush1.msra.mxu0 0.0
    %856 = vmatprep.subr.mxu0 0.0
    %857 = vmatpush1.msra.mxu0 0.0
    %858 = vmatprep.subr.mxu0 0.0
    %859 = vmatpush1.msra.mxu0 0.0
    %v860 = vand.u32 %v515, 4294901760
    %v861 = vsub.f32 %v515, %v860
    %v862 = vand.u32 %v861, 4294901760
    %863 = vmatprep.subr.mxu0 %v862
    %v864 = vand.u32 %v513, 4294901760
    %v865 = vsub.f32 %v513, %v864
    %v866 = vand.u32 %v865, 4294901760
    %867 = vmatpush1.msra.mxu0 %v866
    %868 = vmatprep.subr.mxu0 0.0
    %869 = vmatpush2.msra.mxu0 0.0
    %870 = vmatprep.subr.mxu0 0.0
    %871 = vmatpush2.msra.mxu0 0.0
    %872 = vmatprep.subr.mxu0 0.0
    %873 = vmatpush2.msra.mxu0 0.0
    %874 = vmatprep.subr.mxu0 0.0
    %875 = vmatpush2.msra.mxu0 0.0
    %876 = vmatprep.subr.mxu0 0.0
    %877 = vmatpush2.msra.mxu0 0.0
    %878 = vmatprep.subr.mxu0 0.0
    %879 = vmatpush2.msra.mxu0 0.0
    %880 = vmatprep.subr.mxu0 0.0
    %881 = vmatpush2.msra.mxu0 0.0
    %882 = vmatprep.subr.mxu0 0.0
    %883 = vmatpush2.msra.mxu0 0.0
    %884 = vmatprep.subr.mxu0 0.0
    %885 = vmatpush2.msra.mxu0 0.0
    %886 = vmatprep.subr.mxu0 0.0
    %887 = vmatpush2.msra.mxu0 0.0
    %888 = vmatprep.subr.mxu0 0.0
    %889 = vmatpush2.msra.mxu0 0.0
    %890 = vmatprep.subr.mxu0 0.0
    %891 = vmatpush2.msra.mxu0 0.0
    %892 = vmatprep.subr.mxu0 0.0
    %893 = vmatpush2.msra.mxu0 0.0
    %894 = vmatprep.subr.mxu0 0.0
    %895 = vmatpush2.msra.mxu0 0.0
    %896 = vmatprep.subr.mxu0 0.0
    %897 = vmatpush2.msra.mxu0 0.0
    %898 = vmatprep.subr.mxu0 0.0
    %899 = vmatpush2.msra.mxu0 0.0
    %900 = vmatprep.mubr.f32.mxu0 0.0
    %v901 = vand.u32 %v511, 4294901760
    %902 = vmatmul.mubr.f32.gmra.mxu0 %v901
    %v903 = vpop.f32.mrf.mxu0
    %v904 = vadd.f32 %v826, %v903
    %v905 = vpop.f32.mrf.mxu0
    %v906 = vadd.f32 %v828, %v905
    %907 = vdwg.mxu0
    %908 = vmatprep.subr.mxu0 0.0
    %909 = vmatpush1.msra.mxu0 0.0
    %910 = vmatprep.subr.mxu0 0.0
    %911 = vmatpush1.msra.mxu0 0.0
    %912 = vmatprep.subr.mxu0 0.0
    %913 = vmatpush1.msra.mxu0 0.0
    %914 = vmatprep.subr.mxu0 0.0
    %915 = vmatpush1.msra.mxu0 0.0
    %916 = vmatprep.subr.mxu0 0.0
    %917 = vmatpush1.msra.mxu0 0.0
    %918 = vmatprep.subr.mxu0 0.0
    %919 = vmatpush1.msra.mxu0 0.0
    %920 = vmatprep.subr.mxu0 0.0
    %921 = vmatpush1.msra.mxu0 0.0
    %922 = vmatprep.subr.mxu0 0.0
    %923 = vmatpush1.msra.mxu0 0.0
    %924 = vmatprep.subr.mxu0 0.0
    %925 = vmatpush1.msra.mxu0 0.0
    %926 = vmatprep.subr.mxu0 0.0
    %927 = vmatpush1.msra.mxu0 0.0
    %928 = vmatprep.subr.mxu0 0.0
    %929 = vmatpush1.msra.mxu0 0.0
    %930 = vmatprep.subr.mxu0 0.0
    %931 = vmatpush1.msra.mxu0 0.0
    %932 = vmatprep.subr.mxu0 0.0
    %933 = vmatpush1.msra.mxu0 0.0
    %934 = vmatprep.subr.mxu0 0.0
    %935 = vmatpush1.msra.mxu0 0.0
    %936 = vmatprep.subr.mxu0 0.0
    %937 = vmatpush1.msra.mxu0 0.0
    %v938 = vand.u32 %v515, 4294901760
    %939 = vmatprep.subr.mxu0 %v938
    %v940 = vand.u32 %v513, 4294901760
    %941 = vmatpush1.msra.mxu0 %v940
    %942 = vmatprep.subr.mxu0 0.0
    %943 = vmatpush2.msra.mxu0 0.0
    %944 = vmatprep.subr.mxu0 0.0
    %945 = vmatpush2.msra.mxu0 0.0
    %946 = vmatprep.subr.mxu0 0.0
    %947 = vmatpush2.msra.mxu0 0.0
    %948 = vmatprep.subr.mxu0 0.0
    %949 = vmatpush2.msra.mxu0 0.0
    %950 = vmatprep.subr.mxu0 0.0
    %951 = vmatpush2.msra.mxu0 0.0
    %952 = vmatprep.subr.mxu0 0.0
    %953 = vmatpush2.msra.mxu0 0.0
    %954 = vmatprep.subr.mxu0 0.0
    %955 = vmatpush2.msra.mxu0 0.0
    %956 = vmatprep.subr.mxu0 0.0
    %957 = vmatpush2.msra.mxu0 0.0
    %958 = vmatprep.subr.mxu0 0.0
    %959 = vmatpush2.msra.mxu0 0.0
    %960 = vmatprep.subr.mxu0 0.0
    %961 = vmatpush2.msra.mxu0 0.0
    %962 = vmatprep.subr.mxu0 0.0
    %963 = vmatpush2.msra.mxu0 0.0
    %964 = vmatprep.subr.mxu0 0.0
    %965 = vmatpush2.msra.mxu0 0.0
    %966 = vmatprep.subr.mxu0 0.0
    %967 = vmatpush2.msra.mxu0 0.0
    %968 = vmatprep.subr.mxu0 0.0
    %969 = vmatpush2.msra.mxu0 0.0
    %970 = vmatprep.subr.mxu0 0.0
    %971 = vmatpush2.msra.mxu0 0.0
    %972 = vmatprep.subr.mxu0 0.0
    %973 = vmatpush2.msra.mxu0 0.0
    %974 = vmatprep.mubr.f32.mxu0 0.0
    %v975 = vand.u32 %v511, 4294901760
    %976 = vmatmul.mubr.f32.gmra.mxu0 %v975
    %v977 = vpop.f32.mrf.mxu0
    %v978 = vadd.f32 %v904, %v977
    %v979 = vpop.f32.mrf.mxu0
    %v980 = vadd.f32 %v906, %v979
    %981 = vdwg.mxu0
    %s982 = scalar_lea.vmem %s1, 16
    %v983 = vld [vmem:[%s982] sm:$0xff]
    %984 = vrot.lane.b32.xlu0 %v24, 124
    %v985 = vpop.permute.xlu0 %984
    %986 = vrot.lane.b32.xlu0 %v29, 124
    %v987 = vpop.permute.xlu0 %986
    %vm988 = vcmask 1014784
    %v989 = vsel %vm988, %v985, %v987
    %v991 = vsel %vm36, %v983, 0
    %v993 = vsel %vm40, %v989, 0
    %v995 = vsel %vm40, %v987, 0
    %997 = vmatprep.subr.mxu0 0.0
    %998 = vmatpush1.msra.mxu0 0.0
    %999 = vmatprep.subr.mxu0 0.0
    %1000 = vmatpush1.msra.mxu0 0.0
    %1001 = vmatprep.subr.mxu0 0.0
    %1002 = vmatpush1.msra.mxu0 0.0
    %1003 = vmatprep.subr.mxu0 0.0
    %1004 = vmatpush1.msra.mxu0 0.0
    %1005 = vmatprep.subr.mxu0 0.0
    %1006 = vmatpush1.msra.mxu0 0.0
    %1007 = vmatprep.subr.mxu0 0.0
    %1008 = vmatpush1.msra.mxu0 0.0
    %1009 = vmatprep.subr.mxu0 0.0
    %1010 = vmatpush1.msra.mxu0 0.0
    %1011 = vmatprep.subr.mxu0 0.0
    %1012 = vmatpush1.msra.mxu0 0.0
    %1013 = vmatprep.subr.mxu0 0.0
    %1014 = vmatpush1.msra.mxu0 0.0
    %1015 = vmatprep.subr.mxu0 0.0
    %1016 = vmatpush1.msra.mxu0 0.0
    %1017 = vmatprep.subr.mxu0 0.0
    %1018 = vmatpush1.msra.mxu0 0.0
    %1019 = vmatprep.subr.mxu0 0.0
    %1020 = vmatpush1.msra.mxu0 0.0
    %1021 = vmatprep.subr.mxu0 0.0
    %1022 = vmatpush1.msra.mxu0 0.0
    %1023 = vmatprep.subr.mxu0 0.0
    %1024 = vmatpush1.msra.mxu0 0.0
    %1025 = vmatprep.subr.mxu0 0.0
    %1026 = vmatpush1.msra.mxu0 0.0
    %v1027 = vand.u32 %v995, 4294901760
    %1028 = vmatprep.subr.mxu0 %v1027
    %v1029 = vand.u32 %v993, 4294901760
    %1030 = vmatpush1.msra.mxu0 %v1029
    %1031 = vmatprep.subr.mxu0 0.0
    %1032 = vmatpush2.msra.mxu0 0.0
    %1033 = vmatprep.subr.mxu0 0.0
    %1034 = vmatpush2.msra.mxu0 0.0
    %1035 = vmatprep.subr.mxu0 0.0
    %1036 = vmatpush2.msra.mxu0 0.0
    %1037 = vmatprep.subr.mxu0 0.0
    %1038 = vmatpush2.msra.mxu0 0.0
    %1039 = vmatprep.subr.mxu0 0.0
    %1040 = vmatpush2.msra.mxu0 0.0
    %1041 = vmatprep.subr.mxu0 0.0
    %1042 = vmatpush2.msra.mxu0 0.0
    %1043 = vmatprep.subr.mxu0 0.0
    %1044 = vmatpush2.msra.mxu0 0.0
    %1045 = vmatprep.subr.mxu0 0.0
    %1046 = vmatpush2.msra.mxu0 0.0
    %1047 = vmatprep.subr.mxu0 0.0
    %1048 = vmatpush2.msra.mxu0 0.0
    %1049 = vmatprep.subr.mxu0 0.0
    %1050 = vmatpush2.msra.mxu0 0.0
    %1051 = vmatprep.subr.mxu0 0.0
    %1052 = vmatpush2.msra.mxu0 0.0
    %1053 = vmatprep.subr.mxu0 0.0
    %1054 = vmatpush2.msra.mxu0 0.0
    %1055 = vmatprep.subr.mxu0 0.0
    %1056 = vmatpush2.msra.mxu0 0.0
    %1057 = vmatprep.subr.mxu0 0.0
    %1058 = vmatpush2.msra.mxu0 0.0
    %1059 = vmatprep.subr.mxu0 0.0
    %1060 = vmatpush2.msra.mxu0 0.0
    %1061 = vmatprep.subr.mxu0 0.0
    %1062 = vmatpush2.msra.mxu0 0.0
    %1063 = vmatprep.mubr.f32.mxu0 0.0
    %v1064 = vand.u32 %v991, 4294901760
    %v1065 = vsub.f32 %v991, %v1064
    %v1066 = vand.u32 %v1065, 4294901760
    %v1067 = vsub.f32 %v1065, %v1066
    %v1068 = vand.u32 %v1067, 4294901760
    %1069 = vmatmul.mubr.f32.gmra.mxu0 %v1068
    %v1070 = vpop.f32.mrf.mxu0
    %v1071 = vadd.f32 0.0, %v1070
    %v1072 = vpop.f32.mrf.mxu0
    %v1073 = vadd.f32 0.0, %v1072
    %1074 = vdwg.mxu0
    %1075 = vmatprep.subr.mxu0 0.0
    %1076 = vmatpush1.msra.mxu0 0.0
    %1077 = vmatprep.subr.mxu0 0.0
    %1078 = vmatpush1.msra.mxu0 0.0
    %1079 = vmatprep.subr.mxu0 0.0
    %1080 = vmatpush1.msra.mxu0 0.0
    %1081 = vmatprep.subr.mxu0 0.0
    %1082 = vmatpush1.msra.mxu0 0.0
    %1083 = vmatprep.subr.mxu0 0.0
    %1084 = vmatpush1.msra.mxu0 0.0
    %1085 = vmatprep.subr.mxu0 0.0
    %1086 = vmatpush1.msra.mxu0 0.0
    %1087 = vmatprep.subr.mxu0 0.0
    %1088 = vmatpush1.msra.mxu0 0.0
    %1089 = vmatprep.subr.mxu0 0.0
    %1090 = vmatpush1.msra.mxu0 0.0
    %1091 = vmatprep.subr.mxu0 0.0
    %1092 = vmatpush1.msra.mxu0 0.0
    %1093 = vmatprep.subr.mxu0 0.0
    %1094 = vmatpush1.msra.mxu0 0.0
    %1095 = vmatprep.subr.mxu0 0.0
    %1096 = vmatpush1.msra.mxu0 0.0
    %1097 = vmatprep.subr.mxu0 0.0
    %1098 = vmatpush1.msra.mxu0 0.0
    %1099 = vmatprep.subr.mxu0 0.0
    %1100 = vmatpush1.msra.mxu0 0.0
    %1101 = vmatprep.subr.mxu0 0.0
    %1102 = vmatpush1.msra.mxu0 0.0
    %1103 = vmatprep.subr.mxu0 0.0
    %1104 = vmatpush1.msra.mxu0 0.0
    %v1105 = vand.u32 %v995, 4294901760
    %v1106 = vsub.f32 %v995, %v1105
    %v1107 = vand.u32 %v1106, 4294901760
    %v1108 = vsub.f32 %v1106, %v1107
    %v1109 = vand.u32 %v1108, 4294901760
    %1110 = vmatprep.subr.mxu0 %v1109
    %v1111 = vand.u32 %v993, 4294901760
    %v1112 = vsub.f32 %v993, %v1111
    %v1113 = vand.u32 %v1112, 4294901760
    %v1114 = vsub.f32 %v1112, %v1113
    %v1115 = vand.u32 %v1114, 4294901760
    %1116 = vmatpush1.msra.mxu0 %v1115
    %1117 = vmatprep.subr.mxu0 0.0
    %1118 = vmatpush2.msra.mxu0 0.0
    %1119 = vmatprep.subr.mxu0 0.0
    %1120 = vmatpush2.msra.mxu0 0.0
    %1121 = vmatprep.subr.mxu0 0.0
    %1122 = vmatpush2.msra.mxu0 0.0
    %1123 = vmatprep.subr.mxu0 0.0
    %1124 = vmatpush2.msra.mxu0 0.0
    %1125 = vmatprep.subr.mxu0 0.0
    %1126 = vmatpush2.msra.mxu0 0.0
    %1127 = vmatprep.subr.mxu0 0.0
    %1128 = vmatpush2.msra.mxu0 0.0
    %1129 = vmatprep.subr.mxu0 0.0
    %1130 = vmatpush2.msra.mxu0 0.0
    %1131 = vmatprep.subr.mxu0 0.0
    %1132 = vmatpush2.msra.mxu0 0.0
    %1133 = vmatprep.subr.mxu0 0.0
    %1134 = vmatpush2.msra.mxu0 0.0
    %1135 = vmatprep.subr.mxu0 0.0
    %1136 = vmatpush2.msra.mxu0 0.0
    %1137 = vmatprep.subr.mxu0 0.0
    %1138 = vmatpush2.msra.mxu0 0.0
    %1139 = vmatprep.subr.mxu0 0.0
    %1140 = vmatpush2.msra.mxu0 0.0
    %1141 = vmatprep.subr.mxu0 0.0
    %1142 = vmatpush2.msra.mxu0 0.0
    %1143 = vmatprep.subr.mxu0 0.0
    %1144 = vmatpush2.msra.mxu0 0.0
    %1145 = vmatprep.subr.mxu0 0.0
    %1146 = vmatpush2.msra.mxu0 0.0
    %1147 = vmatprep.subr.mxu0 0.0
    %1148 = vmatpush2.msra.mxu0 0.0
    %1149 = vmatprep.mubr.f32.mxu0 0.0
    %v1150 = vand.u32 %v991, 4294901760
    %1151 = vmatmul.mubr.f32.gmra.mxu0 %v1150
    %v1152 = vpop.f32.mrf.mxu0
    %v1153 = vadd.f32 %v1071, %v1152
    %v1154 = vpop.f32.mrf.mxu0
    %v1155 = vadd.f32 %v1073, %v1154
    %1156 = vdwg.mxu0
    %1157 = vmatprep.subr.mxu0 0.0
    %1158 = vmatpush1.msra.mxu0 0.0
    %1159 = vmatprep.subr.mxu0 0.0
    %1160 = vmatpush1.msra.mxu0 0.0
    %1161 = vmatprep.subr.mxu0 0.0
    %1162 = vmatpush1.msra.mxu0 0.0
    %1163 = vmatprep.subr.mxu0 0.0
    %1164 = vmatpush1.msra.mxu0 0.0
    %1165 = vmatprep.subr.mxu0 0.0
    %1166 = vmatpush1.msra.mxu0 0.0
    %1167 = vmatprep.subr.mxu0 0.0
    %1168 = vmatpush1.msra.mxu0 0.0
    %1169 = vmatprep.subr.mxu0 0.0
    %1170 = vmatpush1.msra.mxu0 0.0
    %1171 = vmatprep.subr.mxu0 0.0
    %1172 = vmatpush1.msra.mxu0 0.0
    %1173 = vmatprep.subr.mxu0 0.0
    %1174 = vmatpush1.msra.mxu0 0.0
    %1175 = vmatprep.subr.mxu0 0.0
    %1176 = vmatpush1.msra.mxu0 0.0
    %1177 = vmatprep.subr.mxu0 0.0
    %1178 = vmatpush1.msra.mxu0 0.0
    %1179 = vmatprep.subr.mxu0 0.0
    %1180 = vmatpush1.msra.mxu0 0.0
    %1181 = vmatprep.subr.mxu0 0.0
    %1182 = vmatpush1.msra.mxu0 0.0
    %1183 = vmatprep.subr.mxu0 0.0
    %1184 = vmatpush1.msra.mxu0 0.0
    %1185 = vmatprep.subr.mxu0 0.0
    %1186 = vmatpush1.msra.mxu0 0.0
    %v1187 = vand.u32 %v995, 4294901760
    %v1188 = vsub.f32 %v995, %v1187
    %1189 = vmatprep.subr.mxu0 %v1188
    %v1190 = vand.u32 %v993, 4294901760
    %v1191 = vsub.f32 %v993, %v1190
    %1192 = vmatpush1.msra.mxu0 %v1191
    %1193 = vmatprep.subr.mxu0 0.0
    %1194 = vmatpush2.msra.mxu0 0.0
    %1195 = vmatprep.subr.mxu0 0.0
    %1196 = vmatpush2.msra.mxu0 0.0
    %1197 = vmatprep.subr.mxu0 0.0
    %1198 = vmatpush2.msra.mxu0 0.0
    %1199 = vmatprep.subr.mxu0 0.0
    %1200 = vmatpush2.msra.mxu0 0.0
    %1201 = vmatprep.subr.mxu0 0.0
    %1202 = vmatpush2.msra.mxu0 0.0
    %1203 = vmatprep.subr.mxu0 0.0
    %1204 = vmatpush2.msra.mxu0 0.0
    %1205 = vmatprep.subr.mxu0 0.0
    %1206 = vmatpush2.msra.mxu0 0.0
    %1207 = vmatprep.subr.mxu0 0.0
    %1208 = vmatpush2.msra.mxu0 0.0
    %1209 = vmatprep.subr.mxu0 0.0
    %1210 = vmatpush2.msra.mxu0 0.0
    %1211 = vmatprep.subr.mxu0 0.0
    %1212 = vmatpush2.msra.mxu0 0.0
    %1213 = vmatprep.subr.mxu0 0.0
    %1214 = vmatpush2.msra.mxu0 0.0
    %1215 = vmatprep.subr.mxu0 0.0
    %1216 = vmatpush2.msra.mxu0 0.0
    %1217 = vmatprep.subr.mxu0 0.0
    %1218 = vmatpush2.msra.mxu0 0.0
    %1219 = vmatprep.subr.mxu0 0.0
    %1220 = vmatpush2.msra.mxu0 0.0
    %1221 = vmatprep.subr.mxu0 0.0
    %1222 = vmatpush2.msra.mxu0 0.0
    %1223 = vmatprep.subr.mxu0 0.0
    %1224 = vmatpush2.msra.mxu0 0.0
    %1225 = vmatprep.mubr.f32.mxu0 0.0
    %v1226 = vand.u32 %v991, 4294901760
    %v1227 = vsub.f32 %v991, %v1226
    %1228 = vmatmul.mubr.f32.gmra.mxu0 %v1227
    %v1229 = vpop.f32.mrf.mxu0
    %v1230 = vadd.f32 %v1153, %v1229
    %v1231 = vpop.f32.mrf.mxu0
    %v1232 = vadd.f32 %v1155, %v1231
    %1233 = vdwg.mxu0
    %1234 = vmatprep.subr.mxu0 0.0
    %1235 = vmatpush1.msra.mxu0 0.0
    %1236 = vmatprep.subr.mxu0 0.0
    %1237 = vmatpush1.msra.mxu0 0.0
    %1238 = vmatprep.subr.mxu0 0.0
    %1239 = vmatpush1.msra.mxu0 0.0
    %1240 = vmatprep.subr.mxu0 0.0
    %1241 = vmatpush1.msra.mxu0 0.0
    %1242 = vmatprep.subr.mxu0 0.0
    %1243 = vmatpush1.msra.mxu0 0.0
    %1244 = vmatprep.subr.mxu0 0.0
    %1245 = vmatpush1.msra.mxu0 0.0
    %1246 = vmatprep.subr.mxu0 0.0
    %1247 = vmatpush1.msra.mxu0 0.0
    %1248 = vmatprep.subr.mxu0 0.0
    %1249 = vmatpush1.msra.mxu0 0.0
    %1250 = vmatprep.subr.mxu0 0.0
    %1251 = vmatpush1.msra.mxu0 0.0
    %1252 = vmatprep.subr.mxu0 0.0
    %1253 = vmatpush1.msra.mxu0 0.0
    %1254 = vmatprep.subr.mxu0 0.0
    %1255 = vmatpush1.msra.mxu0 0.0
    %1256 = vmatprep.subr.mxu0 0.0
    %1257 = vmatpush1.msra.mxu0 0.0
    %1258 = vmatprep.subr.mxu0 0.0
    %1259 = vmatpush1.msra.mxu0 0.0
    %1260 = vmatprep.subr.mxu0 0.0
    %1261 = vmatpush1.msra.mxu0 0.0
    %1262 = vmatprep.subr.mxu0 0.0
    %1263 = vmatpush1.msra.mxu0 0.0
    %v1264 = vand.u32 %v995, 4294901760
    %1265 = vmatprep.subr.mxu0 %v1264
    %v1266 = vand.u32 %v993, 4294901760
    %1267 = vmatpush1.msra.mxu0 %v1266
    %1268 = vmatprep.subr.mxu0 0.0
    %1269 = vmatpush2.msra.mxu0 0.0
    %1270 = vmatprep.subr.mxu0 0.0
    %1271 = vmatpush2.msra.mxu0 0.0
    %1272 = vmatprep.subr.mxu0 0.0
    %1273 = vmatpush2.msra.mxu0 0.0
    %1274 = vmatprep.subr.mxu0 0.0
    %1275 = vmatpush2.msra.mxu0 0.0
    %1276 = vmatprep.subr.mxu0 0.0
    %1277 = vmatpush2.msra.mxu0 0.0
    %1278 = vmatprep.subr.mxu0 0.0
    %1279 = vmatpush2.msra.mxu0 0.0
    %1280 = vmatprep.subr.mxu0 0.0
    %1281 = vmatpush2.msra.mxu0 0.0
    %1282 = vmatprep.subr.mxu0 0.0
    %1283 = vmatpush2.msra.mxu0 0.0
    %1284 = vmatprep.subr.mxu0 0.0
    %1285 = vmatpush2.msra.mxu0 0.0
    %1286 = vmatprep.subr.mxu0 0.0
    %1287 = vmatpush2.msra.mxu0 0.0
    %1288 = vmatprep.subr.mxu0 0.0
    %1289 = vmatpush2.msra.mxu0 0.0
    %1290 = vmatprep.subr.mxu0 0.0
    %1291 = vmatpush2.msra.mxu0 0.0
    %1292 = vmatprep.subr.mxu0 0.0
    %1293 = vmatpush2.msra.mxu0 0.0
    %1294 = vmatprep.subr.mxu0 0.0
    %1295 = vmatpush2.msra.mxu0 0.0
    %1296 = vmatprep.subr.mxu0 0.0
    %1297 = vmatpush2.msra.mxu0 0.0
    %1298 = vmatprep.subr.mxu0 0.0
    %1299 = vmatpush2.msra.mxu0 0.0
    %1300 = vmatprep.mubr.f32.mxu0 0.0
    %v1301 = vand.u32 %v991, 4294901760
    %v1302 = vsub.f32 %v991, %v1301
    %v1303 = vand.u32 %v1302, 4294901760
    %1304 = vmatmul.mubr.f32.gmra.mxu0 %v1303
    %v1305 = vpop.f32.mrf.mxu0
    %v1306 = vadd.f32 %v1230, %v1305
    %v1307 = vpop.f32.mrf.mxu0
    %v1308 = vadd.f32 %v1232, %v1307
    %1309 = vdwg.mxu0
    %1310 = vmatprep.subr.mxu0 0.0
    %1311 = vmatpush1.msra.mxu0 0.0
    %1312 = vmatprep.subr.mxu0 0.0
    %1313 = vmatpush1.msra.mxu0 0.0
    %1314 = vmatprep.subr.mxu0 0.0
    %1315 = vmatpush1.msra.mxu0 0.0
    %1316 = vmatprep.subr.mxu0 0.0
    %1317 = vmatpush1.msra.mxu0 0.0
    %1318 = vmatprep.subr.mxu0 0.0
    %1319 = vmatpush1.msra.mxu0 0.0
    %1320 = vmatprep.subr.mxu0 0.0
    %1321 = vmatpush1.msra.mxu0 0.0
    %1322 = vmatprep.subr.mxu0 0.0
    %1323 = vmatpush1.msra.mxu0 0.0
    %1324 = vmatprep.subr.mxu0 0.0
    %1325 = vmatpush1.msra.mxu0 0.0
    %1326 = vmatprep.subr.mxu0 0.0
    %1327 = vmatpush1.msra.mxu0 0.0
    %1328 = vmatprep.subr.mxu0 0.0
    %1329 = vmatpush1.msra.mxu0 0.0
    %1330 = vmatprep.subr.mxu0 0.0
    %1331 = vmatpush1.msra.mxu0 0.0
    %1332 = vmatprep.subr.mxu0 0.0
    %1333 = vmatpush1.msra.mxu0 0.0
    %1334 = vmatprep.subr.mxu0 0.0
    %1335 = vmatpush1.msra.mxu0 0.0
    %1336 = vmatprep.subr.mxu0 0.0
    %1337 = vmatpush1.msra.mxu0 0.0
    %1338 = vmatprep.subr.mxu0 0.0
    %1339 = vmatpush1.msra.mxu0 0.0
    %v1340 = vand.u32 %v995, 4294901760
    %v1341 = vsub.f32 %v995, %v1340
    %v1342 = vand.u32 %v1341, 4294901760
    %1343 = vmatprep.subr.mxu0 %v1342
    %v1344 = vand.u32 %v993, 4294901760
    %v1345 = vsub.f32 %v993, %v1344
    %v1346 = vand.u32 %v1345, 4294901760
    %1347 = vmatpush1.msra.mxu0 %v1346
    %1348 = vmatprep.subr.mxu0 0.0
    %1349 = vmatpush2.msra.mxu0 0.0
    %1350 = vmatprep.subr.mxu0 0.0
    %1351 = vmatpush2.msra.mxu0 0.0
    %1352 = vmatprep.subr.mxu0 0.0
    %1353 = vmatpush2.msra.mxu0 0.0
    %1354 = vmatprep.subr.mxu0 0.0
    %1355 = vmatpush2.msra.mxu0 0.0
    %1356 = vmatprep.subr.mxu0 0.0
    %1357 = vmatpush2.msra.mxu0 0.0
    %1358 = vmatprep.subr.mxu0 0.0
    %1359 = vmatpush2.msra.mxu0 0.0
    %1360 = vmatprep.subr.mxu0 0.0
    %1361 = vmatpush2.msra.mxu0 0.0
    %1362 = vmatprep.subr.mxu0 0.0
    %1363 = vmatpush2.msra.mxu0 0.0
    %1364 = vmatprep.subr.mxu0 0.0
    %1365 = vmatpush2.msra.mxu0 0.0
    %1366 = vmatprep.subr.mxu0 0.0
    %1367 = vmatpush2.msra.mxu0 0.0
    %1368 = vmatprep.subr.mxu0 0.0
    %1369 = vmatpush2.msra.mxu0 0.0
    %1370 = vmatprep.subr.mxu0 0.0
    %1371 = vmatpush2.msra.mxu0 0.0
    %1372 = vmatprep.subr.mxu0 0.0
    %1373 = vmatpush2.msra.mxu0 0.0
    %1374 = vmatprep.subr.mxu0 0.0
    %1375 = vmatpush2.msra.mxu0 0.0
    %1376 = vmatprep.subr.mxu0 0.0
    %1377 = vmatpush2.msra.mxu0 0.0
    %1378 = vmatprep.subr.mxu0 0.0
    %1379 = vmatpush2.msra.mxu0 0.0
    %1380 = vmatprep.mubr.f32.mxu0 0.0
    %v1381 = vand.u32 %v991, 4294901760
    %1382 = vmatmul.mubr.f32.gmra.mxu0 %v1381
    %v1383 = vpop.f32.mrf.mxu0
    %v1384 = vadd.f32 %v1306, %v1383
    %v1385 = vpop.f32.mrf.mxu0
    %v1386 = vadd.f32 %v1308, %v1385
    %1387 = vdwg.mxu0
    %1388 = vmatprep.subr.mxu0 0.0
    %1389 = vmatpush1.msra.mxu0 0.0
    %1390 = vmatprep.subr.mxu0 0.0
    %1391 = vmatpush1.msra.mxu0 0.0
    %1392 = vmatprep.subr.mxu0 0.0
    %1393 = vmatpush1.msra.mxu0 0.0
    %1394 = vmatprep.subr.mxu0 0.0
    %1395 = vmatpush1.msra.mxu0 0.0
    %1396 = vmatprep.subr.mxu0 0.0
    %1397 = vmatpush1.msra.mxu0 0.0
    %1398 = vmatprep.subr.mxu0 0.0
    %1399 = vmatpush1.msra.mxu0 0.0
    %1400 = vmatprep.subr.mxu0 0.0
    %1401 = vmatpush1.msra.mxu0 0.0
    %1402 = vmatprep.subr.mxu0 0.0
    %1403 = vmatpush1.msra.mxu0 0.0
    %1404 = vmatprep.subr.mxu0 0.0
    %1405 = vmatpush1.msra.mxu0 0.0
    %1406 = vmatprep.subr.mxu0 0.0
    %1407 = vmatpush1.msra.mxu0 0.0
    %1408 = vmatprep.subr.mxu0 0.0
    %1409 = vmatpush1.msra.mxu0 0.0
    %1410 = vmatprep.subr.mxu0 0.0
    %1411 = vmatpush1.msra.mxu0 0.0
    %1412 = vmatprep.subr.mxu0 0.0
    %1413 = vmatpush1.msra.mxu0 0.0
    %1414 = vmatprep.subr.mxu0 0.0
    %1415 = vmatpush1.msra.mxu0 0.0
    %1416 = vmatprep.subr.mxu0 0.0
    %1417 = vmatpush1.msra.mxu0 0.0
    %v1418 = vand.u32 %v995, 4294901760
    %1419 = vmatprep.subr.mxu0 %v1418
    %v1420 = vand.u32 %v993, 4294901760
    %1421 = vmatpush1.msra.mxu0 %v1420
    %1422 = vmatprep.subr.mxu0 0.0
    %1423 = vmatpush2.msra.mxu0 0.0
    %1424 = vmatprep.subr.mxu0 0.0
    %1425 = vmatpush2.msra.mxu0 0.0
    %1426 = vmatprep.subr.mxu0 0.0
    %1427 = vmatpush2.msra.mxu0 0.0
    %1428 = vmatprep.subr.mxu0 0.0
    %1429 = vmatpush2.msra.mxu0 0.0
    %1430 = vmatprep.subr.mxu0 0.0
    %1431 = vmatpush2.msra.mxu0 0.0
    %1432 = vmatprep.subr.mxu0 0.0
    %1433 = vmatpush2.msra.mxu0 0.0
    %1434 = vmatprep.subr.mxu0 0.0
    %1435 = vmatpush2.msra.mxu0 0.0
    %1436 = vmatprep.subr.mxu0 0.0
    %1437 = vmatpush2.msra.mxu0 0.0
    %1438 = vmatprep.subr.mxu0 0.0
    %1439 = vmatpush2.msra.mxu0 0.0
    %1440 = vmatprep.subr.mxu0 0.0
    %1441 = vmatpush2.msra.mxu0 0.0
    %1442 = vmatprep.subr.mxu0 0.0
    %1443 = vmatpush2.msra.mxu0 0.0
    %1444 = vmatprep.subr.mxu0 0.0
    %1445 = vmatpush2.msra.mxu0 0.0
    %1446 = vmatprep.subr.mxu0 0.0
    %1447 = vmatpush2.msra.mxu0 0.0
    %1448 = vmatprep.subr.mxu0 0.0
    %1449 = vmatpush2.msra.mxu0 0.0
    %1450 = vmatprep.subr.mxu0 0.0
    %1451 = vmatpush2.msra.mxu0 0.0
    %1452 = vmatprep.subr.mxu0 0.0
    %1453 = vmatpush2.msra.mxu0 0.0
    %1454 = vmatprep.mubr.f32.mxu0 0.0
    %v1455 = vand.u32 %v991, 4294901760
    %1456 = vmatmul.mubr.f32.gmra.mxu0 %v1455
    %v1457 = vpop.f32.mrf.mxu0
    %v1458 = vadd.f32 %v1384, %v1457
    %v1459 = vpop.f32.mrf.mxu0
    %v1460 = vadd.f32 %v1386, %v1459
    %1461 = vdwg.mxu0
    %v1462 = vadd.f32 %v978, %v1458
    %v1463 = vadd.f32 %v980, %v1460
    %s1464 = scalar_lea.vmem %s0, 8
    %v1465 = vld [vmem:[%s1464] sm:$0xff]
    %v1467 = vcombine.high %v1465, %v1465
    %1468 = vrot.lane.b32.xlu0 %v1465, 126
    %v1469 = vpop.permute.xlu0 %1468
    %1470 = vrot.lane.b32.xlu0 %v1467, 126
    %v1471 = vpop.permute.xlu0 %1470
    %v1472 = vsel %vm34, %v1469, %v1471
    %v1473 = vsel %vm40, %v1472, 0
    %v1475 = vsel %vm40, %v1471, 0
    %1477 = vmatprep.subr.mxu0 0.0
    %1478 = vmatpush1.msra.mxu0 0.0
    %1479 = vmatprep.subr.mxu0 0.0
    %1480 = vmatpush1.msra.mxu0 0.0
    %1481 = vmatprep.subr.mxu0 0.0
    %1482 = vmatpush1.msra.mxu0 0.0
    %1483 = vmatprep.subr.mxu0 0.0
    %1484 = vmatpush1.msra.mxu0 0.0
    %1485 = vmatprep.subr.mxu0 0.0
    %1486 = vmatpush1.msra.mxu0 0.0
    %1487 = vmatprep.subr.mxu0 0.0
    %1488 = vmatpush1.msra.mxu0 0.0
    %1489 = vmatprep.subr.mxu0 0.0
    %1490 = vmatpush1.msra.mxu0 0.0
    %1491 = vmatprep.subr.mxu0 0.0
    %1492 = vmatpush1.msra.mxu0 0.0
    %1493 = vmatprep.subr.mxu0 0.0
    %1494 = vmatpush1.msra.mxu0 0.0
    %1495 = vmatprep.subr.mxu0 0.0
    %1496 = vmatpush1.msra.mxu0 0.0
    %1497 = vmatprep.subr.mxu0 0.0
    %1498 = vmatpush1.msra.mxu0 0.0
    %1499 = vmatprep.subr.mxu0 0.0
    %1500 = vmatpush1.msra.mxu0 0.0
    %1501 = vmatprep.subr.mxu0 0.0
    %1502 = vmatpush1.msra.mxu0 0.0
    %1503 = vmatprep.subr.mxu0 0.0
    %1504 = vmatpush1.msra.mxu0 0.0
    %1505 = vmatprep.subr.mxu0 0.0
    %1506 = vmatpush1.msra.mxu0 0.0
    %v1507 = vand.u32 %v1475, 4294901760
    %1508 = vmatprep.subr.mxu0 %v1507
    %v1509 = vand.u32 %v1473, 4294901760
    %1510 = vmatpush1.msra.mxu0 %v1509
    %1511 = vmatprep.subr.mxu0 0.0
    %1512 = vmatpush2.msra.mxu0 0.0
    %1513 = vmatprep.subr.mxu0 0.0
    %1514 = vmatpush2.msra.mxu0 0.0
    %1515 = vmatprep.subr.mxu0 0.0
    %1516 = vmatpush2.msra.mxu0 0.0
    %1517 = vmatprep.subr.mxu0 0.0
    %1518 = vmatpush2.msra.mxu0 0.0
    %1519 = vmatprep.subr.mxu0 0.0
    %1520 = vmatpush2.msra.mxu0 0.0
    %1521 = vmatprep.subr.mxu0 0.0
    %1522 = vmatpush2.msra.mxu0 0.0
    %1523 = vmatprep.subr.mxu0 0.0
    %1524 = vmatpush2.msra.mxu0 0.0
    %1525 = vmatprep.subr.mxu0 0.0
    %1526 = vmatpush2.msra.mxu0 0.0
    %1527 = vmatprep.subr.mxu0 0.0
    %1528 = vmatpush2.msra.mxu0 0.0
    %1529 = vmatprep.subr.mxu0 0.0
    %1530 = vmatpush2.msra.mxu0 0.0
    %1531 = vmatprep.subr.mxu0 0.0
    %1532 = vmatpush2.msra.mxu0 0.0
    %1533 = vmatprep.subr.mxu0 0.0
    %1534 = vmatpush2.msra.mxu0 0.0
    %1535 = vmatprep.subr.mxu0 0.0
    %1536 = vmatpush2.msra.mxu0 0.0
    %1537 = vmatprep.subr.mxu0 0.0
    %1538 = vmatpush2.msra.mxu0 0.0
    %1539 = vmatprep.subr.mxu0 0.0
    %1540 = vmatpush2.msra.mxu0 0.0
    %1541 = vmatprep.subr.mxu0 0.0
    %1542 = vmatpush2.msra.mxu0 0.0
    %1543 = vmatprep.mubr.f32.mxu0 0.0
    %v1544 = vand.u32 %v38, 4294901760
    %v1545 = vsub.f32 %v38, %v1544
    %v1546 = vand.u32 %v1545, 4294901760
    %v1547 = vsub.f32 %v1545, %v1546
    %v1548 = vand.u32 %v1547, 4294901760
    %1549 = vmatmul.mubr.f32.gmra.mxu0 %v1548
    %v1550 = vpop.f32.mrf.mxu0
    %v1551 = vadd.f32 0.0, %v1550
    %v1552 = vpop.f32.mrf.mxu0
    %v1553 = vadd.f32 0.0, %v1552
    %1554 = vdwg.mxu0
    %1555 = vmatprep.subr.mxu0 0.0
    %1556 = vmatpush1.msra.mxu0 0.0
    %1557 = vmatprep.subr.mxu0 0.0
    %1558 = vmatpush1.msra.mxu0 0.0
    %1559 = vmatprep.subr.mxu0 0.0
    %1560 = vmatpush1.msra.mxu0 0.0
    %1561 = vmatprep.subr.mxu0 0.0
    %1562 = vmatpush1.msra.mxu0 0.0
    %1563 = vmatprep.subr.mxu0 0.0
    %1564 = vmatpush1.msra.mxu0 0.0
    %1565 = vmatprep.subr.mxu0 0.0
    %1566 = vmatpush1.msra.mxu0 0.0
    %1567 = vmatprep.subr.mxu0 0.0
    %1568 = vmatpush1.msra.mxu0 0.0
    %1569 = vmatprep.subr.mxu0 0.0
    %1570 = vmatpush1.msra.mxu0 0.0
    %1571 = vmatprep.subr.mxu0 0.0
    %1572 = vmatpush1.msra.mxu0 0.0
    %1573 = vmatprep.subr.mxu0 0.0
    %1574 = vmatpush1.msra.mxu0 0.0
    %1575 = vmatprep.subr.mxu0 0.0
    %1576 = vmatpush1.msra.mxu0 0.0
    %1577 = vmatprep.subr.mxu0 0.0
    %1578 = vmatpush1.msra.mxu0 0.0
    %1579 = vmatprep.subr.mxu0 0.0
    %1580 = vmatpush1.msra.mxu0 0.0
    %1581 = vmatprep.subr.mxu0 0.0
    %1582 = vmatpush1.msra.mxu0 0.0
    %1583 = vmatprep.subr.mxu0 0.0
    %1584 = vmatpush1.msra.mxu0 0.0
    %v1585 = vand.u32 %v1475, 4294901760
    %v1586 = vsub.f32 %v1475, %v1585
    %v1587 = vand.u32 %v1586, 4294901760
    %v1588 = vsub.f32 %v1586, %v1587
    %v1589 = vand.u32 %v1588, 4294901760
    %1590 = vmatprep.subr.mxu0 %v1589
    %v1591 = vand.u32 %v1473, 4294901760
    %v1592 = vsub.f32 %v1473, %v1591
    %v1593 = vand.u32 %v1592, 4294901760
    %v1594 = vsub.f32 %v1592, %v1593
    %v1595 = vand.u32 %v1594, 4294901760
    %1596 = vmatpush1.msra.mxu0 %v1595
    %1597 = vmatprep.subr.mxu0 0.0
    %1598 = vmatpush2.msra.mxu0 0.0
    %1599 = vmatprep.subr.mxu0 0.0
    %1600 = vmatpush2.msra.mxu0 0.0
    %1601 = vmatprep.subr.mxu0 0.0
    %1602 = vmatpush2.msra.mxu0 0.0
    %1603 = vmatprep.subr.mxu0 0.0
    %1604 = vmatpush2.msra.mxu0 0.0
    %1605 = vmatprep.subr.mxu0 0.0
    %1606 = vmatpush2.msra.mxu0 0.0
    %1607 = vmatprep.subr.mxu0 0.0
    %1608 = vmatpush2.msra.mxu0 0.0
    %1609 = vmatprep.subr.mxu0 0.0
    %1610 = vmatpush2.msra.mxu0 0.0
    %1611 = vmatprep.subr.mxu0 0.0
    %1612 = vmatpush2.msra.mxu0 0.0
    %1613 = vmatprep.subr.mxu0 0.0
    %1614 = vmatpush2.msra.mxu0 0.0
    %1615 = vmatprep.subr.mxu0 0.0
    %1616 = vmatpush2.msra.mxu0 0.0
    %1617 = vmatprep.subr.mxu0 0.0
    %1618 = vmatpush2.msra.mxu0 0.0
    %1619 = vmatprep.subr.mxu0 0.0
    %1620 = vmatpush2.msra.mxu0 0.0
    %1621 = vmatprep.subr.mxu0 0.0
    %1622 = vmatpush2.msra.mxu0 0.0
    %1623 = vmatprep.subr.mxu0 0.0
    %1624 = vmatpush2.msra.mxu0 0.0
    %1625 = vmatprep.subr.mxu0 0.0
    %1626 = vmatpush2.msra.mxu0 0.0
    %1627 = vmatprep.subr.mxu0 0.0
    %1628 = vmatpush2.msra.mxu0 0.0
    %1629 = vmatprep.mubr.f32.mxu0 0.0
    %v1630 = vand.u32 %v38, 4294901760
    %1631 = vmatmul.mubr.f32.gmra.mxu0 %v1630
    %v1632 = vpop.f32.mrf.mxu0
    %v1633 = vadd.f32 %v1551, %v1632
    %v1634 = vpop.f32.mrf.mxu0
    %v1635 = vadd.f32 %v1553, %v1634
    %1636 = vdwg.mxu0
    %1637 = vmatprep.subr.mxu0 0.0
    %1638 = vmatpush1.msra.mxu0 0.0
    %1639 = vmatprep.subr.mxu0 0.0
    %1640 = vmatpush1.msra.mxu0 0.0
    %1641 = vmatprep.subr.mxu0 0.0
    %1642 = vmatpush1.msra.mxu0 0.0
    %1643 = vmatprep.subr.mxu0 0.0
    %1644 = vmatpush1.msra.mxu0 0.0
    %1645 = vmatprep.subr.mxu0 0.0
    %1646 = vmatpush1.msra.mxu0 0.0
    %1647 = vmatprep.subr.mxu0 0.0
    %1648 = vmatpush1.msra.mxu0 0.0
    %1649 = vmatprep.subr.mxu0 0.0
    %1650 = vmatpush1.msra.mxu0 0.0
    %1651 = vmatprep.subr.mxu0 0.0
    %1652 = vmatpush1.msra.mxu0 0.0
    %1653 = vmatprep.subr.mxu0 0.0
    %1654 = vmatpush1.msra.mxu0 0.0
    %1655 = vmatprep.subr.mxu0 0.0
    %1656 = vmatpush1.msra.mxu0 0.0
    %1657 = vmatprep.subr.mxu0 0.0
    %1658 = vmatpush1.msra.mxu0 0.0
    %1659 = vmatprep.subr.mxu0 0.0
    %1660 = vmatpush1.msra.mxu0 0.0
    %1661 = vmatprep.subr.mxu0 0.0
    %1662 = vmatpush1.msra.mxu0 0.0
    %1663 = vmatprep.subr.mxu0 0.0
    %1664 = vmatpush1.msra.mxu0 0.0
    %1665 = vmatprep.subr.mxu0 0.0
    %1666 = vmatpush1.msra.mxu0 0.0
    %v1667 = vand.u32 %v1475, 4294901760
    %v1668 = vsub.f32 %v1475, %v1667
    %1669 = vmatprep.subr.mxu0 %v1668
    %v1670 = vand.u32 %v1473, 4294901760
    %v1671 = vsub.f32 %v1473, %v1670
    %1672 = vmatpush1.msra.mxu0 %v1671
    %1673 = vmatprep.subr.mxu0 0.0
    %1674 = vmatpush2.msra.mxu0 0.0
    %1675 = vmatprep.subr.mxu0 0.0
    %1676 = vmatpush2.msra.mxu0 0.0
    %1677 = vmatprep.subr.mxu0 0.0
    %1678 = vmatpush2.msra.mxu0 0.0
    %1679 = vmatprep.subr.mxu0 0.0
    %1680 = vmatpush2.msra.mxu0 0.0
    %1681 = vmatprep.subr.mxu0 0.0
    %1682 = vmatpush2.msra.mxu0 0.0
    %1683 = vmatprep.subr.mxu0 0.0
    %1684 = vmatpush2.msra.mxu0 0.0
    %1685 = vmatprep.subr.mxu0 0.0
    %1686 = vmatpush2.msra.mxu0 0.0
    %1687 = vmatprep.subr.mxu0 0.0
    %1688 = vmatpush2.msra.mxu0 0.0
    %1689 = vmatprep.subr.mxu0 0.0
    %1690 = vmatpush2.msra.mxu0 0.0
    %1691 = vmatprep.subr.mxu0 0.0
    %1692 = vmatpush2.msra.mxu0 0.0
    %1693 = vmatprep.subr.mxu0 0.0
    %1694 = vmatpush2.msra.mxu0 0.0
    %1695 = vmatprep.subr.mxu0 0.0
    %1696 = vmatpush2.msra.mxu0 0.0
    %1697 = vmatprep.subr.mxu0 0.0
    %1698 = vmatpush2.msra.mxu0 0.0
    %1699 = vmatprep.subr.mxu0 0.0
    %1700 = vmatpush2.msra.mxu0 0.0
    %1701 = vmatprep.subr.mxu0 0.0
    %1702 = vmatpush2.msra.mxu0 0.0
    %1703 = vmatprep.subr.mxu0 0.0
    %1704 = vmatpush2.msra.mxu0 0.0
    %1705 = vmatprep.mubr.f32.mxu0 0.0
    %v1706 = vand.u32 %v38, 4294901760
    %v1707 = vsub.f32 %v38, %v1706
    %1708 = vmatmul.mubr.f32.gmra.mxu0 %v1707
    %v1709 = vpop.f32.mrf.mxu0
    %v1710 = vadd.f32 %v1633, %v1709
    %v1711 = vpop.f32.mrf.mxu0
    %v1712 = vadd.f32 %v1635, %v1711
    %1713 = vdwg.mxu0
    %1714 = vmatprep.subr.mxu0 0.0
    %1715 = vmatpush1.msra.mxu0 0.0
    %1716 = vmatprep.subr.mxu0 0.0
    %1717 = vmatpush1.msra.mxu0 0.0
    %1718 = vmatprep.subr.mxu0 0.0
    %1719 = vmatpush1.msra.mxu0 0.0
    %1720 = vmatprep.subr.mxu0 0.0
    %1721 = vmatpush1.msra.mxu0 0.0
    %1722 = vmatprep.subr.mxu0 0.0
    %1723 = vmatpush1.msra.mxu0 0.0
    %1724 = vmatprep.subr.mxu0 0.0
    %1725 = vmatpush1.msra.mxu0 0.0
    %1726 = vmatprep.subr.mxu0 0.0
    %1727 = vmatpush1.msra.mxu0 0.0
    %1728 = vmatprep.subr.mxu0 0.0
    %1729 = vmatpush1.msra.mxu0 0.0
    %1730 = vmatprep.subr.mxu0 0.0
    %1731 = vmatpush1.msra.mxu0 0.0
    %1732 = vmatprep.subr.mxu0 0.0
    %1733 = vmatpush1.msra.mxu0 0.0
    %1734 = vmatprep.subr.mxu0 0.0
    %1735 = vmatpush1.msra.mxu0 0.0
    %1736 = vmatprep.subr.mxu0 0.0
    %1737 = vmatpush1.msra.mxu0 0.0
    %1738 = vmatprep.subr.mxu0 0.0
    %1739 = vmatpush1.msra.mxu0 0.0
    %1740 = vmatprep.subr.mxu0 0.0
    %1741 = vmatpush1.msra.mxu0 0.0
    %1742 = vmatprep.subr.mxu0 0.0
    %1743 = vmatpush1.msra.mxu0 0.0
    %v1744 = vand.u32 %v1475, 4294901760
    %1745 = vmatprep.subr.mxu0 %v1744
    %v1746 = vand.u32 %v1473, 4294901760
    %1747 = vmatpush1.msra.mxu0 %v1746
    %1748 = vmatprep.subr.mxu0 0.0
    %1749 = vmatpush2.msra.mxu0 0.0
    %1750 = vmatprep.subr.mxu0 0.0
    %1751 = vmatpush2.msra.mxu0 0.0
    %1752 = vmatprep.subr.mxu0 0.0
    %1753 = vmatpush2.msra.mxu0 0.0
    %1754 = vmatprep.subr.mxu0 0.0
    %1755 = vmatpush2.msra.mxu0 0.0
    %1756 = vmatprep.subr.mxu0 0.0
    %1757 = vmatpush2.msra.mxu0 0.0
    %1758 = vmatprep.subr.mxu0 0.0
    %1759 = vmatpush2.msra.mxu0 0.0
    %1760 = vmatprep.subr.mxu0 0.0
    %1761 = vmatpush2.msra.mxu0 0.0
    %1762 = vmatprep.subr.mxu0 0.0
    %1763 = vmatpush2.msra.mxu0 0.0
    %1764 = vmatprep.subr.mxu0 0.0
    %1765 = vmatpush2.msra.mxu0 0.0
    %1766 = vmatprep.subr.mxu0 0.0
    %1767 = vmatpush2.msra.mxu0 0.0
    %1768 = vmatprep.subr.mxu0 0.0
    %1769 = vmatpush2.msra.mxu0 0.0
    %1770 = vmatprep.subr.mxu0 0.0
    %1771 = vmatpush2.msra.mxu0 0.0
    %1772 = vmatprep.subr.mxu0 0.0
    %1773 = vmatpush2.msra.mxu0 0.0
    %1774 = vmatprep.subr.mxu0 0.0
    %1775 = vmatpush2.msra.mxu0 0.0
    %1776 = vmatprep.subr.mxu0 0.0
    %1777 = vmatpush2.msra.mxu0 0.0
    %1778 = vmatprep.subr.mxu0 0.0
    %1779 = vmatpush2.msra.mxu0 0.0
    %1780 = vmatprep.mubr.f32.mxu0 0.0
    %v1781 = vand.u32 %v38, 4294901760
    %v1782 = vsub.f32 %v38, %v1781
    %v1783 = vand.u32 %v1782, 4294901760
    %1784 = vmatmul.mubr.f32.gmra.mxu0 %v1783
    %v1785 = vpop.f32.mrf.mxu0
    %v1786 = vadd.f32 %v1710, %v1785
    %v1787 = vpop.f32.mrf.mxu0
    %v1788 = vadd.f32 %v1712, %v1787
    %1789 = vdwg.mxu0
    %1790 = vmatprep.subr.mxu0 0.0
    %1791 = vmatpush1.msra.mxu0 0.0
    %1792 = vmatprep.subr.mxu0 0.0
    %1793 = vmatpush1.msra.mxu0 0.0
    %1794 = vmatprep.subr.mxu0 0.0
    %1795 = vmatpush1.msra.mxu0 0.0
    %1796 = vmatprep.subr.mxu0 0.0
    %1797 = vmatpush1.msra.mxu0 0.0
    %1798 = vmatprep.subr.mxu0 0.0
    %1799 = vmatpush1.msra.mxu0 0.0
    %1800 = vmatprep.subr.mxu0 0.0
    %1801 = vmatpush1.msra.mxu0 0.0
    %1802 = vmatprep.subr.mxu0 0.0
    %1803 = vmatpush1.msra.mxu0 0.0
    %1804 = vmatprep.subr.mxu0 0.0
    %1805 = vmatpush1.msra.mxu0 0.0
    %1806 = vmatprep.subr.mxu0 0.0
    %1807 = vmatpush1.msra.mxu0 0.0
    %1808 = vmatprep.subr.mxu0 0.0
    %1809 = vmatpush1.msra.mxu0 0.0
    %1810 = vmatprep.subr.mxu0 0.0
    %1811 = vmatpush1.msra.mxu0 0.0
    %1812 = vmatprep.subr.mxu0 0.0
    %1813 = vmatpush1.msra.mxu0 0.0
    %1814 = vmatprep.subr.mxu0 0.0
    %1815 = vmatpush1.msra.mxu0 0.0
    %1816 = vmatprep.subr.mxu0 0.0
    %1817 = vmatpush1.msra.mxu0 0.0
    %1818 = vmatprep.subr.mxu0 0.0
    %1819 = vmatpush1.msra.mxu0 0.0
    %v1820 = vand.u32 %v1475, 4294901760
    %v1821 = vsub.f32 %v1475, %v1820
    %v1822 = vand.u32 %v1821, 4294901760
    %1823 = vmatprep.subr.mxu0 %v1822
    %v1824 = vand.u32 %v1473, 4294901760
    %v1825 = vsub.f32 %v1473, %v1824
    %v1826 = vand.u32 %v1825, 4294901760
    %1827 = vmatpush1.msra.mxu0 %v1826
    %1828 = vmatprep.subr.mxu0 0.0
    %1829 = vmatpush2.msra.mxu0 0.0
    %1830 = vmatprep.subr.mxu0 0.0
    %1831 = vmatpush2.msra.mxu0 0.0
    %1832 = vmatprep.subr.mxu0 0.0
    %1833 = vmatpush2.msra.mxu0 0.0
    %1834 = vmatprep.subr.mxu0 0.0
    %1835 = vmatpush2.msra.mxu0 0.0
    %1836 = vmatprep.subr.mxu0 0.0
    %1837 = vmatpush2.msra.mxu0 0.0
    %1838 = vmatprep.subr.mxu0 0.0
    %1839 = vmatpush2.msra.mxu0 0.0
    %1840 = vmatprep.subr.mxu0 0.0
    %1841 = vmatpush2.msra.mxu0 0.0
    %1842 = vmatprep.subr.mxu0 0.0
    %1843 = vmatpush2.msra.mxu0 0.0
    %1844 = vmatprep.subr.mxu0 0.0
    %1845 = vmatpush2.msra.mxu0 0.0
    %1846 = vmatprep.subr.mxu0 0.0
    %1847 = vmatpush2.msra.mxu0 0.0
    %1848 = vmatprep.subr.mxu0 0.0
    %1849 = vmatpush2.msra.mxu0 0.0
    %1850 = vmatprep.subr.mxu0 0.0
    %1851 = vmatpush2.msra.mxu0 0.0
    %1852 = vmatprep.subr.mxu0 0.0
    %1853 = vmatpush2.msra.mxu0 0.0
    %1854 = vmatprep.subr.mxu0 0.0
    %1855 = vmatpush2.msra.mxu0 0.0
    %1856 = vmatprep.subr.mxu0 0.0
    %1857 = vmatpush2.msra.mxu0 0.0
    %1858 = vmatprep.subr.mxu0 0.0
    %1859 = vmatpush2.msra.mxu0 0.0
    %1860 = vmatprep.mubr.f32.mxu0 0.0
    %v1861 = vand.u32 %v38, 4294901760
    %1862 = vmatmul.mubr.f32.gmra.mxu0 %v1861
    %v1863 = vpop.f32.mrf.mxu0
    %v1864 = vadd.f32 %v1786, %v1863
    %v1865 = vpop.f32.mrf.mxu0
    %v1866 = vadd.f32 %v1788, %v1865
    %1867 = vdwg.mxu0
    %1868 = vmatprep.subr.mxu0 0.0
    %1869 = vmatpush1.msra.mxu0 0.0
    %1870 = vmatprep.subr.mxu0 0.0
    %1871 = vmatpush1.msra.mxu0 0.0
    %1872 = vmatprep.subr.mxu0 0.0
    %1873 = vmatpush1.msra.mxu0 0.0
    %1874 = vmatprep.subr.mxu0 0.0
    %1875 = vmatpush1.msra.mxu0 0.0
    %1876 = vmatprep.subr.mxu0 0.0
    %1877 = vmatpush1.msra.mxu0 0.0
    %1878 = vmatprep.subr.mxu0 0.0
    %1879 = vmatpush1.msra.mxu0 0.0
    %1880 = vmatprep.subr.mxu0 0.0
    %1881 = vmatpush1.msra.mxu0 0.0
    %1882 = vmatprep.subr.mxu0 0.0
    %1883 = vmatpush1.msra.mxu0 0.0
    %1884 = vmatprep.subr.mxu0 0.0
    %1885 = vmatpush1.msra.mxu0 0.0
    %1886 = vmatprep.subr.mxu0 0.0
    %1887 = vmatpush1.msra.mxu0 0.0
    %1888 = vmatprep.subr.mxu0 0.0
    %1889 = vmatpush1.msra.mxu0 0.0
    %1890 = vmatprep.subr.mxu0 0.0
    %1891 = vmatpush1.msra.mxu0 0.0
    %1892 = vmatprep.subr.mxu0 0.0
    %1893 = vmatpush1.msra.mxu0 0.0
    %1894 = vmatprep.subr.mxu0 0.0
    %1895 = vmatpush1.msra.mxu0 0.0
    %1896 = vmatprep.subr.mxu0 0.0
    %1897 = vmatpush1.msra.mxu0 0.0
    %v1898 = vand.u32 %v1475, 4294901760
    %1899 = vmatprep.subr.mxu0 %v1898
    %v1900 = vand.u32 %v1473, 4294901760
    %1901 = vmatpush1.msra.mxu0 %v1900
    %1902 = vmatprep.subr.mxu0 0.0
    %1903 = vmatpush2.msra.mxu0 0.0
    %1904 = vmatprep.subr.mxu0 0.0
    %1905 = vmatpush2.msra.mxu0 0.0
    %1906 = vmatprep.subr.mxu0 0.0
    %1907 = vmatpush2.msra.mxu0 0.0
    %1908 = vmatprep.subr.mxu0 0.0
    %1909 = vmatpush2.msra.mxu0 0.0
    %1910 = vmatprep.subr.mxu0 0.0
    %1911 = vmatpush2.msra.mxu0 0.0
    %1912 = vmatprep.subr.mxu0 0.0
    %1913 = vmatpush2.msra.mxu0 0.0
    %1914 = vmatprep.subr.mxu0 0.0
    %1915 = vmatpush2.msra.mxu0 0.0
    %1916 = vmatprep.subr.mxu0 0.0
    %1917 = vmatpush2.msra.mxu0 0.0
    %1918 = vmatprep.subr.mxu0 0.0
    %1919 = vmatpush2.msra.mxu0 0.0
    %1920 = vmatprep.subr.mxu0 0.0
    %1921 = vmatpush2.msra.mxu0 0.0
    %1922 = vmatprep.subr.mxu0 0.0
    %1923 = vmatpush2.msra.mxu0 0.0
    %1924 = vmatprep.subr.mxu0 0.0
    %1925 = vmatpush2.msra.mxu0 0.0
    %1926 = vmatprep.subr.mxu0 0.0
    %1927 = vmatpush2.msra.mxu0 0.0
    %1928 = vmatprep.subr.mxu0 0.0
    %1929 = vmatpush2.msra.mxu0 0.0
    %1930 = vmatprep.subr.mxu0 0.0
    %1931 = vmatpush2.msra.mxu0 0.0
    %1932 = vmatprep.subr.mxu0 0.0
    %1933 = vmatpush2.msra.mxu0 0.0
    %1934 = vmatprep.mubr.f32.mxu0 0.0
    %v1935 = vand.u32 %v38, 4294901760
    %1936 = vmatmul.mubr.f32.gmra.mxu0 %v1935
    %v1937 = vpop.f32.mrf.mxu0
    %v1938 = vadd.f32 %v1864, %v1937
    %v1939 = vpop.f32.mrf.mxu0
    %v1940 = vadd.f32 %v1866, %v1939
    %1941 = vdwg.mxu0
    %v1942 = vsel %vm40, %v1465, 0
    %v1944 = vsel %vm40, %v1467, 0
    %1946 = vmatprep.subr.mxu0 0.0
    %1947 = vmatpush1.msra.mxu0 0.0
    %1948 = vmatprep.subr.mxu0 0.0
    %1949 = vmatpush1.msra.mxu0 0.0
    %1950 = vmatprep.subr.mxu0 0.0
    %1951 = vmatpush1.msra.mxu0 0.0
    %1952 = vmatprep.subr.mxu0 0.0
    %1953 = vmatpush1.msra.mxu0 0.0
    %1954 = vmatprep.subr.mxu0 0.0
    %1955 = vmatpush1.msra.mxu0 0.0
    %1956 = vmatprep.subr.mxu0 0.0
    %1957 = vmatpush1.msra.mxu0 0.0
    %1958 = vmatprep.subr.mxu0 0.0
    %1959 = vmatpush1.msra.mxu0 0.0
    %1960 = vmatprep.subr.mxu0 0.0
    %1961 = vmatpush1.msra.mxu0 0.0
    %1962 = vmatprep.subr.mxu0 0.0
    %1963 = vmatpush1.msra.mxu0 0.0
    %1964 = vmatprep.subr.mxu0 0.0
    %1965 = vmatpush1.msra.mxu0 0.0
    %1966 = vmatprep.subr.mxu0 0.0
    %1967 = vmatpush1.msra.mxu0 0.0
    %1968 = vmatprep.subr.mxu0 0.0
    %1969 = vmatpush1.msra.mxu0 0.0
    %1970 = vmatprep.subr.mxu0 0.0
    %1971 = vmatpush1.msra.mxu0 0.0
    %1972 = vmatprep.subr.mxu0 0.0
    %1973 = vmatpush1.msra.mxu0 0.0
    %1974 = vmatprep.subr.mxu0 0.0
    %1975 = vmatpush1.msra.mxu0 0.0
    %v1976 = vand.u32 %v1944, 4294901760
    %1977 = vmatprep.subr.mxu0 %v1976
    %v1978 = vand.u32 %v1942, 4294901760
    %1979 = vmatpush1.msra.mxu0 %v1978
    %1980 = vmatprep.subr.mxu0 0.0
    %1981 = vmatpush2.msra.mxu0 0.0
    %1982 = vmatprep.subr.mxu0 0.0
    %1983 = vmatpush2.msra.mxu0 0.0
    %1984 = vmatprep.subr.mxu0 0.0
    %1985 = vmatpush2.msra.mxu0 0.0
    %1986 = vmatprep.subr.mxu0 0.0
    %1987 = vmatpush2.msra.mxu0 0.0
    %1988 = vmatprep.subr.mxu0 0.0
    %1989 = vmatpush2.msra.mxu0 0.0
    %1990 = vmatprep.subr.mxu0 0.0
    %1991 = vmatpush2.msra.mxu0 0.0
    %1992 = vmatprep.subr.mxu0 0.0
    %1993 = vmatpush2.msra.mxu0 0.0
    %1994 = vmatprep.subr.mxu0 0.0
    %1995 = vmatpush2.msra.mxu0 0.0
    %1996 = vmatprep.subr.mxu0 0.0
    %1997 = vmatpush2.msra.mxu0 0.0
    %1998 = vmatprep.subr.mxu0 0.0
    %1999 = vmatpush2.msra.mxu0 0.0
    %2000 = vmatprep.subr.mxu0 0.0
    %2001 = vmatpush2.msra.mxu0 0.0
    %2002 = vmatprep.subr.mxu0 0.0
    %2003 = vmatpush2.msra.mxu0 0.0
    %2004 = vmatprep.subr.mxu0 0.0
    %2005 = vmatpush2.msra.mxu0 0.0
    %2006 = vmatprep.subr.mxu0 0.0
    %2007 = vmatpush2.msra.mxu0 0.0
    %2008 = vmatprep.subr.mxu0 0.0
    %2009 = vmatpush2.msra.mxu0 0.0
    %2010 = vmatprep.subr.mxu0 0.0
    %2011 = vmatpush2.msra.mxu0 0.0
    %2012 = vmatprep.mubr.f32.mxu0 0.0
    %v2013 = vand.u32 %v511, 4294901760
    %v2014 = vsub.f32 %v511, %v2013
    %v2015 = vand.u32 %v2014, 4294901760
    %v2016 = vsub.f32 %v2014, %v2015
    %v2017 = vand.u32 %v2016, 4294901760
    %2018 = vmatmul.mubr.f32.gmra.mxu0 %v2017
    %v2019 = vpop.f32.mrf.mxu0
    %v2020 = vadd.f32 %v1938, %v2019
    %v2021 = vpop.f32.mrf.mxu0
    %v2022 = vadd.f32 %v1940, %v2021
    %2023 = vdwg.mxu0
    %2024 = vmatprep.subr.mxu0 0.0
    %2025 = vmatpush1.msra.mxu0 0.0
    %2026 = vmatprep.subr.mxu0 0.0
    %2027 = vmatpush1.msra.mxu0 0.0
    %2028 = vmatprep.subr.mxu0 0.0
    %2029 = vmatpush1.msra.mxu0 0.0
    %2030 = vmatprep.subr.mxu0 0.0
    %2031 = vmatpush1.msra.mxu0 0.0
    %2032 = vmatprep.subr.mxu0 0.0
    %2033 = vmatpush1.msra.mxu0 0.0
    %2034 = vmatprep.subr.mxu0 0.0
    %2035 = vmatpush1.msra.mxu0 0.0
    %2036 = vmatprep.subr.mxu0 0.0
    %2037 = vmatpush1.msra.mxu0 0.0
    %2038 = vmatprep.subr.mxu0 0.0
    %2039 = vmatpush1.msra.mxu0 0.0
    %2040 = vmatprep.subr.mxu0 0.0
    %2041 = vmatpush1.msra.mxu0 0.0
    %2042 = vmatprep.subr.mxu0 0.0
    %2043 = vmatpush1.msra.mxu0 0.0
    %2044 = vmatprep.subr.mxu0 0.0
    %2045 = vmatpush1.msra.mxu0 0.0
    %2046 = vmatprep.subr.mxu0 0.0
    %2047 = vmatpush1.msra.mxu0 0.0
    %2048 = vmatprep.subr.mxu0 0.0
    %2049 = vmatpush1.msra.mxu0 0.0
    %2050 = vmatprep.subr.mxu0 0.0
    %2051 = vmatpush1.msra.mxu0 0.0
    %2052 = vmatprep.subr.mxu0 0.0
    %2053 = vmatpush1.msra.mxu0 0.0
    %v2054 = vand.u32 %v1944, 4294901760
    %v2055 = vsub.f32 %v1944, %v2054
    %v2056 = vand.u32 %v2055, 4294901760
    %v2057 = vsub.f32 %v2055, %v2056
    %v2058 = vand.u32 %v2057, 4294901760
    %2059 = vmatprep.subr.mxu0 %v2058
    %v2060 = vand.u32 %v1942, 4294901760
    %v2061 = vsub.f32 %v1942, %v2060
    %v2062 = vand.u32 %v2061, 4294901760
    %v2063 = vsub.f32 %v2061, %v2062
    %v2064 = vand.u32 %v2063, 4294901760
    %2065 = vmatpush1.msra.mxu0 %v2064
    %2066 = vmatprep.subr.mxu0 0.0
    %2067 = vmatpush2.msra.mxu0 0.0
    %2068 = vmatprep.subr.mxu0 0.0
    %2069 = vmatpush2.msra.mxu0 0.0
    %2070 = vmatprep.subr.mxu0 0.0
    %2071 = vmatpush2.msra.mxu0 0.0
    %2072 = vmatprep.subr.mxu0 0.0
    %2073 = vmatpush2.msra.mxu0 0.0
    %2074 = vmatprep.subr.mxu0 0.0
    %2075 = vmatpush2.msra.mxu0 0.0
    %2076 = vmatprep.subr.mxu0 0.0
    %2077 = vmatpush2.msra.mxu0 0.0
    %2078 = vmatprep.subr.mxu0 0.0
    %2079 = vmatpush2.msra.mxu0 0.0
    %2080 = vmatprep.subr.mxu0 0.0
    %2081 = vmatpush2.msra.mxu0 0.0
    %2082 = vmatprep.subr.mxu0 0.0
    %2083 = vmatpush2.msra.mxu0 0.0
    %2084 = vmatprep.subr.mxu0 0.0
    %2085 = vmatpush2.msra.mxu0 0.0
    %2086 = vmatprep.subr.mxu0 0.0
    %2087 = vmatpush2.msra.mxu0 0.0
    %2088 = vmatprep.subr.mxu0 0.0
    %2089 = vmatpush2.msra.mxu0 0.0
    %2090 = vmatprep.subr.mxu0 0.0
    %2091 = vmatpush2.msra.mxu0 0.0
    %2092 = vmatprep.subr.mxu0 0.0
    %2093 = vmatpush2.msra.mxu0 0.0
    %2094 = vmatprep.subr.mxu0 0.0
    %2095 = vmatpush2.msra.mxu0 0.0
    %2096 = vmatprep.subr.mxu0 0.0
    %2097 = vmatpush2.msra.mxu0 0.0
    %2098 = vmatprep.mubr.f32.mxu0 0.0
    %v2099 = vand.u32 %v511, 4294901760
    %2100 = vmatmul.mubr.f32.gmra.mxu0 %v2099
    %v2101 = vpop.f32.mrf.mxu0
    %v2102 = vadd.f32 %v2020, %v2101
    %v2103 = vpop.f32.mrf.mxu0
    %v2104 = vadd.f32 %v2022, %v2103
    %2105 = vdwg.mxu0
    %2106 = vmatprep.subr.mxu0 0.0
    %2107 = vmatpush1.msra.mxu0 0.0
    %2108 = vmatprep.subr.mxu0 0.0
    %2109 = vmatpush1.msra.mxu0 0.0
    %2110 = vmatprep.subr.mxu0 0.0
    %2111 = vmatpush1.msra.mxu0 0.0
    %2112 = vmatprep.subr.mxu0 0.0
    %2113 = vmatpush1.msra.mxu0 0.0
    %2114 = vmatprep.subr.mxu0 0.0
    %2115 = vmatpush1.msra.mxu0 0.0
    %2116 = vmatprep.subr.mxu0 0.0
    %2117 = vmatpush1.msra.mxu0 0.0
    %2118 = vmatprep.subr.mxu0 0.0
    %2119 = vmatpush1.msra.mxu0 0.0
    %2120 = vmatprep.subr.mxu0 0.0
    %2121 = vmatpush1.msra.mxu0 0.0
    %2122 = vmatprep.subr.mxu0 0.0
    %2123 = vmatpush1.msra.mxu0 0.0
    %2124 = vmatprep.subr.mxu0 0.0
    %2125 = vmatpush1.msra.mxu0 0.0
    %2126 = vmatprep.subr.mxu0 0.0
    %2127 = vmatpush1.msra.mxu0 0.0
    %2128 = vmatprep.subr.mxu0 0.0
    %2129 = vmatpush1.msra.mxu0 0.0
    %2130 = vmatprep.subr.mxu0 0.0
    %2131 = vmatpush1.msra.mxu0 0.0
    %2132 = vmatprep.subr.mxu0 0.0
    %2133 = vmatpush1.msra.mxu0 0.0
    %2134 = vmatprep.subr.mxu0 0.0
    %2135 = vmatpush1.msra.mxu0 0.0
    %v2136 = vand.u32 %v1944, 4294901760
    %v2137 = vsub.f32 %v1944, %v2136
    %2138 = vmatprep.subr.mxu0 %v2137
    %v2139 = vand.u32 %v1942, 4294901760
    %v2140 = vsub.f32 %v1942, %v2139
    %2141 = vmatpush1.msra.mxu0 %v2140
    %2142 = vmatprep.subr.mxu0 0.0
    %2143 = vmatpush2.msra.mxu0 0.0
    %2144 = vmatprep.subr.mxu0 0.0
    %2145 = vmatpush2.msra.mxu0 0.0
    %2146 = vmatprep.subr.mxu0 0.0
    %2147 = vmatpush2.msra.mxu0 0.0
    %2148 = vmatprep.subr.mxu0 0.0
    %2149 = vmatpush2.msra.mxu0 0.0
    %2150 = vmatprep.subr.mxu0 0.0
    %2151 = vmatpush2.msra.mxu0 0.0
    %2152 = vmatprep.subr.mxu0 0.0
    %2153 = vmatpush2.msra.mxu0 0.0
    %2154 = vmatprep.subr.mxu0 0.0
    %2155 = vmatpush2.msra.mxu0 0.0
    %2156 = vmatprep.subr.mxu0 0.0
    %2157 = vmatpush2.msra.mxu0 0.0
    %2158 = vmatprep.subr.mxu0 0.0
    %2159 = vmatpush2.msra.mxu0 0.0
    %2160 = vmatprep.subr.mxu0 0.0
    %2161 = vmatpush2.msra.mxu0 0.0
    %2162 = vmatprep.subr.mxu0 0.0
    %2163 = vmatpush2.msra.mxu0 0.0
    %2164 = vmatprep.subr.mxu0 0.0
    %2165 = vmatpush2.msra.mxu0 0.0
    %2166 = vmatprep.subr.mxu0 0.0
    %2167 = vmatpush2.msra.mxu0 0.0
    %2168 = vmatprep.subr.mxu0 0.0
    %2169 = vmatpush2.msra.mxu0 0.0
    %2170 = vmatprep.subr.mxu0 0.0
    %2171 = vmatpush2.msra.mxu0 0.0
    %2172 = vmatprep.subr.mxu0 0.0
    %2173 = vmatpush2.msra.mxu0 0.0
    %2174 = vmatprep.mubr.f32.mxu0 0.0
    %v2175 = vand.u32 %v511, 4294901760
    %v2176 = vsub.f32 %v511, %v2175
    %2177 = vmatmul.mubr.f32.gmra.mxu0 %v2176
    %v2178 = vpop.f32.mrf.mxu0
    %v2179 = vadd.f32 %v2102, %v2178
    %v2180 = vpop.f32.mrf.mxu0
    %v2181 = vadd.f32 %v2104, %v2180
    %2182 = vdwg.mxu0
    %2183 = vmatprep.subr.mxu0 0.0
    %2184 = vmatpush1.msra.mxu0 0.0
    %2185 = vmatprep.subr.mxu0 0.0
    %2186 = vmatpush1.msra.mxu0 0.0
    %2187 = vmatprep.subr.mxu0 0.0
    %2188 = vmatpush1.msra.mxu0 0.0
    %2189 = vmatprep.subr.mxu0 0.0
    %2190 = vmatpush1.msra.mxu0 0.0
    %2191 = vmatprep.subr.mxu0 0.0
    %2192 = vmatpush1.msra.mxu0 0.0
    %2193 = vmatprep.subr.mxu0 0.0
    %2194 = vmatpush1.msra.mxu0 0.0
    %2195 = vmatprep.subr.mxu0 0.0
    %2196 = vmatpush1.msra.mxu0 0.0
    %2197 = vmatprep.subr.mxu0 0.0
    %2198 = vmatpush1.msra.mxu0 0.0
    %2199 = vmatprep.subr.mxu0 0.0
    %2200 = vmatpush1.msra.mxu0 0.0
    %2201 = vmatprep.subr.mxu0 0.0
    %2202 = vmatpush1.msra.mxu0 0.0
    %2203 = vmatprep.subr.mxu0 0.0
    %2204 = vmatpush1.msra.mxu0 0.0
    %2205 = vmatprep.subr.mxu0 0.0
    %2206 = vmatpush1.msra.mxu0 0.0
    %2207 = vmatprep.subr.mxu0 0.0
    %2208 = vmatpush1.msra.mxu0 0.0
    %2209 = vmatprep.subr.mxu0 0.0
    %2210 = vmatpush1.msra.mxu0 0.0
    %2211 = vmatprep.subr.mxu0 0.0
    %2212 = vmatpush1.msra.mxu0 0.0
    %v2213 = vand.u32 %v1944, 4294901760
    %2214 = vmatprep.subr.mxu0 %v2213
    %v2215 = vand.u32 %v1942, 4294901760
    %2216 = vmatpush1.msra.mxu0 %v2215
    %2217 = vmatprep.subr.mxu0 0.0
    %2218 = vmatpush2.msra.mxu0 0.0
    %2219 = vmatprep.subr.mxu0 0.0
    %2220 = vmatpush2.msra.mxu0 0.0
    %2221 = vmatprep.subr.mxu0 0.0
    %2222 = vmatpush2.msra.mxu0 0.0
    %2223 = vmatprep.subr.mxu0 0.0
    %2224 = vmatpush2.msra.mxu0 0.0
    %2225 = vmatprep.subr.mxu0 0.0
    %2226 = vmatpush2.msra.mxu0 0.0
    %2227 = vmatprep.subr.mxu0 0.0
    %2228 = vmatpush2.msra.mxu0 0.0
    %2229 = vmatprep.subr.mxu0 0.0
    %2230 = vmatpush2.msra.mxu0 0.0
    %2231 = vmatprep.subr.mxu0 0.0
    %2232 = vmatpush2.msra.mxu0 0.0
    %2233 = vmatprep.subr.mxu0 0.0
    %2234 = vmatpush2.msra.mxu0 0.0
    %2235 = vmatprep.subr.mxu0 0.0
    %2236 = vmatpush2.msra.mxu0 0.0
    %2237 = vmatprep.subr.mxu0 0.0
    %2238 = vmatpush2.msra.mxu0 0.0
    %2239 = vmatprep.subr.mxu0 0.0
    %2240 = vmatpush2.msra.mxu0 0.0
    %2241 = vmatprep.subr.mxu0 0.0
    %2242 = vmatpush2.msra.mxu0 0.0
    %2243 = vmatprep.subr.mxu0 0.0
    %2244 = vmatpush2.msra.mxu0 0.0
    %2245 = vmatprep.subr.mxu0 0.0
    %2246 = vmatpush2.msra.mxu0 0.0
    %2247 = vmatprep.subr.mxu0 0.0
    %2248 = vmatpush2.msra.mxu0 0.0
    %2249 = vmatprep.mubr.f32.mxu0 0.0
    %v2250 = vand.u32 %v511, 4294901760
    %v2251 = vsub.f32 %v511, %v2250
    %v2252 = vand.u32 %v2251, 4294901760
    %2253 = vmatmul.mubr.f32.gmra.mxu0 %v2252
    %v2254 = vpop.f32.mrf.mxu0
    %v2255 = vadd.f32 %v2179, %v2254
    %v2256 = vpop.f32.mrf.mxu0
    %v2257 = vadd.f32 %v2181, %v2256
    %2258 = vdwg.mxu0
    %2259 = vmatprep.subr.mxu0 0.0
    %2260 = vmatpush1.msra.mxu0 0.0
    %2261 = vmatprep.subr.mxu0 0.0
    %2262 = vmatpush1.msra.mxu0 0.0
    %2263 = vmatprep.subr.mxu0 0.0
    %2264 = vmatpush1.msra.mxu0 0.0
    %2265 = vmatprep.subr.mxu0 0.0
    %2266 = vmatpush1.msra.mxu0 0.0
    %2267 = vmatprep.subr.mxu0 0.0
    %2268 = vmatpush1.msra.mxu0 0.0
    %2269 = vmatprep.subr.mxu0 0.0
    %2270 = vmatpush1.msra.mxu0 0.0
    %2271 = vmatprep.subr.mxu0 0.0
    %2272 = vmatpush1.msra.mxu0 0.0
    %2273 = vmatprep.subr.mxu0 0.0
    %2274 = vmatpush1.msra.mxu0 0.0
    %2275 = vmatprep.subr.mxu0 0.0
    %2276 = vmatpush1.msra.mxu0 0.0
    %2277 = vmatprep.subr.mxu0 0.0
    %2278 = vmatpush1.msra.mxu0 0.0
    %2279 = vmatprep.subr.mxu0 0.0
    %2280 = vmatpush1.msra.mxu0 0.0
    %2281 = vmatprep.subr.mxu0 0.0
    %2282 = vmatpush1.msra.mxu0 0.0
    %2283 = vmatprep.subr.mxu0 0.0
    %2284 = vmatpush1.msra.mxu0 0.0
    %2285 = vmatprep.subr.mxu0 0.0
    %2286 = vmatpush1.msra.mxu0 0.0
    %2287 = vmatprep.subr.mxu0 0.0
    %2288 = vmatpush1.msra.mxu0 0.0
    %v2289 = vand.u32 %v1944, 4294901760
    %v2290 = vsub.f32 %v1944, %v2289
    %v2291 = vand.u32 %v2290, 4294901760
    %2292 = vmatprep.subr.mxu0 %v2291
    %v2293 = vand.u32 %v1942, 4294901760
    %v2294 = vsub.f32 %v1942, %v2293
    %v2295 = vand.u32 %v2294, 4294901760
    %2296 = vmatpush1.msra.mxu0 %v2295
    %2297 = vmatprep.subr.mxu0 0.0
    %2298 = vmatpush2.msra.mxu0 0.0
    %2299 = vmatprep.subr.mxu0 0.0
    %2300 = vmatpush2.msra.mxu0 0.0
    %2301 = vmatprep.subr.mxu0 0.0
    %2302 = vmatpush2.msra.mxu0 0.0
    %2303 = vmatprep.subr.mxu0 0.0
    %2304 = vmatpush2.msra.mxu0 0.0
    %2305 = vmatprep.subr.mxu0 0.0
    %2306 = vmatpush2.msra.mxu0 0.0
    %2307 = vmatprep.subr.mxu0 0.0
    %2308 = vmatpush2.msra.mxu0 0.0
    %2309 = vmatprep.subr.mxu0 0.0
    %2310 = vmatpush2.msra.mxu0 0.0
    %2311 = vmatprep.subr.mxu0 0.0
    %2312 = vmatpush2.msra.mxu0 0.0
    %2313 = vmatprep.subr.mxu0 0.0
    %2314 = vmatpush2.msra.mxu0 0.0
    %2315 = vmatprep.subr.mxu0 0.0
    %2316 = vmatpush2.msra.mxu0 0.0
    %2317 = vmatprep.subr.mxu0 0.0
    %2318 = vmatpush2.msra.mxu0 0.0
    %2319 = vmatprep.subr.mxu0 0.0
    %2320 = vmatpush2.msra.mxu0 0.0
    %2321 = vmatprep.subr.mxu0 0.0
    %2322 = vmatpush2.msra.mxu0 0.0
    %2323 = vmatprep.subr.mxu0 0.0
    %2324 = vmatpush2.msra.mxu0 0.0
    %2325 = vmatprep.subr.mxu0 0.0
    %2326 = vmatpush2.msra.mxu0 0.0
    %2327 = vmatprep.subr.mxu0 0.0
    %2328 = vmatpush2.msra.mxu0 0.0
    %2329 = vmatprep.mubr.f32.mxu0 0.0
    %v2330 = vand.u32 %v511, 4294901760
    %2331 = vmatmul.mubr.f32.gmra.mxu0 %v2330
    %v2332 = vpop.f32.mrf.mxu0
    %v2333 = vadd.f32 %v2255, %v2332
    %v2334 = vpop.f32.mrf.mxu0
    %v2335 = vadd.f32 %v2257, %v2334
    %2336 = vdwg.mxu0
    %2337 = vmatprep.subr.mxu0 0.0
    %2338 = vmatpush1.msra.mxu0 0.0
    %2339 = vmatprep.subr.mxu0 0.0
    %2340 = vmatpush1.msra.mxu0 0.0
    %2341 = vmatprep.subr.mxu0 0.0
    %2342 = vmatpush1.msra.mxu0 0.0
    %2343 = vmatprep.subr.mxu0 0.0
    %2344 = vmatpush1.msra.mxu0 0.0
    %2345 = vmatprep.subr.mxu0 0.0
    %2346 = vmatpush1.msra.mxu0 0.0
    %2347 = vmatprep.subr.mxu0 0.0
    %2348 = vmatpush1.msra.mxu0 0.0
    %2349 = vmatprep.subr.mxu0 0.0
    %2350 = vmatpush1.msra.mxu0 0.0
    %2351 = vmatprep.subr.mxu0 0.0
    %2352 = vmatpush1.msra.mxu0 0.0
    %2353 = vmatprep.subr.mxu0 0.0
    %2354 = vmatpush1.msra.mxu0 0.0
    %2355 = vmatprep.subr.mxu0 0.0
    %2356 = vmatpush1.msra.mxu0 0.0
    %2357 = vmatprep.subr.mxu0 0.0
    %2358 = vmatpush1.msra.mxu0 0.0
    %2359 = vmatprep.subr.mxu0 0.0
    %2360 = vmatpush1.msra.mxu0 0.0
    %2361 = vmatprep.subr.mxu0 0.0
    %2362 = vmatpush1.msra.mxu0 0.0
    %2363 = vmatprep.subr.mxu0 0.0
    %2364 = vmatpush1.msra.mxu0 0.0
    %2365 = vmatprep.subr.mxu0 0.0
    %2366 = vmatpush1.msra.mxu0 0.0
    %v2367 = vand.u32 %v1944, 4294901760
    %2368 = vmatprep.subr.mxu0 %v2367
    %v2369 = vand.u32 %v1942, 4294901760
    %2370 = vmatpush1.msra.mxu0 %v2369
    %2371 = vmatprep.subr.mxu0 0.0
    %2372 = vmatpush2.msra.mxu0 0.0
    %2373 = vmatprep.subr.mxu0 0.0
    %2374 = vmatpush2.msra.mxu0 0.0
    %2375 = vmatprep.subr.mxu0 0.0
    %2376 = vmatpush2.msra.mxu0 0.0
    %2377 = vmatprep.subr.mxu0 0.0
    %2378 = vmatpush2.msra.mxu0 0.0
    %2379 = vmatprep.subr.mxu0 0.0
    %2380 = vmatpush2.msra.mxu0 0.0
    %2381 = vmatprep.subr.mxu0 0.0
    %2382 = vmatpush2.msra.mxu0 0.0
    %2383 = vmatprep.subr.mxu0 0.0
    %2384 = vmatpush2.msra.mxu0 0.0
    %2385 = vmatprep.subr.mxu0 0.0
    %2386 = vmatpush2.msra.mxu0 0.0
    %2387 = vmatprep.subr.mxu0 0.0
    %2388 = vmatpush2.msra.mxu0 0.0
    %2389 = vmatprep.subr.mxu0 0.0
    %2390 = vmatpush2.msra.mxu0 0.0
    %2391 = vmatprep.subr.mxu0 0.0
    %2392 = vmatpush2.msra.mxu0 0.0
    %2393 = vmatprep.subr.mxu0 0.0
    %2394 = vmatpush2.msra.mxu0 0.0
    %2395 = vmatprep.subr.mxu0 0.0
    %2396 = vmatpush2.msra.mxu0 0.0
    %2397 = vmatprep.subr.mxu0 0.0
    %2398 = vmatpush2.msra.mxu0 0.0
    %2399 = vmatprep.subr.mxu0 0.0
    %2400 = vmatpush2.msra.mxu0 0.0
    %2401 = vmatprep.subr.mxu0 0.0
    %2402 = vmatpush2.msra.mxu0 0.0
    %2403 = vmatprep.mubr.f32.mxu0 0.0
    %v2404 = vand.u32 %v511, 4294901760
    %2405 = vmatmul.mubr.f32.gmra.mxu0 %v2404
    %v2406 = vpop.f32.mrf.mxu0
    %v2407 = vadd.f32 %v2333, %v2406
    %v2408 = vpop.f32.mrf.mxu0
    %v2409 = vadd.f32 %v2335, %v2408
    %2410 = vdwg.mxu0
    %2411 = vrot.lane.b32.xlu0 %v1465, 124
    %v2412 = vpop.permute.xlu0 %2411
    %2413 = vrot.lane.b32.xlu0 %v1467, 124
    %v2414 = vpop.permute.xlu0 %2413
    %v2415 = vsel %vm988, %v2412, %v2414
    %v2416 = vsel %vm40, %v2415, 0
    %v2418 = vsel %vm40, %v2414, 0
    %2420 = vmatprep.subr.mxu0 0.0
    %2421 = vmatpush1.msra.mxu0 0.0
    %2422 = vmatprep.subr.mxu0 0.0
    %2423 = vmatpush1.msra.mxu0 0.0
    %2424 = vmatprep.subr.mxu0 0.0
    %2425 = vmatpush1.msra.mxu0 0.0
    %2426 = vmatprep.subr.mxu0 0.0
    %2427 = vmatpush1.msra.mxu0 0.0
    %2428 = vmatprep.subr.mxu0 0.0
    %2429 = vmatpush1.msra.mxu0 0.0
    %2430 = vmatprep.subr.mxu0 0.0
    %2431 = vmatpush1.msra.mxu0 0.0
    %2432 = vmatprep.subr.mxu0 0.0
    %2433 = vmatpush1.msra.mxu0 0.0
    %2434 = vmatprep.subr.mxu0 0.0
    %2435 = vmatpush1.msra.mxu0 0.0
    %2436 = vmatprep.subr.mxu0 0.0
    %2437 = vmatpush1.msra.mxu0 0.0
    %2438 = vmatprep.subr.mxu0 0.0
    %2439 = vmatpush1.msra.mxu0 0.0
    %2440 = vmatprep.subr.mxu0 0.0
    %2441 = vmatpush1.msra.mxu0 0.0
    %2442 = vmatprep.subr.mxu0 0.0
    %2443 = vmatpush1.msra.mxu0 0.0
    %2444 = vmatprep.subr.mxu0 0.0
    %2445 = vmatpush1.msra.mxu0 0.0
    %2446 = vmatprep.subr.mxu0 0.0
    %2447 = vmatpush1.msra.mxu0 0.0
    %2448 = vmatprep.subr.mxu0 0.0
    %2449 = vmatpush1.msra.mxu0 0.0
    %v2450 = vand.u32 %v2418, 4294901760
    %2451 = vmatprep.subr.mxu0 %v2450
    %v2452 = vand.u32 %v2416, 4294901760
    %2453 = vmatpush1.msra.mxu0 %v2452
    %2454 = vmatprep.subr.mxu0 0.0
    %2455 = vmatpush2.msra.mxu0 0.0
    %2456 = vmatprep.subr.mxu0 0.0
    %2457 = vmatpush2.msra.mxu0 0.0
    %2458 = vmatprep.subr.mxu0 0.0
    %2459 = vmatpush2.msra.mxu0 0.0
    %2460 = vmatprep.subr.mxu0 0.0
    %2461 = vmatpush2.msra.mxu0 0.0
    %2462 = vmatprep.subr.mxu0 0.0
    %2463 = vmatpush2.msra.mxu0 0.0
    %2464 = vmatprep.subr.mxu0 0.0
    %2465 = vmatpush2.msra.mxu0 0.0
    %2466 = vmatprep.subr.mxu0 0.0
    %2467 = vmatpush2.msra.mxu0 0.0
    %2468 = vmatprep.subr.mxu0 0.0
    %2469 = vmatpush2.msra.mxu0 0.0
    %2470 = vmatprep.subr.mxu0 0.0
    %2471 = vmatpush2.msra.mxu0 0.0
    %2472 = vmatprep.subr.mxu0 0.0
    %2473 = vmatpush2.msra.mxu0 0.0
    %2474 = vmatprep.subr.mxu0 0.0
    %2475 = vmatpush2.msra.mxu0 0.0
    %2476 = vmatprep.subr.mxu0 0.0
    %2477 = vmatpush2.msra.mxu0 0.0
    %2478 = vmatprep.subr.mxu0 0.0
    %2479 = vmatpush2.msra.mxu0 0.0
    %2480 = vmatprep.subr.mxu0 0.0
    %2481 = vmatpush2.msra.mxu0 0.0
    %2482 = vmatprep.subr.mxu0 0.0
    %2483 = vmatpush2.msra.mxu0 0.0
    %2484 = vmatprep.subr.mxu0 0.0
    %2485 = vmatpush2.msra.mxu0 0.0
    %2486 = vmatprep.mubr.f32.mxu0 0.0
    %v2487 = vand.u32 %v991, 4294901760
    %v2488 = vsub.f32 %v991, %v2487
    %v2489 = vand.u32 %v2488, 4294901760
    %v2490 = vsub.f32 %v2488, %v2489
    %v2491 = vand.u32 %v2490, 4294901760
    %2492 = vmatmul.mubr.f32.gmra.mxu0 %v2491
    %v2493 = vpop.f32.mrf.mxu0
    %v2494 = vadd.f32 0.0, %v2493
    %v2495 = vpop.f32.mrf.mxu0
    %v2496 = vadd.f32 0.0, %v2495
    %2497 = vdwg.mxu0
    %2498 = vmatprep.subr.mxu0 0.0
    %2499 = vmatpush1.msra.mxu0 0.0
    %2500 = vmatprep.subr.mxu0 0.0
    %2501 = vmatpush1.msra.mxu0 0.0
    %2502 = vmatprep.subr.mxu0 0.0
    %2503 = vmatpush1.msra.mxu0 0.0
    %2504 = vmatprep.subr.mxu0 0.0
    %2505 = vmatpush1.msra.mxu0 0.0
    %2506 = vmatprep.subr.mxu0 0.0
    %2507 = vmatpush1.msra.mxu0 0.0
    %2508 = vmatprep.subr.mxu0 0.0
    %2509 = vmatpush1.msra.mxu0 0.0
    %2510 = vmatprep.subr.mxu0 0.0
    %2511 = vmatpush1.msra.mxu0 0.0
    %2512 = vmatprep.subr.mxu0 0.0
    %2513 = vmatpush1.msra.mxu0 0.0
    %2514 = vmatprep.subr.mxu0 0.0
    %2515 = vmatpush1.msra.mxu0 0.0
    %2516 = vmatprep.subr.mxu0 0.0
    %2517 = vmatpush1.msra.mxu0 0.0
    %2518 = vmatprep.subr.mxu0 0.0
    %2519 = vmatpush1.msra.mxu0 0.0
    %2520 = vmatprep.subr.mxu0 0.0
    %2521 = vmatpush1.msra.mxu0 0.0
    %2522 = vmatprep.subr.mxu0 0.0
    %2523 = vmatpush1.msra.mxu0 0.0
    %2524 = vmatprep.subr.mxu0 0.0
    %2525 = vmatpush1.msra.mxu0 0.0
    %2526 = vmatprep.subr.mxu0 0.0
    %2527 = vmatpush1.msra.mxu0 0.0
    %v2528 = vand.u32 %v2418, 4294901760
    %v2529 = vsub.f32 %v2418, %v2528
    %v2530 = vand.u32 %v2529, 4294901760
    %v2531 = vsub.f32 %v2529, %v2530
    %v2532 = vand.u32 %v2531, 4294901760
    %2533 = vmatprep.subr.mxu0 %v2532
    %v2534 = vand.u32 %v2416, 4294901760
    %v2535 = vsub.f32 %v2416, %v2534
    %v2536 = vand.u32 %v2535, 4294901760
    %v2537 = vsub.f32 %v2535, %v2536
    %v2538 = vand.u32 %v2537, 4294901760
    %2539 = vmatpush1.msra.mxu0 %v2538
    %2540 = vmatprep.subr.mxu0 0.0
    %2541 = vmatpush2.msra.mxu0 0.0
    %2542 = vmatprep.subr.mxu0 0.0
    %2543 = vmatpush2.msra.mxu0 0.0
    %2544 = vmatprep.subr.mxu0 0.0
    %2545 = vmatpush2.msra.mxu0 0.0
    %2546 = vmatprep.subr.mxu0 0.0
    %2547 = vmatpush2.msra.mxu0 0.0
    %2548 = vmatprep.subr.mxu0 0.0
    %2549 = vmatpush2.msra.mxu0 0.0
    %2550 = vmatprep.subr.mxu0 0.0
    %2551 = vmatpush2.msra.mxu0 0.0
    %2552 = vmatprep.subr.mxu0 0.0
    %2553 = vmatpush2.msra.mxu0 0.0
    %2554 = vmatprep.subr.mxu0 0.0
    %2555 = vmatpush2.msra.mxu0 0.0
    %2556 = vmatprep.subr.mxu0 0.0
    %2557 = vmatpush2.msra.mxu0 0.0
    %2558 = vmatprep.subr.mxu0 0.0
    %2559 = vmatpush2.msra.mxu0 0.0
    %2560 = vmatprep.subr.mxu0 0.0
    %2561 = vmatpush2.msra.mxu0 0.0
    %2562 = vmatprep.subr.mxu0 0.0
    %2563 = vmatpush2.msra.mxu0 0.0
    %2564 = vmatprep.subr.mxu0 0.0
    %2565 = vmatpush2.msra.mxu0 0.0
    %2566 = vmatprep.subr.mxu0 0.0
    %2567 = vmatpush2.msra.mxu0 0.0
    %2568 = vmatprep.subr.mxu0 0.0
    %2569 = vmatpush2.msra.mxu0 0.0
    %2570 = vmatprep.subr.mxu0 0.0
    %2571 = vmatpush2.msra.mxu0 0.0
    %2572 = vmatprep.mubr.f32.mxu0 0.0
    %v2573 = vand.u32 %v991, 4294901760
    %2574 = vmatmul.mubr.f32.gmra.mxu0 %v2573
    %v2575 = vpop.f32.mrf.mxu0
    %v2576 = vadd.f32 %v2494, %v2575
    %v2577 = vpop.f32.mrf.mxu0
    %v2578 = vadd.f32 %v2496, %v2577
    %2579 = vdwg.mxu0
    %2580 = vmatprep.subr.mxu0 0.0
    %2581 = vmatpush1.msra.mxu0 0.0
    %2582 = vmatprep.subr.mxu0 0.0
    %2583 = vmatpush1.msra.mxu0 0.0
    %2584 = vmatprep.subr.mxu0 0.0
    %2585 = vmatpush1.msra.mxu0 0.0
    %2586 = vmatprep.subr.mxu0 0.0
    %2587 = vmatpush1.msra.mxu0 0.0
    %2588 = vmatprep.subr.mxu0 0.0
    %2589 = vmatpush1.msra.mxu0 0.0
    %2590 = vmatprep.subr.mxu0 0.0
    %2591 = vmatpush1.msra.mxu0 0.0
    %2592 = vmatprep.subr.mxu0 0.0
    %2593 = vmatpush1.msra.mxu0 0.0
    %2594 = vmatprep.subr.mxu0 0.0
    %2595 = vmatpush1.msra.mxu0 0.0
    %2596 = vmatprep.subr.mxu0 0.0
    %2597 = vmatpush1.msra.mxu0 0.0
    %2598 = vmatprep.subr.mxu0 0.0
    %2599 = vmatpush1.msra.mxu0 0.0
    %2600 = vmatprep.subr.mxu0 0.0
    %2601 = vmatpush1.msra.mxu0 0.0
    %2602 = vmatprep.subr.mxu0 0.0
    %2603 = vmatpush1.msra.mxu0 0.0
    %2604 = vmatprep.subr.mxu0 0.0
    %2605 = vmatpush1.msra.mxu0 0.0
    %2606 = vmatprep.subr.mxu0 0.0
    %2607 = vmatpush1.msra.mxu0 0.0
    %2608 = vmatprep.subr.mxu0 0.0
    %2609 = vmatpush1.msra.mxu0 0.0
    %v2610 = vand.u32 %v2418, 4294901760
    %v2611 = vsub.f32 %v2418, %v2610
    %2612 = vmatprep.subr.mxu0 %v2611
    %v2613 = vand.u32 %v2416, 4294901760
    %v2614 = vsub.f32 %v2416, %v2613
    %2615 = vmatpush1.msra.mxu0 %v2614
    %2616 = vmatprep.subr.mxu0 0.0
    %2617 = vmatpush2.msra.mxu0 0.0
    %2618 = vmatprep.subr.mxu0 0.0
    %2619 = vmatpush2.msra.mxu0 0.0
    %2620 = vmatprep.subr.mxu0 0.0
    %2621 = vmatpush2.msra.mxu0 0.0
    %2622 = vmatprep.subr.mxu0 0.0
    %2623 = vmatpush2.msra.mxu0 0.0
    %2624 = vmatprep.subr.mxu0 0.0
    %2625 = vmatpush2.msra.mxu0 0.0
    %2626 = vmatprep.subr.mxu0 0.0
    %2627 = vmatpush2.msra.mxu0 0.0
    %2628 = vmatprep.subr.mxu0 0.0
    %2629 = vmatpush2.msra.mxu0 0.0
    %2630 = vmatprep.subr.mxu0 0.0
    %2631 = vmatpush2.msra.mxu0 0.0
    %2632 = vmatprep.subr.mxu0 0.0
    %2633 = vmatpush2.msra.mxu0 0.0
    %2634 = vmatprep.subr.mxu0 0.0
    %2635 = vmatpush2.msra.mxu0 0.0
    %2636 = vmatprep.subr.mxu0 0.0
    %2637 = vmatpush2.msra.mxu0 0.0
    %2638 = vmatprep.subr.mxu0 0.0
    %2639 = vmatpush2.msra.mxu0 0.0
    %2640 = vmatprep.subr.mxu0 0.0
    %2641 = vmatpush2.msra.mxu0 0.0
    %2642 = vmatprep.subr.mxu0 0.0
    %2643 = vmatpush2.msra.mxu0 0.0
    %2644 = vmatprep.subr.mxu0 0.0
    %2645 = vmatpush2.msra.mxu0 0.0
    %2646 = vmatprep.subr.mxu0 0.0
    %2647 = vmatpush2.msra.mxu0 0.0
    %2648 = vmatprep.mubr.f32.mxu0 0.0
    %v2649 = vand.u32 %v991, 4294901760
    %v2650 = vsub.f32 %v991, %v2649
    %2651 = vmatmul.mubr.f32.gmra.mxu0 %v2650
    %v2652 = vpop.f32.mrf.mxu0
    %v2653 = vadd.f32 %v2576, %v2652
    %v2654 = vpop.f32.mrf.mxu0
    %v2655 = vadd.f32 %v2578, %v2654
    %2656 = vdwg.mxu0
    %2657 = vmatprep.subr.mxu0 0.0
    %2658 = vmatpush1.msra.mxu0 0.0
    %2659 = vmatprep.subr.mxu0 0.0
    %2660 = vmatpush1.msra.mxu0 0.0
    %2661 = vmatprep.subr.mxu0 0.0
    %2662 = vmatpush1.msra.mxu0 0.0
    %2663 = vmatprep.subr.mxu0 0.0
    %2664 = vmatpush1.msra.mxu0 0.0
    %2665 = vmatprep.subr.mxu0 0.0
    %2666 = vmatpush1.msra.mxu0 0.0
    %2667 = vmatprep.subr.mxu0 0.0
    %2668 = vmatpush1.msra.mxu0 0.0
    %2669 = vmatprep.subr.mxu0 0.0
    %2670 = vmatpush1.msra.mxu0 0.0
    %2671 = vmatprep.subr.mxu0 0.0
    %2672 = vmatpush1.msra.mxu0 0.0
    %2673 = vmatprep.subr.mxu0 0.0
    %2674 = vmatpush1.msra.mxu0 0.0
    %2675 = vmatprep.subr.mxu0 0.0
    %2676 = vmatpush1.msra.mxu0 0.0
    %2677 = vmatprep.subr.mxu0 0.0
    %2678 = vmatpush1.msra.mxu0 0.0
    %2679 = vmatprep.subr.mxu0 0.0
    %2680 = vmatpush1.msra.mxu0 0.0
    %2681 = vmatprep.subr.mxu0 0.0
    %2682 = vmatpush1.msra.mxu0 0.0
    %2683 = vmatprep.subr.mxu0 0.0
    %2684 = vmatpush1.msra.mxu0 0.0
    %2685 = vmatprep.subr.mxu0 0.0
    %2686 = vmatpush1.msra.mxu0 0.0
    %v2687 = vand.u32 %v2418, 4294901760
    %2688 = vmatprep.subr.mxu0 %v2687
    %v2689 = vand.u32 %v2416, 4294901760
    %2690 = vmatpush1.msra.mxu0 %v2689
    %2691 = vmatprep.subr.mxu0 0.0
    %2692 = vmatpush2.msra.mxu0 0.0
    %2693 = vmatprep.subr.mxu0 0.0
    %2694 = vmatpush2.msra.mxu0 0.0
    %2695 = vmatprep.subr.mxu0 0.0
    %2696 = vmatpush2.msra.mxu0 0.0
    %2697 = vmatprep.subr.mxu0 0.0
    %2698 = vmatpush2.msra.mxu0 0.0
    %2699 = vmatprep.subr.mxu0 0.0
    %2700 = vmatpush2.msra.mxu0 0.0
    %2701 = vmatprep.subr.mxu0 0.0
    %2702 = vmatpush2.msra.mxu0 0.0
    %2703 = vmatprep.subr.mxu0 0.0
    %2704 = vmatpush2.msra.mxu0 0.0
    %2705 = vmatprep.subr.mxu0 0.0
    %2706 = vmatpush2.msra.mxu0 0.0
    %2707 = vmatprep.subr.mxu0 0.0
    %2708 = vmatpush2.msra.mxu0 0.0
    %2709 = vmatprep.subr.mxu0 0.0
    %2710 = vmatpush2.msra.mxu0 0.0
    %2711 = vmatprep.subr.mxu0 0.0
    %2712 = vmatpush2.msra.mxu0 0.0
    %2713 = vmatprep.subr.mxu0 0.0
    %2714 = vmatpush2.msra.mxu0 0.0
    %2715 = vmatprep.subr.mxu0 0.0
    %2716 = vmatpush2.msra.mxu0 0.0
    %2717 = vmatprep.subr.mxu0 0.0
    %2718 = vmatpush2.msra.mxu0 0.0
    %2719 = vmatprep.subr.mxu0 0.0
    %2720 = vmatpush2.msra.mxu0 0.0
    %2721 = vmatprep.subr.mxu0 0.0
    %2722 = vmatpush2.msra.mxu0 0.0
    %2723 = vmatprep.mubr.f32.mxu0 0.0
    %v2724 = vand.u32 %v991, 4294901760
    %v2725 = vsub.f32 %v991, %v2724
    %v2726 = vand.u32 %v2725, 4294901760
    %2727 = vmatmul.mubr.f32.gmra.mxu0 %v2726
    %v2728 = vpop.f32.mrf.mxu0
    %v2729 = vadd.f32 %v2653, %v2728
    %v2730 = vpop.f32.mrf.mxu0
    %v2731 = vadd.f32 %v2655, %v2730
    %2732 = vdwg.mxu0
    %2733 = vmatprep.subr.mxu0 0.0
    %2734 = vmatpush1.msra.mxu0 0.0
    %2735 = vmatprep.subr.mxu0 0.0
    %2736 = vmatpush1.msra.mxu0 0.0
    %2737 = vmatprep.subr.mxu0 0.0
    %2738 = vmatpush1.msra.mxu0 0.0
    %2739 = vmatprep.subr.mxu0 0.0
    %2740 = vmatpush1.msra.mxu0 0.0
    %2741 = vmatprep.subr.mxu0 0.0
    %2742 = vmatpush1.msra.mxu0 0.0
    %2743 = vmatprep.subr.mxu0 0.0
    %2744 = vmatpush1.msra.mxu0 0.0
    %2745 = vmatprep.subr.mxu0 0.0
    %2746 = vmatpush1.msra.mxu0 0.0
    %2747 = vmatprep.subr.mxu0 0.0
    %2748 = vmatpush1.msra.mxu0 0.0
    %2749 = vmatprep.subr.mxu0 0.0
    %2750 = vmatpush1.msra.mxu0 0.0
    %2751 = vmatprep.subr.mxu0 0.0
    %2752 = vmatpush1.msra.mxu0 0.0
    %2753 = vmatprep.subr.mxu0 0.0
    %2754 = vmatpush1.msra.mxu0 0.0
    %2755 = vmatprep.subr.mxu0 0.0
    %2756 = vmatpush1.msra.mxu0 0.0
    %2757 = vmatprep.subr.mxu0 0.0
    %2758 = vmatpush1.msra.mxu0 0.0
    %2759 = vmatprep.subr.mxu0 0.0
    %2760 = vmatpush1.msra.mxu0 0.0
    %2761 = vmatprep.subr.mxu0 0.0
    %2762 = vmatpush1.msra.mxu0 0.0
    %v2763 = vand.u32 %v2418, 4294901760
    %v2764 = vsub.f32 %v2418, %v2763
    %v2765 = vand.u32 %v2764, 4294901760
    %2766 = vmatprep.subr.mxu0 %v2765
    %v2767 = vand.u32 %v2416, 4294901760
    %v2768 = vsub.f32 %v2416, %v2767
    %v2769 = vand.u32 %v2768, 4294901760
    %2770 = vmatpush1.msra.mxu0 %v2769
    %2771 = vmatprep.subr.mxu0 0.0
    %2772 = vmatpush2.msra.mxu0 0.0
    %2773 = vmatprep.subr.mxu0 0.0
    %2774 = vmatpush2.msra.mxu0 0.0
    %2775 = vmatprep.subr.mxu0 0.0
    %2776 = vmatpush2.msra.mxu0 0.0
    %2777 = vmatprep.subr.mxu0 0.0
    %2778 = vmatpush2.msra.mxu0 0.0
    %2779 = vmatprep.subr.mxu0 0.0
    %2780 = vmatpush2.msra.mxu0 0.0
    %2781 = vmatprep.subr.mxu0 0.0
    %2782 = vmatpush2.msra.mxu0 0.0
    %2783 = vmatprep.subr.mxu0 0.0
    %2784 = vmatpush2.msra.mxu0 0.0
    %2785 = vmatprep.subr.mxu0 0.0
    %2786 = vmatpush2.msra.mxu0 0.0
    %2787 = vmatprep.subr.mxu0 0.0
    %2788 = vmatpush2.msra.mxu0 0.0
    %2789 = vmatprep.subr.mxu0 0.0
    %2790 = vmatpush2.msra.mxu0 0.0
    %2791 = vmatprep.subr.mxu0 0.0
    %2792 = vmatpush2.msra.mxu0 0.0
    %2793 = vmatprep.subr.mxu0 0.0
    %2794 = vmatpush2.msra.mxu0 0.0
    %2795 = vmatprep.subr.mxu0 0.0
    %2796 = vmatpush2.msra.mxu0 0.0
    %2797 = vmatprep.subr.mxu0 0.0
    %2798 = vmatpush2.msra.mxu0 0.0
    %2799 = vmatprep.subr.mxu0 0.0
    %2800 = vmatpush2.msra.mxu0 0.0
    %2801 = vmatprep.subr.mxu0 0.0
    %2802 = vmatpush2.msra.mxu0 0.0
    %2803 = vmatprep.mubr.f32.mxu0 0.0
    %v2804 = vand.u32 %v991, 4294901760
    %2805 = vmatmul.mubr.f32.gmra.mxu0 %v2804
    %v2806 = vpop.f32.mrf.mxu0
    %v2807 = vadd.f32 %v2729, %v2806
    %v2808 = vpop.f32.mrf.mxu0
    %v2809 = vadd.f32 %v2731, %v2808
    %2810 = vdwg.mxu0
    %2811 = vmatprep.subr.mxu0 0.0
    %2812 = vmatpush1.msra.mxu0 0.0
    %2813 = vmatprep.subr.mxu0 0.0
    %2814 = vmatpush1.msra.mxu0 0.0
    %2815 = vmatprep.subr.mxu0 0.0
    %2816 = vmatpush1.msra.mxu0 0.0
    %2817 = vmatprep.subr.mxu0 0.0
    %2818 = vmatpush1.msra.mxu0 0.0
    %2819 = vmatprep.subr.mxu0 0.0
    %2820 = vmatpush1.msra.mxu0 0.0
    %2821 = vmatprep.subr.mxu0 0.0
    %2822 = vmatpush1.msra.mxu0 0.0
    %2823 = vmatprep.subr.mxu0 0.0
    %2824 = vmatpush1.msra.mxu0 0.0
    %2825 = vmatprep.subr.mxu0 0.0
    %2826 = vmatpush1.msra.mxu0 0.0
    %2827 = vmatprep.subr.mxu0 0.0
    %2828 = vmatpush1.msra.mxu0 0.0
    %2829 = vmatprep.subr.mxu0 0.0
    %2830 = vmatpush1.msra.mxu0 0.0
    %2831 = vmatprep.subr.mxu0 0.0
    %2832 = vmatpush1.msra.mxu0 0.0
    %2833 = vmatprep.subr.mxu0 0.0
    %2834 = vmatpush1.msra.mxu0 0.0
    %2835 = vmatprep.subr.mxu0 0.0
    %2836 = vmatpush1.msra.mxu0 0.0
    %2837 = vmatprep.subr.mxu0 0.0
    %2838 = vmatpush1.msra.mxu0 0.0
    %2839 = vmatprep.subr.mxu0 0.0
    %2840 = vmatpush1.msra.mxu0 0.0
    %v2841 = vand.u32 %v2418, 4294901760
    %2842 = vmatprep.subr.mxu0 %v2841
    %v2843 = vand.u32 %v2416, 4294901760
    %2844 = vmatpush1.msra.mxu0 %v2843
    %2845 = vmatprep.subr.mxu0 0.0
    %2846 = vmatpush2.msra.mxu0 0.0
    %2847 = vmatprep.subr.mxu0 0.0
    %2848 = vmatpush2.msra.mxu0 0.0
    %2849 = vmatprep.subr.mxu0 0.0
    %2850 = vmatpush2.msra.mxu0 0.0
    %2851 = vmatprep.subr.mxu0 0.0
    %2852 = vmatpush2.msra.mxu0 0.0
    %2853 = vmatprep.subr.mxu0 0.0
    %2854 = vmatpush2.msra.mxu0 0.0
    %2855 = vmatprep.subr.mxu0 0.0
    %2856 = vmatpush2.msra.mxu0 0.0
    %2857 = vmatprep.subr.mxu0 0.0
    %2858 = vmatpush2.msra.mxu0 0.0
    %2859 = vmatprep.subr.mxu0 0.0
    %2860 = vmatpush2.msra.mxu0 0.0
    %2861 = vmatprep.subr.mxu0 0.0
    %2862 = vmatpush2.msra.mxu0 0.0
    %2863 = vmatprep.subr.mxu0 0.0
    %2864 = vmatpush2.msra.mxu0 0.0
    %2865 = vmatprep.subr.mxu0 0.0
    %2866 = vmatpush2.msra.mxu0 0.0
    %2867 = vmatprep.subr.mxu0 0.0
    %2868 = vmatpush2.msra.mxu0 0.0
    %2869 = vmatprep.subr.mxu0 0.0
    %2870 = vmatpush2.msra.mxu0 0.0
    %2871 = vmatprep.subr.mxu0 0.0
    %2872 = vmatpush2.msra.mxu0 0.0
    %2873 = vmatprep.subr.mxu0 0.0
    %2874 = vmatpush2.msra.mxu0 0.0
    %2875 = vmatprep.subr.mxu0 0.0
    %2876 = vmatpush2.msra.mxu0 0.0
    %2877 = vmatprep.mubr.f32.mxu0 0.0
    %v2878 = vand.u32 %v991, 4294901760
    %2879 = vmatmul.mubr.f32.gmra.mxu0 %v2878
    %v2880 = vpop.f32.mrf.mxu0
    %v2881 = vadd.f32 %v2807, %v2880
    %v2882 = vpop.f32.mrf.mxu0
    %v2883 = vadd.f32 %v2809, %v2882
    %2884 = vdwg.mxu0
    %v2885 = vadd.f32 %v2407, %v2881
    %v2886 = vadd.f32 %v2409, %v2883
    %v2887 = vadd.f32 %v1462, %v2885
    %v2888 = vadd.f32 %v1463, %v2886
    %v2889 = vsel %vm988, %v2888, 0.0
    %v2890 = vadd.f32 %v2887, %v2889
    %2891 = vadd.xlane.f32.xlu0 %v2890
    %v2892 = vpop.xlane.xlu0 %2891
    %v2893 = vmul.f32 %v2892, 0.001984127
    %v2894 = vsub.f32 %v1462, %v2893
    %v2895 = vsub.f32 %v1463, %v2893
    %v2896 = vmul.f32 %v2894, %v2894
    %v2897 = vmul.f32 %v2895, %v2895
    %v2898 = vsel %vm988, %v2897, 0.0
    %v2899 = vadd.f32 %v2896, %v2898
    %2900 = vadd.xlane.f32.xlu0 %v2899
    %v2901 = vpop.xlane.xlu0 %2900
    %v2902 = vadd.f32 %v2901, 0.0
    %v2903 = vsub.f32 %v2885, %v2893
    %v2904 = vsub.f32 %v2886, %v2893
    %v2905 = vmul.f32 %v2903, %v2903
    %v2906 = vmul.f32 %v2904, %v2904
    %v2907 = vsel %vm988, %v2906, 0.0
    %v2908 = vadd.f32 %v2905, %v2907
    %2909 = vadd.xlane.f32.xlu0 %v2908
    %v2910 = vpop.xlane.xlu0 %2909
    %v2911 = vadd.f32 %v2902, %v2910
    %v2912 = vmul.f32 %v2911, 0.001984127
    %v2913 = vadd.f32 %v2912, 1e-05
    %v2914 = vrsqrt.pop %v2913
    %v2915 = vld [vmem:[%s3] sm:$0xff]
    %v2916 = vld [vmem:[%s4] sm:$0xff]
    %v2917 = vld [vmem:[%s5] sm:$0xff]
    %v2918 = vmul.f32 %v2894, %v2914
    %v2919 = vmul.f32 %v2895, %v2914
    %2921 = vset.pattern.permute.xlu0 0
    %2922 = vperm.xlu0 %2921, %v2915
    %v2923 = vpop.permute.xlu0 %2922
    %v2925 = vmul.f32 %v2918, %v2923
    %v2926 = vmul.f32 %v2919, %v2923
    %2928 = vset.pattern.permute.xlu0 0
    %2929 = vperm.xlu0 %2928, %v2916
    %v2930 = vpop.permute.xlu0 %2929
    %v2932 = vadd.f32 %v2925, %v2930
    %v2933 = vadd.f32 %v2926, %v2930
    %vm2934 = vcmp.gt.f32.partialorder %v2932, 0.0
    %vm2935 = vcmp.gt.f32.partialorder %v2933, 0.0
    %2937 = vset.pattern.permute.xlu0 0
    %2938 = vperm.xlu0 %2937, %v2917
    %v2939 = vpop.permute.xlu0 %2938
    %v2941 = vmul.f32 %v2939, %v2932
    %v2942 = vmul.f32 %v2939, %v2933
    %v2943 = vsel %vm2934, %v2932, %v2941
    %v2944 = vsel %vm2935, %v2933, %v2942
    %v2945 = vld [vmem:[%s2] sm:$0xff]
    %2946 = vrot.lane.b32.xlu0 %v24, 125
    %v2947 = vpop.permute.xlu0 %2946
    %2948 = vrot.lane.b32.xlu0 %v29, 125
    %v2949 = vpop.permute.xlu0 %2948
    %vm2950 = vcmask 1022976
    %v2951 = vsel %vm2950, %v2947, %v2949
    %v2953 = vsel %vm36, %v2945, 0
    %v2955 = vsel %vm40, %v2951, 0
    %v2957 = vsel %vm40, %v2949, 0
    %2959 = vmatprep.subr.mxu0 0.0
    %2960 = vmatpush1.msra.mxu0 0.0
    %2961 = vmatprep.subr.mxu0 0.0
    %2962 = vmatpush1.msra.mxu0 0.0
    %2963 = vmatprep.subr.mxu0 0.0
    %2964 = vmatpush1.msra.mxu0 0.0
    %2965 = vmatprep.subr.mxu0 0.0
    %2966 = vmatpush1.msra.mxu0 0.0
    %2967 = vmatprep.subr.mxu0 0.0
    %2968 = vmatpush1.msra.mxu0 0.0
    %2969 = vmatprep.subr.mxu0 0.0
    %2970 = vmatpush1.msra.mxu0 0.0
    %2971 = vmatprep.subr.mxu0 0.0
    %2972 = vmatpush1.msra.mxu0 0.0
    %2973 = vmatprep.subr.mxu0 0.0
    %2974 = vmatpush1.msra.mxu0 0.0
    %2975 = vmatprep.subr.mxu0 0.0
    %2976 = vmatpush1.msra.mxu0 0.0
    %2977 = vmatprep.subr.mxu0 0.0
    %2978 = vmatpush1.msra.mxu0 0.0
    %2979 = vmatprep.subr.mxu0 0.0
    %2980 = vmatpush1.msra.mxu0 0.0
    %2981 = vmatprep.subr.mxu0 0.0
    %2982 = vmatpush1.msra.mxu0 0.0
    %2983 = vmatprep.subr.mxu0 0.0
    %2984 = vmatpush1.msra.mxu0 0.0
    %2985 = vmatprep.subr.mxu0 0.0
    %2986 = vmatpush1.msra.mxu0 0.0
    %2987 = vmatprep.subr.mxu0 0.0
    %2988 = vmatpush1.msra.mxu0 0.0
    %v2989 = vand.u32 %v2957, 4294901760
    %2990 = vmatprep.subr.mxu0 %v2989
    %v2991 = vand.u32 %v2955, 4294901760
    %2992 = vmatpush1.msra.mxu0 %v2991
    %2993 = vmatprep.subr.mxu0 0.0
    %2994 = vmatpush2.msra.mxu0 0.0
    %2995 = vmatprep.subr.mxu0 0.0
    %2996 = vmatpush2.msra.mxu0 0.0
    %2997 = vmatprep.subr.mxu0 0.0
    %2998 = vmatpush2.msra.mxu0 0.0
    %2999 = vmatprep.subr.mxu0 0.0
    %3000 = vmatpush2.msra.mxu0 0.0
    %3001 = vmatprep.subr.mxu0 0.0
    %3002 = vmatpush2.msra.mxu0 0.0
    %3003 = vmatprep.subr.mxu0 0.0
    %3004 = vmatpush2.msra.mxu0 0.0
    %3005 = vmatprep.subr.mxu0 0.0
    %3006 = vmatpush2.msra.mxu0 0.0
    %3007 = vmatprep.subr.mxu0 0.0
    %3008 = vmatpush2.msra.mxu0 0.0
    %3009 = vmatprep.subr.mxu0 0.0
    %3010 = vmatpush2.msra.mxu0 0.0
    %3011 = vmatprep.subr.mxu0 0.0
    %3012 = vmatpush2.msra.mxu0 0.0
    %3013 = vmatprep.subr.mxu0 0.0
    %3014 = vmatpush2.msra.mxu0 0.0
    %3015 = vmatprep.subr.mxu0 0.0
    %3016 = vmatpush2.msra.mxu0 0.0
    %3017 = vmatprep.subr.mxu0 0.0
    %3018 = vmatpush2.msra.mxu0 0.0
    %3019 = vmatprep.subr.mxu0 0.0
    %3020 = vmatpush2.msra.mxu0 0.0
    %3021 = vmatprep.subr.mxu0 0.0
    %3022 = vmatpush2.msra.mxu0 0.0
    %3023 = vmatprep.subr.mxu0 0.0
    %3024 = vmatpush2.msra.mxu0 0.0
    %3025 = vmatprep.mubr.f32.mxu0 0.0
    %v3026 = vand.u32 %v2953, 4294901760
    %v3027 = vsub.f32 %v2953, %v3026
    %v3028 = vand.u32 %v3027, 4294901760
    %v3029 = vsub.f32 %v3027, %v3028
    %v3030 = vand.u32 %v3029, 4294901760
    %3031 = vmatmul.mubr.f32.gmra.mxu0 %v3030
    %v3032 = vpop.f32.mrf.mxu0
    %v3033 = vadd.f32 0.0, %v3032
    %v3034 = vpop.f32.mrf.mxu0
    %v3035 = vadd.f32 0.0, %v3034
    %3036 = vdwg.mxu0
    %3037 = vmatprep.subr.mxu0 0.0
    %3038 = vmatpush1.msra.mxu0 0.0
    %3039 = vmatprep.subr.mxu0 0.0
    %3040 = vmatpush1.msra.mxu0 0.0
    %3041 = vmatprep.subr.mxu0 0.0
    %3042 = vmatpush1.msra.mxu0 0.0
    %3043 = vmatprep.subr.mxu0 0.0
    %3044 = vmatpush1.msra.mxu0 0.0
    %3045 = vmatprep.subr.mxu0 0.0
    %3046 = vmatpush1.msra.mxu0 0.0
    %3047 = vmatprep.subr.mxu0 0.0
    %3048 = vmatpush1.msra.mxu0 0.0
    %3049 = vmatprep.subr.mxu0 0.0
    %3050 = vmatpush1.msra.mxu0 0.0
    %3051 = vmatprep.subr.mxu0 0.0
    %3052 = vmatpush1.msra.mxu0 0.0
    %3053 = vmatprep.subr.mxu0 0.0
    %3054 = vmatpush1.msra.mxu0 0.0
    %3055 = vmatprep.subr.mxu0 0.0
    %3056 = vmatpush1.msra.mxu0 0.0
    %3057 = vmatprep.subr.mxu0 0.0
    %3058 = vmatpush1.msra.mxu0 0.0
    %3059 = vmatprep.subr.mxu0 0.0
    %3060 = vmatpush1.msra.mxu0 0.0
    %3061 = vmatprep.subr.mxu0 0.0
    %3062 = vmatpush1.msra.mxu0 0.0
    %3063 = vmatprep.subr.mxu0 0.0
    %3064 = vmatpush1.msra.mxu0 0.0
    %3065 = vmatprep.subr.mxu0 0.0
    %3066 = vmatpush1.msra.mxu0 0.0
    %v3067 = vand.u32 %v2957, 4294901760
    %v3068 = vsub.f32 %v2957, %v3067
    %v3069 = vand.u32 %v3068, 4294901760
    %v3070 = vsub.f32 %v3068, %v3069
    %v3071 = vand.u32 %v3070, 4294901760
    %3072 = vmatprep.subr.mxu0 %v3071
    %v3073 = vand.u32 %v2955, 4294901760
    %v3074 = vsub.f32 %v2955, %v3073
    %v3075 = vand.u32 %v3074, 4294901760
    %v3076 = vsub.f32 %v3074, %v3075
    %v3077 = vand.u32 %v3076, 4294901760
    %3078 = vmatpush1.msra.mxu0 %v3077
    %3079 = vmatprep.subr.mxu0 0.0
    %3080 = vmatpush2.msra.mxu0 0.0
    %3081 = vmatprep.subr.mxu0 0.0
    %3082 = vmatpush2.msra.mxu0 0.0
    %3083 = vmatprep.subr.mxu0 0.0
    %3084 = vmatpush2.msra.mxu0 0.0
    %3085 = vmatprep.subr.mxu0 0.0
    %3086 = vmatpush2.msra.mxu0 0.0
    %3087 = vmatprep.subr.mxu0 0.0
    %3088 = vmatpush2.msra.mxu0 0.0
    %3089 = vmatprep.subr.mxu0 0.0
    %3090 = vmatpush2.msra.mxu0 0.0
    %3091 = vmatprep.subr.mxu0 0.0
    %3092 = vmatpush2.msra.mxu0 0.0
    %3093 = vmatprep.subr.mxu0 0.0
    %3094 = vmatpush2.msra.mxu0 0.0
    %3095 = vmatprep.subr.mxu0 0.0
    %3096 = vmatpush2.msra.mxu0 0.0
    %3097 = vmatprep.subr.mxu0 0.0
    %3098 = vmatpush2.msra.mxu0 0.0
    %3099 = vmatprep.subr.mxu0 0.0
    %3100 = vmatpush2.msra.mxu0 0.0
    %3101 = vmatprep.subr.mxu0 0.0
    %3102 = vmatpush2.msra.mxu0 0.0
    %3103 = vmatprep.subr.mxu0 0.0
    %3104 = vmatpush2.msra.mxu0 0.0
    %3105 = vmatprep.subr.mxu0 0.0
    %3106 = vmatpush2.msra.mxu0 0.0
    %3107 = vmatprep.subr.mxu0 0.0
    %3108 = vmatpush2.msra.mxu0 0.0
    %3109 = vmatprep.subr.mxu0 0.0
    %3110 = vmatpush2.msra.mxu0 0.0
    %3111 = vmatprep.mubr.f32.mxu0 0.0
    %v3112 = vand.u32 %v2953, 4294901760
    %3113 = vmatmul.mubr.f32.gmra.mxu0 %v3112
    %v3114 = vpop.f32.mrf.mxu0
    %v3115 = vadd.f32 %v3033, %v3114
    %v3116 = vpop.f32.mrf.mxu0
    %v3117 = vadd.f32 %v3035, %v3116
    %3118 = vdwg.mxu0
    %3119 = vmatprep.subr.mxu0 0.0
    %3120 = vmatpush1.msra.mxu0 0.0
    %3121 = vmatprep.subr.mxu0 0.0
    %3122 = vmatpush1.msra.mxu0 0.0
    %3123 = vmatprep.subr.mxu0 0.0
    %3124 = vmatpush1.msra.mxu0 0.0
    %3125 = vmatprep.subr.mxu0 0.0
    %3126 = vmatpush1.msra.mxu0 0.0
    %3127 = vmatprep.subr.mxu0 0.0
    %3128 = vmatpush1.msra.mxu0 0.0
    %3129 = vmatprep.subr.mxu0 0.0
    %3130 = vmatpush1.msra.mxu0 0.0
    %3131 = vmatprep.subr.mxu0 0.0
    %3132 = vmatpush1.msra.mxu0 0.0
    %3133 = vmatprep.subr.mxu0 0.0
    %3134 = vmatpush1.msra.mxu0 0.0
    %3135 = vmatprep.subr.mxu0 0.0
    %3136 = vmatpush1.msra.mxu0 0.0
    %3137 = vmatprep.subr.mxu0 0.0
    %3138 = vmatpush1.msra.mxu0 0.0
    %3139 = vmatprep.subr.mxu0 0.0
    %3140 = vmatpush1.msra.mxu0 0.0
    %3141 = vmatprep.subr.mxu0 0.0
    %3142 = vmatpush1.msra.mxu0 0.0
    %3143 = vmatprep.subr.mxu0 0.0
    %3144 = vmatpush1.msra.mxu0 0.0
    %3145 = vmatprep.subr.mxu0 0.0
    %3146 = vmatpush1.msra.mxu0 0.0
    %3147 = vmatprep.subr.mxu0 0.0
    %3148 = vmatpush1.msra.mxu0 0.0
    %v3149 = vand.u32 %v2957, 4294901760
    %v3150 = vsub.f32 %v2957, %v3149
    %3151 = vmatprep.subr.mxu0 %v3150
    %v3152 = vand.u32 %v2955, 4294901760
    %v3153 = vsub.f32 %v2955, %v3152
    %3154 = vmatpush1.msra.mxu0 %v3153
    %3155 = vmatprep.subr.mxu0 0.0
    %3156 = vmatpush2.msra.mxu0 0.0
    %3157 = vmatprep.subr.mxu0 0.0
    %3158 = vmatpush2.msra.mxu0 0.0
    %3159 = vmatprep.subr.mxu0 0.0
    %3160 = vmatpush2.msra.mxu0 0.0
    %3161 = vmatprep.subr.mxu0 0.0
    %3162 = vmatpush2.msra.mxu0 0.0
    %3163 = vmatprep.subr.mxu0 0.0
    %3164 = vmatpush2.msra.mxu0 0.0
    %3165 = vmatprep.subr.mxu0 0.0
    %3166 = vmatpush2.msra.mxu0 0.0
    %3167 = vmatprep.subr.mxu0 0.0
    %3168 = vmatpush2.msra.mxu0 0.0
    %3169 = vmatprep.subr.mxu0 0.0
    %3170 = vmatpush2.msra.mxu0 0.0
    %3171 = vmatprep.subr.mxu0 0.0
    %3172 = vmatpush2.msra.mxu0 0.0
    %3173 = vmatprep.subr.mxu0 0.0
    %3174 = vmatpush2.msra.mxu0 0.0
    %3175 = vmatprep.subr.mxu0 0.0
    %3176 = vmatpush2.msra.mxu0 0.0
    %3177 = vmatprep.subr.mxu0 0.0
    %3178 = vmatpush2.msra.mxu0 0.0
    %3179 = vmatprep.subr.mxu0 0.0
    %3180 = vmatpush2.msra.mxu0 0.0
    %3181 = vmatprep.subr.mxu0 0.0
    %3182 = vmatpush2.msra.mxu0 0.0
    %3183 = vmatprep.subr.mxu0 0.0
    %3184 = vmatpush2.msra.mxu0 0.0
    %3185 = vmatprep.subr.mxu0 0.0
    %3186 = vmatpush2.msra.mxu0 0.0
    %3187 = vmatprep.mubr.f32.mxu0 0.0
    %v3188 = vand.u32 %v2953, 4294901760
    %v3189 = vsub.f32 %v2953, %v3188
    %3190 = vmatmul.mubr.f32.gmra.mxu0 %v3189
    %v3191 = vpop.f32.mrf.mxu0
    %v3192 = vadd.f32 %v3115, %v3191
    %v3193 = vpop.f32.mrf.mxu0
    %v3194 = vadd.f32 %v3117, %v3193
    %3195 = vdwg.mxu0
    %3196 = vmatprep.subr.mxu0 0.0
    %3197 = vmatpush1.msra.mxu0 0.0
    %3198 = vmatprep.subr.mxu0 0.0
    %3199 = vmatpush1.msra.mxu0 0.0
    %3200 = vmatprep.subr.mxu0 0.0
    %3201 = vmatpush1.msra.mxu0 0.0
    %3202 = vmatprep.subr.mxu0 0.0
    %3203 = vmatpush1.msra.mxu0 0.0
    %3204 = vmatprep.subr.mxu0 0.0
    %3205 = vmatpush1.msra.mxu0 0.0
    %3206 = vmatprep.subr.mxu0 0.0
    %3207 = vmatpush1.msra.mxu0 0.0
    %3208 = vmatprep.subr.mxu0 0.0
    %3209 = vmatpush1.msra.mxu0 0.0
    %3210 = vmatprep.subr.mxu0 0.0
    %3211 = vmatpush1.msra.mxu0 0.0
    %3212 = vmatprep.subr.mxu0 0.0
    %3213 = vmatpush1.msra.mxu0 0.0
    %3214 = vmatprep.subr.mxu0 0.0
    %3215 = vmatpush1.msra.mxu0 0.0
    %3216 = vmatprep.subr.mxu0 0.0
    %3217 = vmatpush1.msra.mxu0 0.0
    %3218 = vmatprep.subr.mxu0 0.0
    %3219 = vmatpush1.msra.mxu0 0.0
    %3220 = vmatprep.subr.mxu0 0.0
    %3221 = vmatpush1.msra.mxu0 0.0
    %3222 = vmatprep.subr.mxu0 0.0
    %3223 = vmatpush1.msra.mxu0 0.0
    %3224 = vmatprep.subr.mxu0 0.0
    %3225 = vmatpush1.msra.mxu0 0.0
    %v3226 = vand.u32 %v2957, 4294901760
    %3227 = vmatprep.subr.mxu0 %v3226
    %v3228 = vand.u32 %v2955, 4294901760
    %3229 = vmatpush1.msra.mxu0 %v3228
    %3230 = vmatprep.subr.mxu0 0.0
    %3231 = vmatpush2.msra.mxu0 0.0
    %3232 = vmatprep.subr.mxu0 0.0
    %3233 = vmatpush2.msra.mxu0 0.0
    %3234 = vmatprep.subr.mxu0 0.0
    %3235 = vmatpush2.msra.mxu0 0.0
    %3236 = vmatprep.subr.mxu0 0.0
    %3237 = vmatpush2.msra.mxu0 0.0
    %3238 = vmatprep.subr.mxu0 0.0
    %3239 = vmatpush2.msra.mxu0 0.0
    %3240 = vmatprep.subr.mxu0 0.0
    %3241 = vmatpush2.msra.mxu0 0.0
    %3242 = vmatprep.subr.mxu0 0.0
    %3243 = vmatpush2.msra.mxu0 0.0
    %3244 = vmatprep.subr.mxu0 0.0
    %3245 = vmatpush2.msra.mxu0 0.0
    %3246 = vmatprep.subr.mxu0 0.0
    %3247 = vmatpush2.msra.mxu0 0.0
    %3248 = vmatprep.subr.mxu0 0.0
    %3249 = vmatpush2.msra.mxu0 0.0
    %3250 = vmatprep.subr.mxu0 0.0
    %3251 = vmatpush2.msra.mxu0 0.0
    %3252 = vmatprep.subr.mxu0 0.0
    %3253 = vmatpush2.msra.mxu0 0.0
    %3254 = vmatprep.subr.mxu0 0.0
    %3255 = vmatpush2.msra.mxu0 0.0
    %3256 = vmatprep.subr.mxu0 0.0
    %3257 = vmatpush2.msra.mxu0 0.0
    %3258 = vmatprep.subr.mxu0 0.0
    %3259 = vmatpush2.msra.mxu0 0.0
    %3260 = vmatprep.subr.mxu0 0.0
    %3261 = vmatpush2.msra.mxu0 0.0
    %3262 = vmatprep.mubr.f32.mxu0 0.0
    %v3263 = vand.u32 %v2953, 4294901760
    %v3264 = vsub.f32 %v2953, %v3263
    %v3265 = vand.u32 %v3264, 4294901760
    %3266 = vmatmul.mubr.f32.gmra.mxu0 %v3265
    %v3267 = vpop.f32.mrf.mxu0
    %v3268 = vadd.f32 %v3192, %v3267
    %v3269 = vpop.f32.mrf.mxu0
    %v3270 = vadd.f32 %v3194, %v3269
    %3271 = vdwg.mxu0
    %3272 = vmatprep.subr.mxu0 0.0
    %3273 = vmatpush1.msra.mxu0 0.0
    %3274 = vmatprep.subr.mxu0 0.0
    %3275 = vmatpush1.msra.mxu0 0.0
    %3276 = vmatprep.subr.mxu0 0.0
    %3277 = vmatpush1.msra.mxu0 0.0
    %3278 = vmatprep.subr.mxu0 0.0
    %3279 = vmatpush1.msra.mxu0 0.0
    %3280 = vmatprep.subr.mxu0 0.0
    %3281 = vmatpush1.msra.mxu0 0.0
    %3282 = vmatprep.subr.mxu0 0.0
    %3283 = vmatpush1.msra.mxu0 0.0
    %3284 = vmatprep.subr.mxu0 0.0
    %3285 = vmatpush1.msra.mxu0 0.0
    %3286 = vmatprep.subr.mxu0 0.0
    %3287 = vmatpush1.msra.mxu0 0.0
    %3288 = vmatprep.subr.mxu0 0.0
    %3289 = vmatpush1.msra.mxu0 0.0
    %3290 = vmatprep.subr.mxu0 0.0
    %3291 = vmatpush1.msra.mxu0 0.0
    %3292 = vmatprep.subr.mxu0 0.0
    %3293 = vmatpush1.msra.mxu0 0.0
    %3294 = vmatprep.subr.mxu0 0.0
    %3295 = vmatpush1.msra.mxu0 0.0
    %3296 = vmatprep.subr.mxu0 0.0
    %3297 = vmatpush1.msra.mxu0 0.0
    %3298 = vmatprep.subr.mxu0 0.0
    %3299 = vmatpush1.msra.mxu0 0.0
    %3300 = vmatprep.subr.mxu0 0.0
    %3301 = vmatpush1.msra.mxu0 0.0
    %v3302 = vand.u32 %v2957, 4294901760
    %v3303 = vsub.f32 %v2957, %v3302
    %v3304 = vand.u32 %v3303, 4294901760
    %3305 = vmatprep.subr.mxu0 %v3304
    %v3306 = vand.u32 %v2955, 4294901760
    %v3307 = vsub.f32 %v2955, %v3306
    %v3308 = vand.u32 %v3307, 4294901760
    %3309 = vmatpush1.msra.mxu0 %v3308
    %3310 = vmatprep.subr.mxu0 0.0
    %3311 = vmatpush2.msra.mxu0 0.0
    %3312 = vmatprep.subr.mxu0 0.0
    %3313 = vmatpush2.msra.mxu0 0.0
    %3314 = vmatprep.subr.mxu0 0.0
    %3315 = vmatpush2.msra.mxu0 0.0
    %3316 = vmatprep.subr.mxu0 0.0
    %3317 = vmatpush2.msra.mxu0 0.0
    %3318 = vmatprep.subr.mxu0 0.0
    %3319 = vmatpush2.msra.mxu0 0.0
    %3320 = vmatprep.subr.mxu0 0.0
    %3321 = vmatpush2.msra.mxu0 0.0
    %3322 = vmatprep.subr.mxu0 0.0
    %3323 = vmatpush2.msra.mxu0 0.0
    %3324 = vmatprep.subr.mxu0 0.0
    %3325 = vmatpush2.msra.mxu0 0.0
    %3326 = vmatprep.subr.mxu0 0.0
    %3327 = vmatpush2.msra.mxu0 0.0
    %3328 = vmatprep.subr.mxu0 0.0
    %3329 = vmatpush2.msra.mxu0 0.0
    %3330 = vmatprep.subr.mxu0 0.0
    %3331 = vmatpush2.msra.mxu0 0.0
    %3332 = vmatprep.subr.mxu0 0.0
    %3333 = vmatpush2.msra.mxu0 0.0
    %3334 = vmatprep.subr.mxu0 0.0
    %3335 = vmatpush2.msra.mxu0 0.0
    %3336 = vmatprep.subr.mxu0 0.0
    %3337 = vmatpush2.msra.mxu0 0.0
    %3338 = vmatprep.subr.mxu0 0.0
    %3339 = vmatpush2.msra.mxu0 0.0
    %3340 = vmatprep.subr.mxu0 0.0
    %3341 = vmatpush2.msra.mxu0 0.0
    %3342 = vmatprep.mubr.f32.mxu0 0.0
    %v3343 = vand.u32 %v2953, 4294901760
    %3344 = vmatmul.mubr.f32.gmra.mxu0 %v3343
    %v3345 = vpop.f32.mrf.mxu0
    %v3346 = vadd.f32 %v3268, %v3345
    %v3347 = vpop.f32.mrf.mxu0
    %v3348 = vadd.f32 %v3270, %v3347
    %3349 = vdwg.mxu0
    %3350 = vmatprep.subr.mxu0 0.0
    %3351 = vmatpush1.msra.mxu0 0.0
    %3352 = vmatprep.subr.mxu0 0.0
    %3353 = vmatpush1.msra.mxu0 0.0
    %3354 = vmatprep.subr.mxu0 0.0
    %3355 = vmatpush1.msra.mxu0 0.0
    %3356 = vmatprep.subr.mxu0 0.0
    %3357 = vmatpush1.msra.mxu0 0.0
    %3358 = vmatprep.subr.mxu0 0.0
    %3359 = vmatpush1.msra.mxu0 0.0
    %3360 = vmatprep.subr.mxu0 0.0
    %3361 = vmatpush1.msra.mxu0 0.0
    %3362 = vmatprep.subr.mxu0 0.0
    %3363 = vmatpush1.msra.mxu0 0.0
    %3364 = vmatprep.subr.mxu0 0.0
    %3365 = vmatpush1.msra.mxu0 0.0
    %3366 = vmatprep.subr.mxu0 0.0
    %3367 = vmatpush1.msra.mxu0 0.0
    %3368 = vmatprep.subr.mxu0 0.0
    %3369 = vmatpush1.msra.mxu0 0.0
    %3370 = vmatprep.subr.mxu0 0.0
    %3371 = vmatpush1.msra.mxu0 0.0
    %3372 = vmatprep.subr.mxu0 0.0
    %3373 = vmatpush1.msra.mxu0 0.0
    %3374 = vmatprep.subr.mxu0 0.0
    %3375 = vmatpush1.msra.mxu0 0.0
    %3376 = vmatprep.subr.mxu0 0.0
    %3377 = vmatpush1.msra.mxu0 0.0
    %3378 = vmatprep.subr.mxu0 0.0
    %3379 = vmatpush1.msra.mxu0 0.0
    %v3380 = vand.u32 %v2957, 4294901760
    %3381 = vmatprep.subr.mxu0 %v3380
    %v3382 = vand.u32 %v2955, 4294901760
    %3383 = vmatpush1.msra.mxu0 %v3382
    %3384 = vmatprep.subr.mxu0 0.0
    %3385 = vmatpush2.msra.mxu0 0.0
    %3386 = vmatprep.subr.mxu0 0.0
    %3387 = vmatpush2.msra.mxu0 0.0
    %3388 = vmatprep.subr.mxu0 0.0
    %3389 = vmatpush2.msra.mxu0 0.0
    %3390 = vmatprep.subr.mxu0 0.0
    %3391 = vmatpush2.msra.mxu0 0.0
    %3392 = vmatprep.subr.mxu0 0.0
    %3393 = vmatpush2.msra.mxu0 0.0
    %3394 = vmatprep.subr.mxu0 0.0
    %3395 = vmatpush2.msra.mxu0 0.0
    %3396 = vmatprep.subr.mxu0 0.0
    %3397 = vmatpush2.msra.mxu0 0.0
    %3398 = vmatprep.subr.mxu0 0.0
    %3399 = vmatpush2.msra.mxu0 0.0
    %3400 = vmatprep.subr.mxu0 0.0
    %3401 = vmatpush2.msra.mxu0 0.0
    %3402 = vmatprep.subr.mxu0 0.0
    %3403 = vmatpush2.msra.mxu0 0.0
    %3404 = vmatprep.subr.mxu0 0.0
    %3405 = vmatpush2.msra.mxu0 0.0
    %3406 = vmatprep.subr.mxu0 0.0
    %3407 = vmatpush2.msra.mxu0 0.0
    %3408 = vmatprep.subr.mxu0 0.0
    %3409 = vmatpush2.msra.mxu0 0.0
    %3410 = vmatprep.subr.mxu0 0.0
    %3411 = vmatpush2.msra.mxu0 0.0
    %3412 = vmatprep.subr.mxu0 0.0
    %3413 = vmatpush2.msra.mxu0 0.0
    %3414 = vmatprep.subr.mxu0 0.0
    %3415 = vmatpush2.msra.mxu0 0.0
    %3416 = vmatprep.mubr.f32.mxu0 0.0
    %v3417 = vand.u32 %v2953, 4294901760
    %3418 = vmatmul.mubr.f32.gmra.mxu0 %v3417
    %v3419 = vpop.f32.mrf.mxu0
    %v3420 = vadd.f32 %v3346, %v3419
    %v3421 = vpop.f32.mrf.mxu0
    %v3422 = vadd.f32 %v3348, %v3421
    %3423 = vdwg.mxu0
    %v3424 = vadd.f32 %v2943, %v3420
    %v3425 = vadd.f32 %v2944, %v3422
    %3426 = vst [vmem:[#allocation2] sm:$0xff] %v3424
    %3427 = vst.msk [vmem:[#allocation2 + $0x8] sm:$0xff] %vm988, %v3425
    %v3428 = vmul.f32 %v2903, %v2914
    %v3429 = vmul.f32 %v2904, %v2914
    %v3430 = vmul.f32 %v3428, %v2923
    %v3431 = vmul.f32 %v3429, %v2923
    %v3432 = vadd.f32 %v3430, %v2930
    %v3433 = vadd.f32 %v3431, %v2930
    %vm3434 = vcmp.gt.f32.partialorder %v3432, 0.0
    %vm3435 = vcmp.gt.f32.partialorder %v3433, 0.0
    %v3436 = vmul.f32 %v2939, %v3432
    %v3437 = vmul.f32 %v2939, %v3433
    %v3438 = vsel %vm3434, %v3432, %v3436
    %v3439 = vsel %vm3435, %v3433, %v3437
    %v3440 = vld [vmem:[%s1464] sm:$0xff]
    %v3441 = vld [vmem:[%s2] sm:$0xff]
    %v3443 = vcombine.high %v3440, %v3440
    %3444 = vrot.lane.b32.xlu0 %v3440, 125
    %v3445 = vpop.permute.xlu0 %3444
    %3446 = vrot.lane.b32.xlu0 %v3443, 125
    %v3447 = vpop.permute.xlu0 %3446
    %v3448 = vsel %vm2950, %v3445, %v3447
    %v3450 = vsel %vm36, %v3441, 0
    %v3452 = vsel %vm40, %v3448, 0
    %v3454 = vsel %vm40, %v3447, 0
    %3456 = vmatprep.subr.mxu0 0.0
    %3457 = vmatpush1.msra.mxu0 0.0
    %3458 = vmatprep.subr.mxu0 0.0
    %3459 = vmatpush1.msra.mxu0 0.0
    %3460 = vmatprep.subr.mxu0 0.0
    %3461 = vmatpush1.msra.mxu0 0.0
    %3462 = vmatprep.subr.mxu0 0.0
    %3463 = vmatpush1.msra.mxu0 0.0
    %3464 = vmatprep.subr.mxu0 0.0
    %3465 = vmatpush1.msra.mxu0 0.0
    %3466 = vmatprep.subr.mxu0 0.0
    %3467 = vmatpush1.msra.mxu0 0.0
    %3468 = vmatprep.subr.mxu0 0.0
    %3469 = vmatpush1.msra.mxu0 0.0
    %3470 = vmatprep.subr.mxu0 0.0
    %3471 = vmatpush1.msra.mxu0 0.0
    %3472 = vmatprep.subr.mxu0 0.0
    %3473 = vmatpush1.msra.mxu0 0.0
    %3474 = vmatprep.subr.mxu0 0.0
    %3475 = vmatpush1.msra.mxu0 0.0
    %3476 = vmatprep.subr.mxu0 0.0
    %3477 = vmatpush1.msra.mxu0 0.0
    %3478 = vmatprep.subr.mxu0 0.0
    %3479 = vmatpush1.msra.mxu0 0.0
    %3480 = vmatprep.subr.mxu0 0.0
    %3481 = vmatpush1.msra.mxu0 0.0
    %3482 = vmatprep.subr.mxu0 0.0
    %3483 = vmatpush1.msra.mxu0 0.0
    %3484 = vmatprep.subr.mxu0 0.0
    %3485 = vmatpush1.msra.mxu0 0.0
    %v3486 = vand.u32 %v3454, 4294901760
    %3487 = vmatprep.subr.mxu0 %v3486
    %v3488 = vand.u32 %v3452, 4294901760
    %3489 = vmatpush1.msra.mxu0 %v3488
    %3490 = vmatprep.subr.mxu0 0.0
    %3491 = vmatpush2.msra.mxu0 0.0
    %3492 = vmatprep.subr.mxu0 0.0
    %3493 = vmatpush2.msra.mxu0 0.0
    %3494 = vmatprep.subr.mxu0 0.0
    %3495 = vmatpush2.msra.mxu0 0.0
    %3496 = vmatprep.subr.mxu0 0.0
    %3497 = vmatpush2.msra.mxu0 0.0
    %3498 = vmatprep.subr.mxu0 0.0
    %3499 = vmatpush2.msra.mxu0 0.0
    %3500 = vmatprep.subr.mxu0 0.0
    %3501 = vmatpush2.msra.mxu0 0.0
    %3502 = vmatprep.subr.mxu0 0.0
    %3503 = vmatpush2.msra.mxu0 0.0
    %3504 = vmatprep.subr.mxu0 0.0
    %3505 = vmatpush2.msra.mxu0 0.0
    %3506 = vmatprep.subr.mxu0 0.0
    %3507 = vmatpush2.msra.mxu0 0.0
    %3508 = vmatprep.subr.mxu0 0.0
    %3509 = vmatpush2.msra.mxu0 0.0
    %3510 = vmatprep.subr.mxu0 0.0
    %3511 = vmatpush2.msra.mxu0 0.0
    %3512 = vmatprep.subr.mxu0 0.0
    %3513 = vmatpush2.msra.mxu0 0.0
    %3514 = vmatprep.subr.mxu0 0.0
    %3515 = vmatpush2.msra.mxu0 0.0
    %3516 = vmatprep.subr.mxu0 0.0
    %3517 = vmatpush2.msra.mxu0 0.0
    %3518 = vmatprep.subr.mxu0 0.0
    %3519 = vmatpush2.msra.mxu0 0.0
    %3520 = vmatprep.subr.mxu0 0.0
    %3521 = vmatpush2.msra.mxu0 0.0
    %3522 = vmatprep.mubr.f32.mxu0 0.0
    %v3523 = vand.u32 %v3450, 4294901760
    %v3524 = vsub.f32 %v3450, %v3523
    %v3525 = vand.u32 %v3524, 4294901760
    %v3526 = vsub.f32 %v3524, %v3525
    %v3527 = vand.u32 %v3526, 4294901760
    %3528 = vmatmul.mubr.f32.gmra.mxu0 %v3527
    %v3529 = vpop.f32.mrf.mxu0
    %v3530 = vadd.f32 0.0, %v3529
    %v3531 = vpop.f32.mrf.mxu0
    %v3532 = vadd.f32 0.0, %v3531
    %3533 = vdwg.mxu0
    %3534 = vmatprep.subr.mxu0 0.0
    %3535 = vmatpush1.msra.mxu0 0.0
    %3536 = vmatprep.subr.mxu0 0.0
    %3537 = vmatpush1.msra.mxu0 0.0
    %3538 = vmatprep.subr.mxu0 0.0
    %3539 = vmatpush1.msra.mxu0 0.0
    %3540 = vmatprep.subr.mxu0 0.0
    %3541 = vmatpush1.msra.mxu0 0.0
    %3542 = vmatprep.subr.mxu0 0.0
    %3543 = vmatpush1.msra.mxu0 0.0
    %3544 = vmatprep.subr.mxu0 0.0
    %3545 = vmatpush1.msra.mxu0 0.0
    %3546 = vmatprep.subr.mxu0 0.0
    %3547 = vmatpush1.msra.mxu0 0.0
    %3548 = vmatprep.subr.mxu0 0.0
    %3549 = vmatpush1.msra.mxu0 0.0
    %3550 = vmatprep.subr.mxu0 0.0
    %3551 = vmatpush1.msra.mxu0 0.0
    %3552 = vmatprep.subr.mxu0 0.0
    %3553 = vmatpush1.msra.mxu0 0.0
    %3554 = vmatprep.subr.mxu0 0.0
    %3555 = vmatpush1.msra.mxu0 0.0
    %3556 = vmatprep.subr.mxu0 0.0
    %3557 = vmatpush1.msra.mxu0 0.0
    %3558 = vmatprep.subr.mxu0 0.0
    %3559 = vmatpush1.msra.mxu0 0.0
    %3560 = vmatprep.subr.mxu0 0.0
    %3561 = vmatpush1.msra.mxu0 0.0
    %3562 = vmatprep.subr.mxu0 0.0
    %3563 = vmatpush1.msra.mxu0 0.0
    %v3564 = vand.u32 %v3454, 4294901760
    %v3565 = vsub.f32 %v3454, %v3564
    %v3566 = vand.u32 %v3565, 4294901760
    %v3567 = vsub.f32 %v3565, %v3566
    %v3568 = vand.u32 %v3567, 4294901760
    %3569 = vmatprep.subr.mxu0 %v3568
    %v3570 = vand.u32 %v3452, 4294901760
    %v3571 = vsub.f32 %v3452, %v3570
    %v3572 = vand.u32 %v3571, 4294901760
    %v3573 = vsub.f32 %v3571, %v3572
    %v3574 = vand.u32 %v3573, 4294901760
    %3575 = vmatpush1.msra.mxu0 %v3574
    %3576 = vmatprep.subr.mxu0 0.0
    %3577 = vmatpush2.msra.mxu0 0.0
    %3578 = vmatprep.subr.mxu0 0.0
    %3579 = vmatpush2.msra.mxu0 0.0
    %3580 = vmatprep.subr.mxu0 0.0
    %3581 = vmatpush2.msra.mxu0 0.0
    %3582 = vmatprep.subr.mxu0 0.0
    %3583 = vmatpush2.msra.mxu0 0.0
    %3584 = vmatprep.subr.mxu0 0.0
    %3585 = vmatpush2.msra.mxu0 0.0
    %3586 = vmatprep.subr.mxu0 0.0
    %3587 = vmatpush2.msra.mxu0 0.0
    %3588 = vmatprep.subr.mxu0 0.0
    %3589 = vmatpush2.msra.mxu0 0.0
    %3590 = vmatprep.subr.mxu0 0.0
    %3591 = vmatpush2.msra.mxu0 0.0
    %3592 = vmatprep.subr.mxu0 0.0
    %3593 = vmatpush2.msra.mxu0 0.0
    %3594 = vmatprep.subr.mxu0 0.0
    %3595 = vmatpush2.msra.mxu0 0.0
    %3596 = vmatprep.subr.mxu0 0.0
    %3597 = vmatpush2.msra.mxu0 0.0
    %3598 = vmatprep.subr.mxu0 0.0
    %3599 = vmatpush2.msra.mxu0 0.0
    %3600 = vmatprep.subr.mxu0 0.0
    %3601 = vmatpush2.msra.mxu0 0.0
    %3602 = vmatprep.subr.mxu0 0.0
    %3603 = vmatpush2.msra.mxu0 0.0
    %3604 = vmatprep.subr.mxu0 0.0
    %3605 = vmatpush2.msra.mxu0 0.0
    %3606 = vmatprep.subr.mxu0 0.0
    %3607 = vmatpush2.msra.mxu0 0.0
    %3608 = vmatprep.mubr.f32.mxu0 0.0
    %v3609 = vand.u32 %v3450, 4294901760
    %3610 = vmatmul.mubr.f32.gmra.mxu0 %v3609
    %v3611 = vpop.f32.mrf.mxu0
    %v3612 = vadd.f32 %v3530, %v3611
    %v3613 = vpop.f32.mrf.mxu0
    %v3614 = vadd.f32 %v3532, %v3613
    %3615 = vdwg.mxu0
    %3616 = vmatprep.subr.mxu0 0.0
    %3617 = vmatpush1.msra.mxu0 0.0
    %3618 = vmatprep.subr.mxu0 0.0
    %3619 = vmatpush1.msra.mxu0 0.0
    %3620 = vmatprep.subr.mxu0 0.0
    %3621 = vmatpush1.msra.mxu0 0.0
    %3622 = vmatprep.subr.mxu0 0.0
    %3623 = vmatpush1.msra.mxu0 0.0
    %3624 = vmatprep.subr.mxu0 0.0
    %3625 = vmatpush1.msra.mxu0 0.0
    %3626 = vmatprep.subr.mxu0 0.0
    %3627 = vmatpush1.msra.mxu0 0.0
    %3628 = vmatprep.subr.mxu0 0.0
    %3629 = vmatpush1.msra.mxu0 0.0
    %3630 = vmatprep.subr.mxu0 0.0
    %3631 = vmatpush1.msra.mxu0 0.0
    %3632 = vmatprep.subr.mxu0 0.0
    %3633 = vmatpush1.msra.mxu0 0.0
    %3634 = vmatprep.subr.mxu0 0.0
    %3635 = vmatpush1.msra.mxu0 0.0
    %3636 = vmatprep.subr.mxu0 0.0
    %3637 = vmatpush1.msra.mxu0 0.0
    %3638 = vmatprep.subr.mxu0 0.0
    %3639 = vmatpush1.msra.mxu0 0.0
    %3640 = vmatprep.subr.mxu0 0.0
    %3641 = vmatpush1.msra.mxu0 0.0
    %3642 = vmatprep.subr.mxu0 0.0
    %3643 = vmatpush1.msra.mxu0 0.0
    %3644 = vmatprep.subr.mxu0 0.0
    %3645 = vmatpush1.msra.mxu0 0.0
    %v3646 = vand.u32 %v3454, 4294901760
    %v3647 = vsub.f32 %v3454, %v3646
    %3648 = vmatprep.subr.mxu0 %v3647
    %v3649 = vand.u32 %v3452, 4294901760
    %v3650 = vsub.f32 %v3452, %v3649
    %3651 = vmatpush1.msra.mxu0 %v3650
    %3652 = vmatprep.subr.mxu0 0.0
    %3653 = vmatpush2.msra.mxu0 0.0
    %3654 = vmatprep.subr.mxu0 0.0
    %3655 = vmatpush2.msra.mxu0 0.0
    %3656 = vmatprep.subr.mxu0 0.0
    %3657 = vmatpush2.msra.mxu0 0.0
    %3658 = vmatprep.subr.mxu0 0.0
    %3659 = vmatpush2.msra.mxu0 0.0
    %3660 = vmatprep.subr.mxu0 0.0
    %3661 = vmatpush2.msra.mxu0 0.0
    %3662 = vmatprep.subr.mxu0 0.0
    %3663 = vmatpush2.msra.mxu0 0.0
    %3664 = vmatprep.subr.mxu0 0.0
    %3665 = vmatpush2.msra.mxu0 0.0
    %3666 = vmatprep.subr.mxu0 0.0
    %3667 = vmatpush2.msra.mxu0 0.0
    %3668 = vmatprep.subr.mxu0 0.0
    %3669 = vmatpush2.msra.mxu0 0.0
    %3670 = vmatprep.subr.mxu0 0.0
    %3671 = vmatpush2.msra.mxu0 0.0
    %3672 = vmatprep.subr.mxu0 0.0
    %3673 = vmatpush2.msra.mxu0 0.0
    %3674 = vmatprep.subr.mxu0 0.0
    %3675 = vmatpush2.msra.mxu0 0.0
    %3676 = vmatprep.subr.mxu0 0.0
    %3677 = vmatpush2.msra.mxu0 0.0
    %3678 = vmatprep.subr.mxu0 0.0
    %3679 = vmatpush2.msra.mxu0 0.0
    %3680 = vmatprep.subr.mxu0 0.0
    %3681 = vmatpush2.msra.mxu0 0.0
    %3682 = vmatprep.subr.mxu0 0.0
    %3683 = vmatpush2.msra.mxu0 0.0
    %3684 = vmatprep.mubr.f32.mxu0 0.0
    %v3685 = vand.u32 %v3450, 4294901760
    %v3686 = vsub.f32 %v3450, %v3685
    %3687 = vmatmul.mubr.f32.gmra.mxu0 %v3686
    %v3688 = vpop.f32.mrf.mxu0
    %v3689 = vadd.f32 %v3612, %v3688
    %v3690 = vpop.f32.mrf.mxu0
    %v3691 = vadd.f32 %v3614, %v3690
    %3692 = vdwg.mxu0
    %3693 = vmatprep.subr.mxu0 0.0
    %3694 = vmatpush1.msra.mxu0 0.0
    %3695 = vmatprep.subr.mxu0 0.0
    %3696 = vmatpush1.msra.mxu0 0.0
    %3697 = vmatprep.subr.mxu0 0.0
    %3698 = vmatpush1.msra.mxu0 0.0
    %3699 = vmatprep.subr.mxu0 0.0
    %3700 = vmatpush1.msra.mxu0 0.0
    %3701 = vmatprep.subr.mxu0 0.0
    %3702 = vmatpush1.msra.mxu0 0.0
    %3703 = vmatprep.subr.mxu0 0.0
    %3704 = vmatpush1.msra.mxu0 0.0
    %3705 = vmatprep.subr.mxu0 0.0
    %3706 = vmatpush1.msra.mxu0 0.0
    %3707 = vmatprep.subr.mxu0 0.0
    %3708 = vmatpush1.msra.mxu0 0.0
    %3709 = vmatprep.subr.mxu0 0.0
    %3710 = vmatpush1.msra.mxu0 0.0
    %3711 = vmatprep.subr.mxu0 0.0
    %3712 = vmatpush1.msra.mxu0 0.0
    %3713 = vmatprep.subr.mxu0 0.0
    %3714 = vmatpush1.msra.mxu0 0.0
    %3715 = vmatprep.subr.mxu0 0.0
    %3716 = vmatpush1.msra.mxu0 0.0
    %3717 = vmatprep.subr.mxu0 0.0
    %3718 = vmatpush1.msra.mxu0 0.0
    %3719 = vmatprep.subr.mxu0 0.0
    %3720 = vmatpush1.msra.mxu0 0.0
    %3721 = vmatprep.subr.mxu0 0.0
    %3722 = vmatpush1.msra.mxu0 0.0
    %v3723 = vand.u32 %v3454, 4294901760
    %3724 = vmatprep.subr.mxu0 %v3723
    %v3725 = vand.u32 %v3452, 4294901760
    %3726 = vmatpush1.msra.mxu0 %v3725
    %3727 = vmatprep.subr.mxu0 0.0
    %3728 = vmatpush2.msra.mxu0 0.0
    %3729 = vmatprep.subr.mxu0 0.0
    %3730 = vmatpush2.msra.mxu0 0.0
    %3731 = vmatprep.subr.mxu0 0.0
    %3732 = vmatpush2.msra.mxu0 0.0
    %3733 = vmatprep.subr.mxu0 0.0
    %3734 = vmatpush2.msra.mxu0 0.0
    %3735 = vmatprep.subr.mxu0 0.0
    %3736 = vmatpush2.msra.mxu0 0.0
    %3737 = vmatprep.subr.mxu0 0.0
    %3738 = vmatpush2.msra.mxu0 0.0
    %3739 = vmatprep.subr.mxu0 0.0
    %3740 = vmatpush2.msra.mxu0 0.0
    %3741 = vmatprep.subr.mxu0 0.0
    %3742 = vmatpush2.msra.mxu0 0.0
    %3743 = vmatprep.subr.mxu0 0.0
    %3744 = vmatpush2.msra.mxu0 0.0
    %3745 = vmatprep.subr.mxu0 0.0
    %3746 = vmatpush2.msra.mxu0 0.0
    %3747 = vmatprep.subr.mxu0 0.0
    %3748 = vmatpush2.msra.mxu0 0.0
    %3749 = vmatprep.subr.mxu0 0.0
    %3750 = vmatpush2.msra.mxu0 0.0
    %3751 = vmatprep.subr.mxu0 0.0
    %3752 = vmatpush2.msra.mxu0 0.0
    %3753 = vmatprep.subr.mxu0 0.0
    %3754 = vmatpush2.msra.mxu0 0.0
    %3755 = vmatprep.subr.mxu0 0.0
    %3756 = vmatpush2.msra.mxu0 0.0
    %3757 = vmatprep.subr.mxu0 0.0
    %3758 = vmatpush2.msra.mxu0 0.0
    %3759 = vmatprep.mubr.f32.mxu0 0.0
    %v3760 = vand.u32 %v3450, 4294901760
    %v3761 = vsub.f32 %v3450, %v3760
    %v3762 = vand.u32 %v3761, 4294901760
    %3763 = vmatmul.mubr.f32.gmra.mxu0 %v3762
    %v3764 = vpop.f32.mrf.mxu0
    %v3765 = vadd.f32 %v3689, %v3764
    %v3766 = vpop.f32.mrf.mxu0
    %v3767 = vadd.f32 %v3691, %v3766
    %3768 = vdwg.mxu0
    %3769 = vmatprep.subr.mxu0 0.0
    %3770 = vmatpush1.msra.mxu0 0.0
    %3771 = vmatprep.subr.mxu0 0.0
    %3772 = vmatpush1.msra.mxu0 0.0
    %3773 = vmatprep.subr.mxu0 0.0
    %3774 = vmatpush1.msra.mxu0 0.0
    %3775 = vmatprep.subr.mxu0 0.0
    %3776 = vmatpush1.msra.mxu0 0.0
    %3777 = vmatprep.subr.mxu0 0.0
    %3778 = vmatpush1.msra.mxu0 0.0
    %3779 = vmatprep.subr.mxu0 0.0
    %3780 = vmatpush1.msra.mxu0 0.0
    %3781 = vmatprep.subr.mxu0 0.0
    %3782 = vmatpush1.msra.mxu0 0.0
    %3783 = vmatprep.subr.mxu0 0.0
    %3784 = vmatpush1.msra.mxu0 0.0
    %3785 = vmatprep.subr.mxu0 0.0
    %3786 = vmatpush1.msra.mxu0 0.0
    %3787 = vmatprep.subr.mxu0 0.0
    %3788 = vmatpush1.msra.mxu0 0.0
    %3789 = vmatprep.subr.mxu0 0.0
    %3790 = vmatpush1.msra.mxu0 0.0
    %3791 = vmatprep.subr.mxu0 0.0
    %3792 = vmatpush1.msra.mxu0 0.0
    %3793 = vmatprep.subr.mxu0 0.0
    %3794 = vmatpush1.msra.mxu0 0.0
    %3795 = vmatprep.subr.mxu0 0.0
    %3796 = vmatpush1.msra.mxu0 0.0
    %3797 = vmatprep.subr.mxu0 0.0
    %3798 = vmatpush1.msra.mxu0 0.0
    %v3799 = vand.u32 %v3454, 4294901760
    %v3800 = vsub.f32 %v3454, %v3799
    %v3801 = vand.u32 %v3800, 4294901760
    %3802 = vmatprep.subr.mxu0 %v3801
    %v3803 = vand.u32 %v3452, 4294901760
    %v3804 = vsub.f32 %v3452, %v3803
    %v3805 = vand.u32 %v3804, 4294901760
    %3806 = vmatpush1.msra.mxu0 %v3805
    %3807 = vmatprep.subr.mxu0 0.0
    %3808 = vmatpush2.msra.mxu0 0.0
    %3809 = vmatprep.subr.mxu0 0.0
    %3810 = vmatpush2.msra.mxu0 0.0
    %3811 = vmatprep.subr.mxu0 0.0
    %3812 = vmatpush2.msra.mxu0 0.0
    %3813 = vmatprep.subr.mxu0 0.0
    %3814 = vmatpush2.msra.mxu0 0.0
    %3815 = vmatprep.subr.mxu0 0.0
    %3816 = vmatpush2.msra.mxu0 0.0
    %3817 = vmatprep.subr.mxu0 0.0
    %3818 = vmatpush2.msra.mxu0 0.0
    %3819 = vmatprep.subr.mxu0 0.0
    %3820 = vmatpush2.msra.mxu0 0.0
    %3821 = vmatprep.subr.mxu0 0.0
    %3822 = vmatpush2.msra.mxu0 0.0
    %3823 = vmatprep.subr.mxu0 0.0
    %3824 = vmatpush2.msra.mxu0 0.0
    %3825 = vmatprep.subr.mxu0 0.0
    %3826 = vmatpush2.msra.mxu0 0.0
    %3827 = vmatprep.subr.mxu0 0.0
    %3828 = vmatpush2.msra.mxu0 0.0
    %3829 = vmatprep.subr.mxu0 0.0
    %3830 = vmatpush2.msra.mxu0 0.0
    %3831 = vmatprep.subr.mxu0 0.0
    %3832 = vmatpush2.msra.mxu0 0.0
    %3833 = vmatprep.subr.mxu0 0.0
    %3834 = vmatpush2.msra.mxu0 0.0
    %3835 = vmatprep.subr.mxu0 0.0
    %3836 = vmatpush2.msra.mxu0 0.0
    %3837 = vmatprep.subr.mxu0 0.0
    %3838 = vmatpush2.msra.mxu0 0.0
    %3839 = vmatprep.mubr.f32.mxu0 0.0
    %v3840 = vand.u32 %v3450, 4294901760
    %3841 = vmatmul.mubr.f32.gmra.mxu0 %v3840
    %v3842 = vpop.f32.mrf.mxu0
    %v3843 = vadd.f32 %v3765, %v3842
    %v3844 = vpop.f32.mrf.mxu0
    %v3845 = vadd.f32 %v3767, %v3844
    %3846 = vdwg.mxu0
    %3847 = vmatprep.subr.mxu0 0.0
    %3848 = vmatpush1.msra.mxu0 0.0
    %3849 = vmatprep.subr.mxu0 0.0
    %3850 = vmatpush1.msra.mxu0 0.0
    %3851 = vmatprep.subr.mxu0 0.0
    %3852 = vmatpush1.msra.mxu0 0.0
    %3853 = vmatprep.subr.mxu0 0.0
    %3854 = vmatpush1.msra.mxu0 0.0
    %3855 = vmatprep.subr.mxu0 0.0
    %3856 = vmatpush1.msra.mxu0 0.0
    %3857 = vmatprep.subr.mxu0 0.0
    %3858 = vmatpush1.msra.mxu0 0.0
    %3859 = vmatprep.subr.mxu0 0.0
    %3860 = vmatpush1.msra.mxu0 0.0
    %3861 = vmatprep.subr.mxu0 0.0
    %3862 = vmatpush1.msra.mxu0 0.0
    %3863 = vmatprep.subr.mxu0 0.0
    %3864 = vmatpush1.msra.mxu0 0.0
    %3865 = vmatprep.subr.mxu0 0.0
    %3866 = vmatpush1.msra.mxu0 0.0
    %3867 = vmatprep.subr.mxu0 0.0
    %3868 = vmatpush1.msra.mxu0 0.0
    %3869 = vmatprep.subr.mxu0 0.0
    %3870 = vmatpush1.msra.mxu0 0.0
    %3871 = vmatprep.subr.mxu0 0.0
    %3872 = vmatpush1.msra.mxu0 0.0
    %3873 = vmatprep.subr.mxu0 0.0
    %3874 = vmatpush1.msra.mxu0 0.0
    %3875 = vmatprep.subr.mxu0 0.0
    %3876 = vmatpush1.msra.mxu0 0.0
    %v3877 = vand.u32 %v3454, 4294901760
    %3878 = vmatprep.subr.mxu0 %v3877
    %v3879 = vand.u32 %v3452, 4294901760
    %3880 = vmatpush1.msra.mxu0 %v3879
    %3881 = vmatprep.subr.mxu0 0.0
    %3882 = vmatpush2.msra.mxu0 0.0
    %3883 = vmatprep.subr.mxu0 0.0
    %3884 = vmatpush2.msra.mxu0 0.0
    %3885 = vmatprep.subr.mxu0 0.0
    %3886 = vmatpush2.msra.mxu0 0.0
    %3887 = vmatprep.subr.mxu0 0.0
    %3888 = vmatpush2.msra.mxu0 0.0
    %3889 = vmatprep.subr.mxu0 0.0
    %3890 = vmatpush2.msra.mxu0 0.0
    %3891 = vmatprep.subr.mxu0 0.0
    %3892 = vmatpush2.msra.mxu0 0.0
    %3893 = vmatprep.subr.mxu0 0.0
    %3894 = vmatpush2.msra.mxu0 0.0
    %3895 = vmatprep.subr.mxu0 0.0
    %3896 = vmatpush2.msra.mxu0 0.0
    %3897 = vmatprep.subr.mxu0 0.0
    %3898 = vmatpush2.msra.mxu0 0.0
    %3899 = vmatprep.subr.mxu0 0.0
    %3900 = vmatpush2.msra.mxu0 0.0
    %3901 = vmatprep.subr.mxu0 0.0
    %3902 = vmatpush2.msra.mxu0 0.0
    %3903 = vmatprep.subr.mxu0 0.0
    %3904 = vmatpush2.msra.mxu0 0.0
    %3905 = vmatprep.subr.mxu0 0.0
    %3906 = vmatpush2.msra.mxu0 0.0
    %3907 = vmatprep.subr.mxu0 0.0
    %3908 = vmatpush2.msra.mxu0 0.0
    %3909 = vmatprep.subr.mxu0 0.0
    %3910 = vmatpush2.msra.mxu0 0.0
    %3911 = vmatprep.subr.mxu0 0.0
    %3912 = vmatpush2.msra.mxu0 0.0
    %3913 = vmatprep.mubr.f32.mxu0 0.0
    %v3914 = vand.u32 %v3450, 4294901760
    %3915 = vmatmul.mubr.f32.gmra.mxu0 %v3914
    %v3916 = vpop.f32.mrf.mxu0
    %v3917 = vadd.f32 %v3843, %v3916
    %v3918 = vpop.f32.mrf.mxu0
    %v3919 = vadd.f32 %v3845, %v3918
    %3920 = vdwg.mxu0
    %v3921 = vadd.f32 %v3438, %v3917
    %v3922 = vadd.f32 %v3439, %v3919
    %s3923 = scalar_lea.vmem [#allocation2], 16
    %3924 = vst [vmem:[%s3923] sm:$0xff] %v3921
    %3925 = vst.msk [vmem:[%s3923 + $0x8] sm:$0xff] %vm988, %v3922
    // Predicated region
    $region26: #{tcn_block_forward.1} parent=1 // pred_check
      _
    $region27: #{tcn_block_forward.1} parent=1 // pred_check_branch
      %3927 = sbr.rel (0) target = $region29
    $region28: #{tcn_block_forward.1} parent=1 // pred_region
      %s3929 = ssub.s32 512, 512
      %3930 = vsyncadd [#allocation3], %s3929
      %s3931 = sshll.u32 [#allocation2], 4
      %s3932 = int_to_ptr.vmem [resolvable:$true] %s3931
      %3937 = dma.vmem_to_hbm [thread:$0]  %s3932, 512, %s6, [#allocation3], 256, 256, 16
    $region29: #{tcn_block_forward.1} parent=1 // pred_fallthru
      _
    // Predicated region
    $region30: #{tcn_block_forward.1} parent=1 // pred_check
      _
    $region31: #{tcn_block_forward.1} parent=1 // pred_check_branch
      %3939 = sbr.rel (0) target = $region33
    $region32: #{tcn_block_forward.1} parent=1 // pred_region
      %3940 = dma.done [#allocation3], 512
    $region33: #{tcn_block_forward.1} parent=1 // pred_fallthru
      _
    %3941 = vsyncpa [#allocation3], 1

</llo_original>
